<compile_context>
chip_gen: v5e
topology: v5e:2x2
jax: 0.10.0
libtpu: 0.0.40
codegen_flags: <defaults>
</compile_context>

<pallas_src>
import math

import jax
import jax.numpy as jnp
from jax.experimental import pallas as pl
from jax.experimental.pallas import tpu as pltpu

# ----------------------------- small, consistent config -----------------------------
BATCH = 2
IMG = 16          # image_size (scaled down from 224/256)
PATCH = 8         # patch size (scaled down from 16)
NPATCH = (IMG // PATCH) ** 2          # 4 patches
SEQ = NPATCH + 2                      # +cls +dist tokens -> 6
CPP = 3 * PATCH * PATCH               # per-patch feature length (C*p*p) = 192
DIM = 32          # embed dim (scaled from 768)
NHEAD = 4         # scaled from 8; DIM % NHEAD == 0
HEAD_DIM = DIM // NHEAD
DEPTH = 2         # number of encoder blocks (scaled from 12)
MLP_HIDDEN = 64   # encoder MLP hidden
DEC_FF = 16       # decoder dim_feedforward (scaled from 192)
NUM_CLASSES = 10  # scaled from 100
HEAD_PAD = 128    # lane-dense padding for classifier-head outputs
B2 = 2 * BATCH    # both images batched through the encoder together

# Packed-slab geometry (all segments start on 128-lane boundaries).
ENC_W_LANES = 512     # wqkv@0, wo@128, fc1_w@256, fc2_w@384   (rows: 64)
ENC_VEC_ROWS = 8      # ln1_g, ln1_b, ln2_g, ln2_b, bo, fc2_b, bqkv, fc1_b
DEC_W_LANES = 1024    # s_wqkv@0, s_wo@128, c_wqkv@256, c_wo@384, fc1_w@512,
                      # fc2_w@640, ce1_w@768, cd1_w@896          (rows: 32)
DEC_VEC_ROWS = 16


# --------------------------- in-kernel helpers (value ops) ---------------------------
def _ln(x, g, b, eps):
    """LayerNorm over the last dim (f32); g/b are [1, D] values."""
    mean = jnp.mean(x, axis=-1, keepdims=True)
    cent = x - mean
    var = jnp.mean(cent * cent, axis=-1, keepdims=True)
    return cent * jax.lax.rsqrt(var + eps) * g + b


def _block_mask(num_blocks, block):
    """Additive block-diagonal mask generated in-kernel: 0 in-sequence, -1e9 across.

    Built from 2-D integer iota + float floor (avoids vector integer division).
    """
    n = num_blocks * block
    ri = jax.lax.broadcasted_iota(jnp.int32, (n, n), 0).astype(jnp.float32)
    ci = jax.lax.broadcasted_iota(jnp.int32, (n, n), 1).astype(jnp.float32)
    inv = 1.0 / float(block)
    same = jnp.floor((ri + 0.5) * inv) == jnp.floor((ci + 0.5) * inv)
    return jnp.where(same, 0.0, -1e9).astype(jnp.float32)


def _mha(q2, kv2, mask_bias, wqkv, bqkv, wo, bo, self_attn):
    """Multi-head attention over flattened [rows, DIM] activations.

    Sequences stay flattened on the row axis; `mask_bias` (block-diagonal additive)
    makes the big softmax exactly equal to per-sequence attention.  Q/K/V use one
    fused [DIM, 3*DIM] bf16 matmul; per-head probs@V results are concatenated along
    lanes and a single [rows, DIM] @ [DIM, DIM] output projection is issued.
    Matches torch.nn.MultiheadAttention (dropout=0) numerics up to bf16 operands.
    """
    bf16, f32 = jnp.bfloat16, jnp.float32
    dm = wo.shape[1]
    hd = dm // NHEAD
    scale = 1.0 / math.sqrt(hd)

    if self_attn:
        qkv = jnp.dot(q2.astype(bf16), wqkv, preferred_element_type=f32) + bqkv
        qp, kp, vp = qkv[:, 0:dm], qkv[:, dm:2 * dm], qkv[:, 2 * dm:3 * dm]
    else:
        qp = jnp.dot(q2.astype(bf16), wqkv[:, 0:dm], preferred_element_type=f32) + bqkv[:, 0:dm]
        kv = jnp.dot(kv2.astype(bf16), wqkv[:, dm:3 * dm],
                     preferred_element_type=f32) + bqkv[:, dm:3 * dm]
        kp, vp = kv[:, 0:dm], kv[:, dm:2 * dm]

    qb, kb, vb = qp.astype(bf16), kp.astype(bf16), vp.astype(bf16)
    heads = []
    for h in range(NHEAD):
        sl = slice(h * hd, (h + 1) * hd)
        s = jax.lax.dot_general(qb[:, sl], kb[:, sl], (((1,), (1,)), ((), ())),
                                preferred_element_type=f32) * scale + mask_bias
        s = s - jnp.max(s, axis=-1, keepdims=True)
        p = jnp.exp(s)
        p = p * pl.reciprocal(jnp.sum(p, axis=-1, keepdims=True), approx=True)
        heads.append(jnp.dot(p.astype(bf16), vb[:, sl], preferred_element_type=f32))
    o = jnp.concatenate(heads, axis=-1).astype(bf16)            # [rows, DIM]
    return jnp.dot(o, wo, preferred_element_type=f32) + bo


# ------------------------------------ fused kernel ------------------------------------
def _fused_kernel(patches_ref, pe_w_ref, corr_ref, enc_w_ref, enc_vec_ref,
                  dec_w_ref, dec_vec_ref,
                  main_ref, distil_ref, dec_ref,
                  hid_sc, t_sc):
    """Whole forward pass: encoder blocks + classifier heads + decoder layer + head."""
    bf16, f32 = jnp.bfloat16, jnp.float32

    # ---------------- encoder: patch-embed + DEPTH pre-norm ViT/DeiT blocks ----------------
    mask_e = _block_mask(B2, SEQ)                                 # [24, 24] in-kernel
    # Rows 0/1 of each sequence are zero-filled patches; `corr` adds pos-embed plus
    # cls/dist tokens on rows 0/1 and the patch-embed bias on patch rows.
    x = jnp.dot(patches_ref[...], pe_w_ref[...], preferred_element_type=f32) + corr_ref[...]

    for blk in range(DEPTH):
        wqkv = enc_w_ref[blk, 0:DIM, 0:3 * DIM]                   # [32, 96]  bf16
        wo = enc_w_ref[blk, 0:DIM, 128:128 + DIM]                 # [32, 32]  bf16
        fc1w = enc_w_ref[blk, 0:DIM, 256:256 + MLP_HIDDEN]        # [32, 64]  bf16
        fc2w = enc_w_ref[blk, 0:MLP_HIDDEN, 384:384 + DIM]        # [64, 32]  bf16
        ln1g = enc_vec_ref[blk, 0:1, 0:DIM]
        ln1b = enc_vec_ref[blk, 1:2, 0:DIM]
        ln2g = enc_vec_ref[blk, 2:3, 0:DIM]
        ln2b = enc_vec_ref[blk, 3:4, 0:DIM]
        bo = enc_vec_ref[blk, 4:5, 0:DIM]
        fc2b = enc_vec_ref[blk, 5:6, 0:DIM]
        bqkv = enc_vec_ref[blk, 6:7, 0:3 * DIM]
        fc1b = enc_vec_ref[blk, 7:8, 0:MLP_HIDDEN]

        # pre-norm multi-head self-attention + residual (timm LN eps=1e-6)
        h = _ln(x, ln1g, ln1b, 1e-6)
        x = x + _mha(h, h, mask_e, wqkv, bqkv, wo, bo, self_attn=True)
        # pre-norm MLP + residual
        h = _ln(x, ln2g, ln2b, 1e-6)
        # TODO(synk): PyTorch nn.GELU defaults to exact erf; tanh approximation used here.
        h = jax.nn.gelu(jnp.dot(h.astype(bf16), fc1w, preferred_element_type=f32) + fc1b,
                        approximate=True)
        x = x + jnp.dot(h.astype(bf16), fc2w, preferred_element_type=f32) + fc2b
    # TODO(synk): timm DeiT also applies a final LayerNorm + cls/dist heads (discarded by
    # the reference forward); hidden[-1] (last-block output) is consumed directly here.

    hid_sc[...] = x                                               # [24, 32] stays in VMEM

    # ---------------- token gathers (static row slices, no one-hot matmuls) ----------------
    cls1 = jnp.concatenate(                                       # image-1 cls tokens
        [hid_sc[b * SEQ:b * SEQ + 1, :] for b in range(BATCH)], axis=0)
    dist2 = jnp.concatenate(                                      # image-2 dist tokens
        [hid_sc[(BATCH + b) * SEQ + 1:(BATCH + b) * SEQ + 2, :] for b in range(BATCH)], axis=0)
    tgt = jnp.concatenate(                                        # image-2 patch tokens
        [hid_sc[(BATCH + b) * SEQ + 2:(BATCH + b + 1) * SEQ, :] for b in range(BATCH)], axis=0)
    mem = jnp.concatenate(                                        # image-1 patch tokens
        [hid_sc[b * SEQ + 2:(b + 1) * SEQ, :] for b in range(BATCH)], axis=0)

    # ---------------- class_encoder1 on cls(image1) and dist(image2) ----------------
    ce1_w = dec_w_ref[0:DIM, 768:768 + HEAD_PAD]                  # zero-padded to 128 lanes
    ce1_b = dec_vec_ref[12:13, :]
    main_ref[...] = jnp.dot(cls1.astype(bf16), ce1_w, preferred_element_type=f32) + ce1_b
    distil_ref[...] = jnp.dot(dist2.astype(bf16), ce1_w, preferred_element_type=f32) + ce1_b

    # ---------------- TransformerDecoderLayer (post-norm, ReLU FFN, dropout=0) ----------------
    # torch permutes to [L, B, D]; attention/LN/FFN are equivariant to that layout, so the
    # flattened batch-major layout + block-diag mask here is numerically equivalent.
    mask_d = _block_mask(BATCH, NPATCH)                           # [8, 8] in-kernel
    s_wqkv = dec_w_ref[0:DIM, 0:3 * DIM]
    s_wo = dec_w_ref[0:DIM, 128:128 + DIM]
    c_wqkv = dec_w_ref[0:DIM, 256:256 + 3 * DIM]
    c_wo = dec_w_ref[0:DIM, 384:384 + DIM]
    fc1w = dec_w_ref[0:DIM, 512:512 + DEC_FF]
    fc2w = dec_w_ref[0:DEC_FF, 640:640 + DIM]
    cd1_w = dec_w_ref[0:DIM, 896:896 + HEAD_PAD]

    s_bqkv = dec_vec_ref[0:1, 0:3 * DIM]
    s_bo = dec_vec_ref[1:2, 0:DIM]
    c_bqkv = dec_vec_ref[2:3, 0:3 * DIM]
    c_bo = dec_vec_ref[3:4, 0:DIM]
    ln1g = dec_vec_ref[4:5, 0:DIM]
    ln1b = dec_vec_ref[5:6, 0:DIM]
    ln2g = dec_vec_ref[6:7, 0:DIM]
    ln2b = dec_vec_ref[7:8, 0:DIM]
    ln3g = dec_vec_ref[8:9, 0:DIM]
    ln3b = dec_vec_ref[9:10, 0:DIM]
    fc1b = dec_vec_ref[10:11, 0:DEC_FF]
    fc2b = dec_vec_ref[11:12, 0:DIM]
    cd1_ln_g = dec_vec_ref[13:14, 0:DIM]
    cd1_ln_b = dec_vec_ref[14:15, 0:DIM]
    cd1_b = dec_vec_ref[15:16, :]

    a = _mha(tgt, tgt, mask_d, s_wqkv, s_bqkv, s_wo, s_bo, self_attn=True)
    t = _ln(tgt + a, ln1g, ln1b, 1e-5)
    a = _mha(t, mem, mask_d, c_wqkv, c_bqkv, c_wo, c_bo, self_attn=False)
    t = _ln(t + a, ln2g, ln2b, 1e-5)
    h = jnp.maximum(jnp.dot(t.astype(bf16), fc1w, preferred_element_type=f32) + fc1b, 0.0)
    h = jnp.dot(h.astype(bf16), fc2w, preferred_element_type=f32) + fc2b
    t = _ln(t + h, ln3g, ln3b, 1e-5)

    # mean over decoded patch tokens (per image), LayerNorm, class_decoder1 head.
    t_sc[...] = t
    pooled = jnp.concatenate(
        [jnp.mean(t_sc[b * NPATCH:(b + 1) * NPATCH, :], axis=0, keepdims=True)
         for b in range(BATCH)], axis=0)                          # [BATCH, DIM]
    pooled = _ln(pooled, cd1_ln_g, cd1_ln_b, 1e-5)
    dec_ref[...] = jnp.dot(pooled.astype(bf16), cd1_w, preferred_element_type=f32) + cd1_b


# ------------------------------------ host-side glue ------------------------------------
def extract_patches_flat(x):
    """NCHW -> [B*SEQ, C*p*p]; rows 0/1 of each sequence are zeros (cls/dist slots).

    Equivalent to the stride-p Conv2d patch-embed input (layout glue only).
    """
    B, C, H, W = x.shape
    p = PATCH
    xp = x.reshape(B, C, H // p, p, W // p, p)
    xp = xp.transpose(0, 2, 4, 1, 3, 5).reshape(B, NPATCH, C * p * p)
    xp = jnp.concatenate([jnp.zeros((B, 2, C * p * p), xp.dtype), xp], axis=1)
    return xp.reshape(B * SEQ, C * p * p)


def pack_params(p):
    """Pack all parameters into a few DMA-friendly slabs (128-lane-aligned segments)."""
    enc, dec = p["encoder"], p["decoder"]
    bf16, f32 = jnp.bfloat16, jnp.float32

    # Additive correction table: cls/dist tokens on rows 0/1, patch-embed bias on patch
    # rows, plus the positional embedding (hoisted out of the kernel).
    corr = enc["pos_embed"] + jnp.concatenate(
        [enc["cls_token"][None, :], enc["dist_token"][None, :],
         jnp.broadcast_to(enc["pe_b"][None, :], (NPATCH, DIM))], axis=0)
    corr = jnp.tile(corr, (B2, 1)).astype(f32)                    # [B2*SEQ, DIM]

    enc_w = jnp.zeros((DEPTH, MLP_HIDDEN, ENC_W_LANES), f32)
    enc_w = enc_w.at[:, :DIM, 0:3 * DIM].set(enc["wqkv"])
    enc_w = enc_w.at[:, :DIM, 128:128 + DIM].set(enc["wo"])
    enc_w = enc_w.at[:, :DIM, 256:256 + MLP_HIDDEN].set(enc["fc1_w"])
    enc_w = enc_w.at[:, :MLP_HIDDEN, 384:384 + DIM].set(enc["fc2_w"])
    enc_w = enc_w.astype(bf16)

    enc_vec = jnp.zeros((DEPTH, ENC_VEC_ROWS, 128), f32)
    enc_vec = enc_vec.at[:, 0, :DIM].set(enc["ln1_g"])
    enc_vec = enc_vec.at[:, 1, :DIM].set(enc["ln1_b"])
    enc_vec = enc_vec.at[:, 2, :DIM].set(enc["ln2_g"])
    enc_vec = enc_vec.at[:, 3, :DIM].set(enc["ln2_b"])
    enc_vec = enc_vec.at[:, 4, :DIM].set(enc["bo"])
    enc_vec = enc_vec.at[:, 5, :DIM].set(enc["fc2_b"])
    enc_vec = enc_vec.at[:, 6, :3 * DIM].set(enc["bqkv"])
    enc_vec = enc_vec.at[:, 7, :MLP_HIDDEN].set(enc["fc1_b"])

    dec_w = jnp.zeros((DIM, DEC_W_LANES), f32)
    dec_w = dec_w.at[:, 0:3 * DIM].set(dec["s_wqkv"])
    dec_w = dec_w.at[:, 128:128 + DIM].set(dec["s_wo"])
    dec_w = dec_w.at[:, 256:256 + 3 * DIM].set(dec["c_wqkv"])
    dec_w = dec_w.at[:, 384:384 + DIM].set(dec["c_wo"])
    dec_w = dec_w.at[:, 512:512 + DEC_FF].set(dec["fc1_w"])
    dec_w = dec_w.at[:DEC_FF, 640:640 + DIM].set(dec["fc2_w"])
    dec_w = dec_w.at[:, 768:768 + NUM_CLASSES].set(p["ce1_w"])    # zero-padded head
    dec_w = dec_w.at[:, 896:896 + NUM_CLASSES].set(p["cd1_w"])    # zero-padded head
    dec_w = dec_w.astype(bf16)

    dec_vec = jnp.zeros((DEC_VEC_ROWS, 128), f32)
    dec_vec = dec_vec.at[0, :3 * DIM].set(dec["s_bqkv"])
    dec_vec = dec_vec.at[1, :DIM].set(dec["s_bo"])
    dec_vec = dec_vec.at[2, :3 * DIM].set(dec["c_bqkv"])
    dec_vec = dec_vec.at[3, :DIM].set(dec["c_bo"])
    dec_vec = dec_vec.at[4, :DIM].set(dec["ln1_g"])
    dec_vec = dec_vec.at[5, :DIM].set(dec["ln1_b"])
    dec_vec = dec_vec.at[6, :DIM].set(dec["ln2_g"])
    dec_vec = dec_vec.at[7, :DIM].set(dec["ln2_b"])
    dec_vec = dec_vec.at[8, :DIM].set(dec["ln3_g"])
    dec_vec = dec_vec.at[9, :DIM].set(dec["ln3_b"])
    dec_vec = dec_vec.at[10, :DEC_FF].set(dec["fc1_b"])
    dec_vec = dec_vec.at[11, :DIM].set(dec["fc2_b"])
    dec_vec = dec_vec.at[12, :NUM_CLASSES].set(p["ce1_b"])        # zero-padded bias
    dec_vec = dec_vec.at[13, :DIM].set(p["cd1_ln_g"])
    dec_vec = dec_vec.at[14, :DIM].set(p["cd1_ln_b"])
    dec_vec = dec_vec.at[15, :NUM_CLASSES].set(p["cd1_b"])        # zero-padded bias

    return dict(pe_w=enc["pe_w"].astype(bf16), corr=corr,
                enc_w=enc_w, enc_vec=enc_vec, dec_w=dec_w, dec_vec=dec_vec)


def model_forward(x1, x2, packed):
    # Both encoder passes share weights -> batch both images through one fused kernel.
    x = jnp.concatenate([x1, x2], axis=0)                         # [B2, 3, IMG, IMG]
    patches = extract_patches_flat(x).astype(jnp.bfloat16)        # [B2*SEQ, CPP]

    outs = pl.pallas_call(
        _fused_kernel,
        out_shape=(jax.ShapeDtypeStruct((BATCH, HEAD_PAD), jnp.float32),) * 3,
        scratch_shapes=[pltpu.VMEM((B2 * SEQ, DIM), jnp.float32),
                        pltpu.VMEM((BATCH * NPATCH, DIM), jnp.float32)],
    )(patches, packed["pe_w"], packed["corr"],
      packed["enc_w"], packed["enc_vec"], packed["dec_w"], packed["dec_vec"])

    h_main, h_distil, h_dec1 = (o[:, :NUM_CLASSES] for o in outs)
    return h_main, h_distil, h_dec1


# ------------------------------------ param init ------------------------------------
def init_params(key):
    keys = iter(jax.random.split(key, 64))

    def nrm(shape):
        return 0.02 * jax.random.normal(next(keys), shape, jnp.float32)

    encoder = dict(
        pe_w=nrm((CPP, DIM)), pe_b=jnp.zeros((DIM,), jnp.float32),
        cls_token=nrm((DIM,)), dist_token=nrm((DIM,)),
        pos_embed=nrm((SEQ, DIM)),
        # Per-block weights stacked along a leading DEPTH axis; Q/K/V fused into one matrix.
        ln1_g=jnp.ones((DEPTH, DIM), jnp.float32),
        ln1_b=jnp.zeros((DEPTH, DIM), jnp.float32),
        wqkv=nrm((DEPTH, DIM, 3 * DIM)),
        bqkv=jnp.zeros((DEPTH, 3 * DIM), jnp.float32),
        wo=nrm((DEPTH, DIM, DIM)),
        bo=jnp.zeros((DEPTH, DIM), jnp.float32),
        ln2_g=jnp.ones((DEPTH, DIM), jnp.float32),
        ln2_b=jnp.zeros((DEPTH, DIM), jnp.float32),
        fc1_w=nrm((DEPTH, DIM, MLP_HIDDEN)),
        fc1_b=jnp.zeros((DEPTH, MLP_HIDDEN), jnp.float32),
        fc2_w=nrm((DEPTH, MLP_HIDDEN, DIM)),
        fc2_b=jnp.zeros((DEPTH, DIM), jnp.float32),
    )
    decoder = dict(
        s_wqkv=nrm((DIM, 3 * DIM)), s_bqkv=jnp.zeros((3 * DIM,), jnp.float32),
        s_wo=nrm((DIM, DIM)), s_bo=jnp.zeros((DIM,), jnp.float32),
        c_wqkv=nrm((DIM, 3 * DIM)), c_bqkv=jnp.zeros((3 * DIM,), jnp.float32),
        c_wo=nrm((DIM, DIM)), c_bo=jnp.zeros((DIM,), jnp.float32),
        ln1_g=jnp.ones((DIM,), jnp.float32), ln1_b=jnp.zeros((DIM,), jnp.float32),
        ln2_g=jnp.ones((DIM,), jnp.float32), ln2_b=jnp.zeros((DIM,), jnp.float32),
        ln3_g=jnp.ones((DIM,), jnp.float32), ln3_b=jnp.zeros((DIM,), jnp.float32),
        fc1_w=nrm((DIM, DEC_FF)), fc1_b=jnp.zeros((DEC_FF,), jnp.float32),
        fc2_w=nrm((DEC_FF, DIM)), fc2_b=jnp.zeros((DIM,), jnp.float32),
    )
    return dict(
        encoder=encoder,
        decoder=decoder,
        ce1_w=nrm((DIM, NUM_CLASSES)), ce1_b=jnp.zeros((NUM_CLASSES,), jnp.float32),
        # class_encoder2 / class_decoder2 exist in __init__ but are unused by forward.
        ce2_w=nrm((DIM, NUM_CLASSES)), ce2_b=jnp.zeros((NUM_CLASSES,), jnp.float32),
        cd1_ln_g=jnp.ones((DIM,), jnp.float32), cd1_ln_b=jnp.zeros((DIM,), jnp.float32),
        cd1_w=nrm((DIM, NUM_CLASSES)), cd1_b=jnp.zeros((NUM_CLASSES,), jnp.float32),
        cd2_ln_g=jnp.ones((DIM,), jnp.float32), cd2_ln_b=jnp.zeros((DIM,), jnp.float32),
        cd2_w=nrm((DIM, NUM_CLASSES)), cd2_b=jnp.zeros((NUM_CLASSES,), jnp.float32),
    )


# ------------------------------------ entry point ------------------------------------
if __name__ == "__main__":
    key = jax.random.PRNGKey(0)
    kp, k1, k2 = jax.random.split(key, 3)
    params = init_params(kp)
    packed = pack_params(params)                      # one-time host-side slab packing
    x1 = jax.random.normal(k1, (BATCH, 3, IMG, IMG), jnp.float32)
    x2 = jax.random.normal(k2, (BATCH, 3, IMG, IMG), jnp.float32)

    fwd = jax.jit(model_forward)
    h_main, h_distil, h_dec1 = fwd(x1, x2, packed)
    jax.block_until_ready((h_main, h_distil, h_dec1))

    assert h_main.shape == (BATCH, NUM_CLASSES)
    assert h_distil.shape == (BATCH, NUM_CLASSES)
    assert h_dec1.shape == (BATCH, NUM_CLASSES)
    assert all(bool(jnp.all(jnp.isfinite(t))) for t in (h_main, h_distil, h_dec1))
    print("KERNEL_OK")
</pallas_src>

<mosaic_0001>
module attributes {stable_mosaic.version = 11 : i64} {
  func.func @_fused_kernel(%arg0: memref<24x192xbf16, #tpu.memory_space<vmem>>, %arg1: memref<192x32xbf16, #tpu.memory_space<vmem>>, %arg2: memref<24x32xf32, #tpu.memory_space<vmem>>, %arg3: memref<2x64x512xbf16, #tpu.memory_space<vmem>>, %arg4: memref<2x8x128xf32, #tpu.memory_space<vmem>>, %arg5: memref<32x1024xbf16, #tpu.memory_space<vmem>>, %arg6: memref<16x128xf32, #tpu.memory_space<vmem>>, %arg7: memref<2x128xf32, #tpu.memory_space<vmem>>, %arg8: memref<2x128xf32, #tpu.memory_space<vmem>>, %arg9: memref<2x128xf32, #tpu.memory_space<vmem>>, %arg10: memref<24x32xf32, #tpu.memory_space<vmem>>, %arg11: memref<8x32xf32, #tpu.memory_space<vmem>>) attributes {dimension_semantics = [], scalar_prefetch = 0 : i64, scratch_operands = 2 : i64, tpu.core_type = #tpu.core_type<tc>} {
    %0 = tpu.iota {dimensions = array<i32: 0>} : vector<24x24xi32>
    %1 = arith.sitofp %0 : vector<24x24xi32> to vector<24x24xf32>
    %2 = tpu.iota {dimensions = array<i32: 1>} : vector<24x24xi32>
    %3 = arith.sitofp %2 : vector<24x24xi32> to vector<24x24xf32>
    %cst = arith.constant 5.000000e-01 : f32
    %4 = vector.broadcast %cst : f32 to vector<24x24xf32>
    %5 = arith.addf %1, %4 : vector<24x24xf32>
    %cst_0 = arith.constant 0.166666672 : f32
    %6 = vector.broadcast %cst_0 : f32 to vector<24x24xf32>
    %7 = arith.mulf %5, %6 : vector<24x24xf32>
    %8 = math.floor %7 : vector<24x24xf32>
    %cst_1 = arith.constant 5.000000e-01 : f32
    %9 = vector.broadcast %cst_1 : f32 to vector<24x24xf32>
    %10 = arith.addf %3, %9 : vector<24x24xf32>
    %cst_2 = arith.constant 0.166666672 : f32
    %11 = vector.broadcast %cst_2 : f32 to vector<24x24xf32>
    %12 = arith.mulf %10, %11 : vector<24x24xf32>
    %13 = math.floor %12 : vector<24x24xf32>
    %14 = arith.cmpf oeq, %8, %13 : vector<24x24xf32>
    %cst_3 = arith.constant 0.000000e+00 : f32
    %cst_4 = arith.constant -1.000000e+09 : f32
    %15 = vector.broadcast %cst_3 : f32 to vector<24x24xf32>
    %16 = vector.broadcast %cst_4 : f32 to vector<24x24xf32>
    %17 = arith.select %14, %15, %16 : vector<24x24xi1>, vector<24x24xf32>
    %c0 = arith.constant 0 : index
    %c0_5 = arith.constant 0 : index
    %18 = vector.load %arg0[%c0, %c0_5] : memref<24x192xbf16, #tpu.memory_space<vmem>>, vector<24x192xbf16>
    %c0_6 = arith.constant 0 : index
    %c0_7 = arith.constant 0 : index
    %19 = vector.load %arg1[%c0_6, %c0_7] : memref<192x32xbf16, #tpu.memory_space<vmem>>, vector<192x32xbf16>
    %cst_8 = arith.constant dense<0.000000e+00> : vector<24x32xf32>
    %20 = tpu.matmul %18, %19, %cst_8 {dimension_numbers = #tpu.dot_dimension_numbers<[1], [0], [0], [1], [0, 0, 1, 1], [], []>} : vector<24x192xbf16>, vector<192x32xbf16>, vector<24x32xf32> -> vector<24x32xf32>
    %c0_9 = arith.constant 0 : index
    %c0_10 = arith.constant 0 : index
    %21 = vector.load %arg2[%c0_9, %c0_10] : memref<24x32xf32, #tpu.memory_space<vmem>>, vector<24x32xf32>
    %22 = arith.addf %20, %21 : vector<24x32xf32>
    %c0_11 = arith.constant 0 : index
    %c0_12 = arith.constant 0 : index
    %c0_13 = arith.constant 0 : index
    %23 = vector.load %arg3[%c0_11, %c0_12, %c0_13] : memref<2x64x512xbf16, #tpu.memory_space<vmem>>, vector<1x32x96xbf16>
    %24 = vector.shape_cast %23 : vector<1x32x96xbf16> to vector<32x96xbf16>
    %c0_14 = arith.constant 0 : index
    %c0_15 = arith.constant 0 : index
    %c128 = arith.constant 128 : index
    %25 = vector.load %arg3[%c0_14, %c0_15, %c128] : memref<2x64x512xbf16, #tpu.memory_space<vmem>>, vector<1x32x32xbf16>
    %26 = vector.shape_cast %25 : vector<1x32x32xbf16> to vector<32x32xbf16>
    %c0_16 = arith.constant 0 : index
    %c0_17 = arith.constant 0 : index
    %c256 = arith.constant 256 : index
    %27 = vector.load %arg3[%c0_16, %c0_17, %c256] : memref<2x64x512xbf16, #tpu.memory_space<vmem>>, vector<1x32x64xbf16>
    %28 = vector.shape_cast %27 : vector<1x32x64xbf16> to vector<32x64xbf16>
    %c0_18 = arith.constant 0 : index
    %c0_19 = arith.constant 0 : index
    %c384 = arith.constant 384 : index
    %29 = vector.load %arg3[%c0_18, %c0_19, %c384] : memref<2x64x512xbf16, #tpu.memory_space<vmem>>, vector<1x64x32xbf16>
    %30 = vector.shape_cast %29 : vector<1x64x32xbf16> to vector<64x32xbf16>
    %c0_20 = arith.constant 0 : index
    %c0_21 = arith.constant 0 : index
    %c0_22 = arith.constant 0 : index
    %31 = vector.load %arg4[%c0_20, %c0_21, %c0_22] : memref<2x8x128xf32, #tpu.memory_space<vmem>>, vector<1x1x32xf32>
    %32 = vector.shape_cast %31 : vector<1x1x32xf32> to vector<1x32xf32>
    %c0_23 = arith.constant 0 : index
    %c1 = arith.constant 1 : index
    %c0_24 = arith.constant 0 : index
    %33 = vector.load %arg4[%c0_23, %c1, %c0_24] : memref<2x8x128xf32, #tpu.memory_space<vmem>>, vector<1x1x32xf32>
    %34 = vector.shape_cast %33 : vector<1x1x32xf32> to vector<1x32xf32>
    %c0_25 = arith.constant 0 : index
    %c2 = arith.constant 2 : index
    %c0_26 = arith.constant 0 : index
    %35 = vector.load %arg4[%c0_25, %c2, %c0_26] : memref<2x8x128xf32, #tpu.memory_space<vmem>>, vector<1x1x32xf32>
    %36 = vector.shape_cast %35 : vector<1x1x32xf32> to vector<1x32xf32>
    %c0_27 = arith.constant 0 : index
    %c3 = arith.constant 3 : index
    %c0_28 = arith.constant 0 : index
    %37 = vector.load %arg4[%c0_27, %c3, %c0_28] : memref<2x8x128xf32, #tpu.memory_space<vmem>>, vector<1x1x32xf32>
    %38 = vector.shape_cast %37 : vector<1x1x32xf32> to vector<1x32xf32>
    %c0_29 = arith.constant 0 : index
    %c4 = arith.constant 4 : index
    %c0_30 = arith.constant 0 : index
    %39 = vector.load %arg4[%c0_29, %c4, %c0_30] : memref<2x8x128xf32, #tpu.memory_space<vmem>>, vector<1x1x32xf32>
    %40 = vector.shape_cast %39 : vector<1x1x32xf32> to vector<1x32xf32>
    %c0_31 = arith.constant 0 : index
    %c5 = arith.constant 5 : index
    %c0_32 = arith.constant 0 : index
    %41 = vector.load %arg4[%c0_31, %c5, %c0_32] : memref<2x8x128xf32, #tpu.memory_space<vmem>>, vector<1x1x32xf32>
    %42 = vector.shape_cast %41 : vector<1x1x32xf32> to vector<1x32xf32>
    %c0_33 = arith.constant 0 : index
    %c6 = arith.constant 6 : index
    %c0_34 = arith.constant 0 : index
    %43 = vector.load %arg4[%c0_33, %c6, %c0_34] : memref<2x8x128xf32, #tpu.memory_space<vmem>>, vector<1x1x96xf32>
    %44 = vector.shape_cast %43 : vector<1x1x96xf32> to vector<1x96xf32>
    %c0_35 = arith.constant 0 : index
    %c7 = arith.constant 7 : index
    %c0_36 = arith.constant 0 : index
    %45 = vector.load %arg4[%c0_35, %c7, %c0_36] : memref<2x8x128xf32, #tpu.memory_space<vmem>>, vector<1x1x64xf32>
    %46 = vector.shape_cast %45 : vector<1x1x64xf32> to vector<1x64xf32>
    %cst_37 = arith.constant dense<0.000000e+00> : vector<24xf32>
    %47 = vector.multi_reduction <add>, %22, %cst_37 [1] : vector<24x32xf32> to vector<24xf32>
    %48 = vector.shape_cast %47 : vector<24xf32> to vector<24x1xf32>
    %cst_38 = arith.constant 3.200000e+01 : f32
    %49 = vector.broadcast %cst_38 : f32 to vector<24x1xf32>
    %50 = arith.divf %48, %49 : vector<24x1xf32>
    %51 = vector.broadcast %50 : vector<24x1xf32> to vector<24x32xf32>
    %52 = arith.subf %22, %51 : vector<24x32xf32>
    %53 = arith.mulf %52, %52 : vector<24x32xf32>
    %cst_39 = arith.constant dense<0.000000e+00> : vector<24xf32>
    %54 = vector.multi_reduction <add>, %53, %cst_39 [1] : vector<24x32xf32> to vector<24xf32>
    %55 = vector.shape_cast %54 : vector<24xf32> to vector<24x1xf32>
    %cst_40 = arith.constant 3.200000e+01 : f32
    %56 = vector.broadcast %cst_40 : f32 to vector<24x1xf32>
    %57 = arith.divf %55, %56 : vector<24x1xf32>
    %cst_41 = arith.constant 9.99999997E-7 : f32
    %58 = vector.broadcast %cst_41 : f32 to vector<24x1xf32>
    %59 = arith.addf %57, %58 : vector<24x1xf32>
    %60 = math.rsqrt %59 : vector<24x1xf32>
    %61 = vector.broadcast %60 : vector<24x1xf32> to vector<24x32xf32>
    %62 = arith.mulf %52, %61 : vector<24x32xf32>
    %63 = vector.broadcast %32 : vector<1x32xf32> to vector<24x32xf32>
    %64 = arith.mulf %62, %63 : vector<24x32xf32>
    %65 = vector.broadcast %34 : vector<1x32xf32> to vector<24x32xf32>
    %66 = arith.addf %64, %65 : vector<24x32xf32>
    %67 = arith.truncf %66 : vector<24x32xf32> to vector<24x32xbf16>
    %cst_42 = arith.constant dense<0.000000e+00> : vector<24x96xf32>
    %68 = tpu.matmul %67, %24, %cst_42 {dimension_numbers = #tpu.dot_dimension_numbers<[1], [0], [0], [1], [0, 0, 1, 1], [], []>} : vector<24x32xbf16>, vector<32x96xbf16>, vector<24x96xf32> -> vector<24x96xf32>
    %69 = vector.broadcast %44 : vector<1x96xf32> to vector<24x96xf32>
    %70 = arith.addf %68, %69 : vector<24x96xf32>
    %71 = vector.extract_strided_slice %70 {offsets = [0, 0], sizes = [24, 32], strides = [1, 1]} : vector<24x96xf32> to vector<24x32xf32>
    %72 = vector.extract_strided_slice %70 {offsets = [0, 32], sizes = [24, 32], strides = [1, 1]} : vector<24x96xf32> to vector<24x32xf32>
    %73 = vector.extract_strided_slice %70 {offsets = [0, 64], sizes = [24, 32], strides = [1, 1]} : vector<24x96xf32> to vector<24x32xf32>
    %74 = arith.truncf %71 : vector<24x32xf32> to vector<24x32xbf16>
    %75 = arith.truncf %72 : vector<24x32xf32> to vector<24x32xbf16>
    %76 = arith.truncf %73 : vector<24x32xf32> to vector<24x32xbf16>
    %77 = vector.extract_strided_slice %74 {offsets = [0, 0], sizes = [24, 8], strides = [1, 1]} : vector<24x32xbf16> to vector<24x8xbf16>
    %78 = vector.extract_strided_slice %75 {offsets = [0, 0], sizes = [24, 8], strides = [1, 1]} : vector<24x32xbf16> to vector<24x8xbf16>
    %cst_43 = arith.constant dense<0.000000e+00> : vector<24x24xf32>
    %79 = tpu.matmul %77, %78, %cst_43 {dimension_numbers = #tpu.dot_dimension_numbers<[1], [1], [0], [0], [0, 0, 1, 0], [], []>} : vector<24x8xbf16>, vector<24x8xbf16>, vector<24x24xf32> -> vector<24x24xf32>
    %cst_44 = arith.constant 0.353553385 : f32
    %80 = vector.broadcast %cst_44 : f32 to vector<24x24xf32>
    %81 = arith.mulf %79, %80 : vector<24x24xf32>
    %82 = arith.addf %81, %17 : vector<24x24xf32>
    %cst_45 = arith.constant dense<0xFF800000> : vector<24xf32>
    %83 = vector.multi_reduction <maximumf>, %82, %cst_45 [1] : vector<24x24xf32> to vector<24xf32>
    %84 = vector.shape_cast %83 : vector<24xf32> to vector<24x1xf32>
    %85 = vector.broadcast %84 : vector<24x1xf32> to vector<24x24xf32>
    %86 = arith.subf %82, %85 : vector<24x24xf32>
    %87 = math.exp %86 : vector<24x24xf32>
    %cst_46 = arith.constant dense<0.000000e+00> : vector<24xf32>
    %88 = vector.multi_reduction <add>, %87, %cst_46 [1] : vector<24x24xf32> to vector<24xf32>
    %89 = vector.shape_cast %88 : vector<24xf32> to vector<24x1xf32>
    %90 = tpu.reciprocal %89 {approx = true} : vector<24x1xf32> -> vector<24x1xf32>
    %91 = vector.broadcast %90 : vector<24x1xf32> to vector<24x24xf32>
    %92 = arith.mulf %87, %91 : vector<24x24xf32>
    %93 = arith.truncf %92 : vector<24x24xf32> to vector<24x24xbf16>
    %94 = vector.extract_strided_slice %76 {offsets = [0, 0], sizes = [24, 8], strides = [1, 1]} : vector<24x32xbf16> to vector<24x8xbf16>
    %cst_47 = arith.constant dense<0.000000e+00> : vector<24x8xf32>
    %95 = tpu.matmul %93, %94, %cst_47 {dimension_numbers = #tpu.dot_dimension_numbers<[1], [0], [0], [1], [0, 0, 1, 1], [], []>} : vector<24x24xbf16>, vector<24x8xbf16>, vector<24x8xf32> -> vector<24x8xf32>
    %96 = vector.extract_strided_slice %74 {offsets = [0, 8], sizes = [24, 8], strides = [1, 1]} : vector<24x32xbf16> to vector<24x8xbf16>
    %97 = vector.extract_strided_slice %75 {offsets = [0, 8], sizes = [24, 8], strides = [1, 1]} : vector<24x32xbf16> to vector<24x8xbf16>
    %cst_48 = arith.constant dense<0.000000e+00> : vector<24x24xf32>
    %98 = tpu.matmul %96, %97, %cst_48 {dimension_numbers = #tpu.dot_dimension_numbers<[1], [1], [0], [0], [0, 0, 1, 0], [], []>} : vector<24x8xbf16>, vector<24x8xbf16>, vector<24x24xf32> -> vector<24x24xf32>
    %cst_49 = arith.constant 0.353553385 : f32
    %99 = vector.broadcast %cst_49 : f32 to vector<24x24xf32>
    %100 = arith.mulf %98, %99 : vector<24x24xf32>
    %101 = arith.addf %100, %17 : vector<24x24xf32>
    %cst_50 = arith.constant dense<0xFF800000> : vector<24xf32>
    %102 = vector.multi_reduction <maximumf>, %101, %cst_50 [1] : vector<24x24xf32> to vector<24xf32>
    %103 = vector.shape_cast %102 : vector<24xf32> to vector<24x1xf32>
    %104 = vector.broadcast %103 : vector<24x1xf32> to vector<24x24xf32>
    %105 = arith.subf %101, %104 : vector<24x24xf32>
    %106 = math.exp %105 : vector<24x24xf32>
    %cst_51 = arith.constant dense<0.000000e+00> : vector<24xf32>
    %107 = vector.multi_reduction <add>, %106, %cst_51 [1] : vector<24x24xf32> to vector<24xf32>
    %108 = vector.shape_cast %107 : vector<24xf32> to vector<24x1xf32>
    %109 = tpu.reciprocal %108 {approx = true} : vector<24x1xf32> -> vector<24x1xf32>
    %110 = vector.broadcast %109 : vector<24x1xf32> to vector<24x24xf32>
    %111 = arith.mulf %106, %110 : vector<24x24xf32>
    %112 = arith.truncf %111 : vector<24x24xf32> to vector<24x24xbf16>
    %113 = vector.extract_strided_slice %76 {offsets = [0, 8], sizes = [24, 8], strides = [1, 1]} : vector<24x32xbf16> to vector<24x8xbf16>
    %cst_52 = arith.constant dense<0.000000e+00> : vector<24x8xf32>
    %114 = tpu.matmul %112, %113, %cst_52 {dimension_numbers = #tpu.dot_dimension_numbers<[1], [0], [0], [1], [0, 0, 1, 1], [], []>} : vector<24x24xbf16>, vector<24x8xbf16>, vector<24x8xf32> -> vector<24x8xf32>
    %115 = vector.extract_strided_slice %74 {offsets = [0, 16], sizes = [24, 8], strides = [1, 1]} : vector<24x32xbf16> to vector<24x8xbf16>
    %116 = vector.extract_strided_slice %75 {offsets = [0, 16], sizes = [24, 8], strides = [1, 1]} : vector<24x32xbf16> to vector<24x8xbf16>
    %cst_53 = arith.constant dense<0.000000e+00> : vector<24x24xf32>
    %117 = tpu.matmul %115, %116, %cst_53 {dimension_numbers = #tpu.dot_dimension_numbers<[1], [1], [0], [0], [0, 0, 1, 0], [], []>} : vector<24x8xbf16>, vector<24x8xbf16>, vector<24x24xf32> -> vector<24x24xf32>
    %cst_54 = arith.constant 0.353553385 : f32
    %118 = vector.broadcast %cst_54 : f32 to vector<24x24xf32>
    %119 = arith.mulf %117, %118 : vector<24x24xf32>
    %120 = arith.addf %119, %17 : vector<24x24xf32>
    %cst_55 = arith.constant dense<0xFF800000> : vector<24xf32>
    %121 = vector.multi_reduction <maximumf>, %120, %cst_55 [1] : vector<24x24xf32> to vector<24xf32>
    %122 = vector.shape_cast %121 : vector<24xf32> to vector<24x1xf32>
    %123 = vector.broadcast %122 : vector<24x1xf32> to vector<24x24xf32>
    %124 = arith.subf %120, %123 : vector<24x24xf32>
    %125 = math.exp %124 : vector<24x24xf32>
    %cst_56 = arith.constant dense<0.000000e+00> : vector<24xf32>
    %126 = vector.multi_reduction <add>, %125, %cst_56 [1] : vector<24x24xf32> to vector<24xf32>
    %127 = vector.shape_cast %126 : vector<24xf32> to vector<24x1xf32>
    %128 = tpu.reciprocal %127 {approx = true} : vector<24x1xf32> -> vector<24x1xf32>
    %129 = vector.broadcast %128 : vector<24x1xf32> to vector<24x24xf32>
    %130 = arith.mulf %125, %129 : vector<24x24xf32>
    %131 = arith.truncf %130 : vector<24x24xf32> to vector<24x24xbf16>
    %132 = vector.extract_strided_slice %76 {offsets = [0, 16], sizes = [24, 8], strides = [1, 1]} : vector<24x32xbf16> to vector<24x8xbf16>
    %cst_57 = arith.constant dense<0.000000e+00> : vector<24x8xf32>
    %133 = tpu.matmul %131, %132, %cst_57 {dimension_numbers = #tpu.dot_dimension_numbers<[1], [0], [0], [1], [0, 0, 1, 1], [], []>} : vector<24x24xbf16>, vector<24x8xbf16>, vector<24x8xf32> -> vector<24x8xf32>
    %134 = vector.extract_strided_slice %74 {offsets = [0, 24], sizes = [24, 8], strides = [1, 1]} : vector<24x32xbf16> to vector<24x8xbf16>
    %135 = vector.extract_strided_slice %75 {offsets = [0, 24], sizes = [24, 8], strides = [1, 1]} : vector<24x32xbf16> to vector<24x8xbf16>
    %cst_58 = arith.constant dense<0.000000e+00> : vector<24x24xf32>
    %136 = tpu.matmul %134, %135, %cst_58 {dimension_numbers = #tpu.dot_dimension_numbers<[1], [1], [0], [0], [0, 0, 1, 0], [], []>} : vector<24x8xbf16>, vector<24x8xbf16>, vector<24x24xf32> -> vector<24x24xf32>
    %cst_59 = arith.constant 0.353553385 : f32
    %137 = vector.broadcast %cst_59 : f32 to vector<24x24xf32>
    %138 = arith.mulf %136, %137 : vector<24x24xf32>
    %139 = arith.addf %138, %17 : vector<24x24xf32>
    %cst_60 = arith.constant dense<0xFF800000> : vector<24xf32>
    %140 = vector.multi_reduction <maximumf>, %139, %cst_60 [1] : vector<24x24xf32> to vector<24xf32>
    %141 = vector.shape_cast %140 : vector<24xf32> to vector<24x1xf32>
    %142 = vector.broadcast %141 : vector<24x1xf32> to vector<24x24xf32>
    %143 = arith.subf %139, %142 : vector<24x24xf32>
    %144 = math.exp %143 : vector<24x24xf32>
    %cst_61 = arith.constant dense<0.000000e+00> : vector<24xf32>
    %145 = vector.multi_reduction <add>, %144, %cst_61 [1] : vector<24x24xf32> to vector<24xf32>
    %146 = vector.shape_cast %145 : vector<24xf32> to vector<24x1xf32>
    %147 = tpu.reciprocal %146 {approx = true} : vector<24x1xf32> -> vector<24x1xf32>
    %148 = vector.broadcast %147 : vector<24x1xf32> to vector<24x24xf32>
    %149 = arith.mulf %144, %148 : vector<24x24xf32>
    %150 = arith.truncf %149 : vector<24x24xf32> to vector<24x24xbf16>
    %151 = vector.extract_strided_slice %76 {offsets = [0, 24], sizes = [24, 8], strides = [1, 1]} : vector<24x32xbf16> to vector<24x8xbf16>
    %cst_62 = arith.constant dense<0.000000e+00> : vector<24x8xf32>
    %152 = tpu.matmul %150, %151, %cst_62 {dimension_numbers = #tpu.dot_dimension_numbers<[1], [0], [0], [1], [0, 0, 1, 1], [], []>} : vector<24x24xbf16>, vector<24x8xbf16>, vector<24x8xf32> -> vector<24x8xf32>
    %153 = tpu.concatenate %95, %114, %133, %152 in 1 : vector<24x8xf32>, vector<24x8xf32>, vector<24x8xf32>, vector<24x8xf32> -> vector<24x32xf32>
    %154 = arith.truncf %153 : vector<24x32xf32> to vector<24x32xbf16>
    %cst_63 = arith.constant dense<0.000000e+00> : vector<24x32xf32>
    %155 = tpu.matmul %154, %26, %cst_63 {dimension_numbers = #tpu.dot_dimension_numbers<[1], [0], [0], [1], [0, 0, 1, 1], [], []>} : vector<24x32xbf16>, vector<32x32xbf16>, vector<24x32xf32> -> vector<24x32xf32>
    %156 = vector.broadcast %40 : vector<1x32xf32> to vector<24x32xf32>
    %157 = arith.addf %155, %156 : vector<24x32xf32>
    %158 = arith.addf %22, %157 : vector<24x32xf32>
    %cst_64 = arith.constant dense<0.000000e+00> : vector<24xf32>
    %159 = vector.multi_reduction <add>, %158, %cst_64 [1] : vector<24x32xf32> to vector<24xf32>
    %160 = vector.shape_cast %159 : vector<24xf32> to vector<24x1xf32>
    %cst_65 = arith.constant 3.200000e+01 : f32
    %161 = vector.broadcast %cst_65 : f32 to vector<24x1xf32>
    %162 = arith.divf %160, %161 : vector<24x1xf32>
    %163 = vector.broadcast %162 : vector<24x1xf32> to vector<24x32xf32>
    %164 = arith.subf %158, %163 : vector<24x32xf32>
    %165 = arith.mulf %164, %164 : vector<24x32xf32>
    %cst_66 = arith.constant dense<0.000000e+00> : vector<24xf32>
    %166 = vector.multi_reduction <add>, %165, %cst_66 [1] : vector<24x32xf32> to vector<24xf32>
    %167 = vector.shape_cast %166 : vector<24xf32> to vector<24x1xf32>
    %cst_67 = arith.constant 3.200000e+01 : f32
    %168 = vector.broadcast %cst_67 : f32 to vector<24x1xf32>
    %169 = arith.divf %167, %168 : vector<24x1xf32>
    %cst_68 = arith.constant 9.99999997E-7 : f32
    %170 = vector.broadcast %cst_68 : f32 to vector<24x1xf32>
    %171 = arith.addf %169, %170 : vector<24x1xf32>
    %172 = math.rsqrt %171 : vector<24x1xf32>
    %173 = vector.broadcast %172 : vector<24x1xf32> to vector<24x32xf32>
    %174 = arith.mulf %164, %173 : vector<24x32xf32>
    %175 = vector.broadcast %36 : vector<1x32xf32> to vector<24x32xf32>
    %176 = arith.mulf %174, %175 : vector<24x32xf32>
    %177 = vector.broadcast %38 : vector<1x32xf32> to vector<24x32xf32>
    %178 = arith.addf %176, %177 : vector<24x32xf32>
    %179 = arith.truncf %178 : vector<24x32xf32> to vector<24x32xbf16>
    %cst_69 = arith.constant dense<0.000000e+00> : vector<24x64xf32>
    %180 = tpu.matmul %179, %28, %cst_69 {dimension_numbers = #tpu.dot_dimension_numbers<[1], [0], [0], [1], [0, 0, 1, 1], [], []>} : vector<24x32xbf16>, vector<32x64xbf16>, vector<24x64xf32> -> vector<24x64xf32>
    %181 = vector.broadcast %46 : vector<1x64xf32> to vector<24x64xf32>
    %182 = arith.addf %180, %181 : vector<24x64xf32>
    %183 = arith.mulf %182, %182 : vector<24x64xf32>
    %184 = arith.mulf %182, %183 : vector<24x64xf32>
    %cst_70 = arith.constant 4.471500e-02 : f32
    %185 = vector.broadcast %cst_70 : f32 to vector<24x64xf32>
    %186 = arith.mulf %185, %184 : vector<24x64xf32>
    %187 = arith.addf %182, %186 : vector<24x64xf32>
    %cst_71 = arith.constant 0.797884583 : f32
    %188 = vector.broadcast %cst_71 : f32 to vector<24x64xf32>
    %189 = arith.mulf %188, %187 : vector<24x64xf32>
    %190 = math.tanh %189 : vector<24x64xf32>
    %cst_72 = arith.constant 1.000000e+00 : f32
    %191 = vector.broadcast %cst_72 : f32 to vector<24x64xf32>
    %192 = arith.addf %191, %190 : vector<24x64xf32>
    %cst_73 = arith.constant 5.000000e-01 : f32
    %193 = vector.broadcast %cst_73 : f32 to vector<24x64xf32>
    %194 = arith.mulf %193, %192 : vector<24x64xf32>
    %195 = arith.mulf %182, %194 : vector<24x64xf32>
    %196 = arith.truncf %195 : vector<24x64xf32> to vector<24x64xbf16>
    %cst_74 = arith.constant dense<0.000000e+00> : vector<24x32xf32>
    %197 = tpu.matmul %196, %30, %cst_74 {dimension_numbers = #tpu.dot_dimension_numbers<[1], [0], [0], [1], [0, 0, 1, 1], [], []>} : vector<24x64xbf16>, vector<64x32xbf16>, vector<24x32xf32> -> vector<24x32xf32>
    %198 = arith.addf %158, %197 : vector<24x32xf32>
    %199 = vector.broadcast %42 : vector<1x32xf32> to vector<24x32xf32>
    %200 = arith.addf %198, %199 : vector<24x32xf32>
    %c1_75 = arith.constant 1 : index
    %c0_76 = arith.constant 0 : index
    %c0_77 = arith.constant 0 : index
    %201 = vector.load %arg3[%c1_75, %c0_76, %c0_77] : memref<2x64x512xbf16, #tpu.memory_space<vmem>>, vector<1x32x96xbf16>
    %202 = vector.shape_cast %201 : vector<1x32x96xbf16> to vector<32x96xbf16>
    %c1_78 = arith.constant 1 : index
    %c0_79 = arith.constant 0 : index
    %c128_80 = arith.constant 128 : index
    %203 = vector.load %arg3[%c1_78, %c0_79, %c128_80] : memref<2x64x512xbf16, #tpu.memory_space<vmem>>, vector<1x32x32xbf16>
    %204 = vector.shape_cast %203 : vector<1x32x32xbf16> to vector<32x32xbf16>
    %c1_81 = arith.constant 1 : index
    %c0_82 = arith.constant 0 : index
    %c256_83 = arith.constant 256 : index
    %205 = vector.load %arg3[%c1_81, %c0_82, %c256_83] : memref<2x64x512xbf16, #tpu.memory_space<vmem>>, vector<1x32x64xbf16>
    %206 = vector.shape_cast %205 : vector<1x32x64xbf16> to vector<32x64xbf16>
    %c1_84 = arith.constant 1 : index
    %c0_85 = arith.constant 0 : index
    %c384_86 = arith.constant 384 : index
    %207 = vector.load %arg3[%c1_84, %c0_85, %c384_86] : memref<2x64x512xbf16, #tpu.memory_space<vmem>>, vector<1x64x32xbf16>
    %208 = vector.shape_cast %207 : vector<1x64x32xbf16> to vector<64x32xbf16>
    %c1_87 = arith.constant 1 : index
    %c0_88 = arith.constant 0 : index
    %c0_89 = arith.constant 0 : index
    %209 = vector.load %arg4[%c1_87, %c0_88, %c0_89] : memref<2x8x128xf32, #tpu.memory_space<vmem>>, vector<1x1x32xf32>
    %210 = vector.shape_cast %209 : vector<1x1x32xf32> to vector<1x32xf32>
    %c1_90 = arith.constant 1 : index
    %c1_91 = arith.constant 1 : index
    %c0_92 = arith.constant 0 : index
    %211 = vector.load %arg4[%c1_90, %c1_91, %c0_92] : memref<2x8x128xf32, #tpu.memory_space<vmem>>, vector<1x1x32xf32>
    %212 = vector.shape_cast %211 : vector<1x1x32xf32> to vector<1x32xf32>
    %c1_93 = arith.constant 1 : index
    %c2_94 = arith.constant 2 : index
    %c0_95 = arith.constant 0 : index
    %213 = vector.load %arg4[%c1_93, %c2_94, %c0_95] : memref<2x8x128xf32, #tpu.memory_space<vmem>>, vector<1x1x32xf32>
    %214 = vector.shape_cast %213 : vector<1x1x32xf32> to vector<1x32xf32>
    %c1_96 = arith.constant 1 : index
    %c3_97 = arith.constant 3 : index
    %c0_98 = arith.constant 0 : index
    %215 = vector.load %arg4[%c1_96, %c3_97, %c0_98] : memref<2x8x128xf32, #tpu.memory_space<vmem>>, vector<1x1x32xf32>
    %216 = vector.shape_cast %215 : vector<1x1x32xf32> to vector<1x32xf32>
    %c1_99 = arith.constant 1 : index
    %c4_100 = arith.constant 4 : index
    %c0_101 = arith.constant 0 : index
    %217 = vector.load %arg4[%c1_99, %c4_100, %c0_101] : memref<2x8x128xf32, #tpu.memory_space<vmem>>, vector<1x1x32xf32>
    %218 = vector.shape_cast %217 : vector<1x1x32xf32> to vector<1x32xf32>
    %c1_102 = arith.constant 1 : index
    %c5_103 = arith.constant 5 : index
    %c0_104 = arith.constant 0 : index
    %219 = vector.load %arg4[%c1_102, %c5_103, %c0_104] : memref<2x8x128xf32, #tpu.memory_space<vmem>>, vector<1x1x32xf32>
    %220 = vector.shape_cast %219 : vector<1x1x32xf32> to vector<1x32xf32>
    %c1_105 = arith.constant 1 : index
    %c6_106 = arith.constant 6 : index
    %c0_107 = arith.constant 0 : index
    %221 = vector.load %arg4[%c1_105, %c6_106, %c0_107] : memref<2x8x128xf32, #tpu.memory_space<vmem>>, vector<1x1x96xf32>
    %222 = vector.shape_cast %221 : vector<1x1x96xf32> to vector<1x96xf32>
    %c1_108 = arith.constant 1 : index
    %c7_109 = arith.constant 7 : index
    %c0_110 = arith.constant 0 : index
    %223 = vector.load %arg4[%c1_108, %c7_109, %c0_110] : memref<2x8x128xf32, #tpu.memory_space<vmem>>, vector<1x1x64xf32>
    %224 = vector.shape_cast %223 : vector<1x1x64xf32> to vector<1x64xf32>
    %cst_111 = arith.constant dense<0.000000e+00> : vector<24xf32>
    %225 = vector.multi_reduction <add>, %200, %cst_111 [1] : vector<24x32xf32> to vector<24xf32>
    %226 = vector.shape_cast %225 : vector<24xf32> to vector<24x1xf32>
    %cst_112 = arith.constant 3.200000e+01 : f32
    %227 = vector.broadcast %cst_112 : f32 to vector<24x1xf32>
    %228 = arith.divf %226, %227 : vector<24x1xf32>
    %229 = vector.broadcast %228 : vector<24x1xf32> to vector<24x32xf32>
    %230 = arith.subf %200, %229 : vector<24x32xf32>
    %231 = arith.mulf %230, %230 : vector<24x32xf32>
    %cst_113 = arith.constant dense<0.000000e+00> : vector<24xf32>
    %232 = vector.multi_reduction <add>, %231, %cst_113 [1] : vector<24x32xf32> to vector<24xf32>
    %233 = vector.shape_cast %232 : vector<24xf32> to vector<24x1xf32>
    %cst_114 = arith.constant 3.200000e+01 : f32
    %234 = vector.broadcast %cst_114 : f32 to vector<24x1xf32>
    %235 = arith.divf %233, %234 : vector<24x1xf32>
    %cst_115 = arith.constant 9.99999997E-7 : f32
    %236 = vector.broadcast %cst_115 : f32 to vector<24x1xf32>
    %237 = arith.addf %235, %236 : vector<24x1xf32>
    %238 = math.rsqrt %237 : vector<24x1xf32>
    %239 = vector.broadcast %238 : vector<24x1xf32> to vector<24x32xf32>
    %240 = arith.mulf %230, %239 : vector<24x32xf32>
    %241 = vector.broadcast %210 : vector<1x32xf32> to vector<24x32xf32>
    %242 = arith.mulf %240, %241 : vector<24x32xf32>
    %243 = vector.broadcast %212 : vector<1x32xf32> to vector<24x32xf32>
    %244 = arith.addf %242, %243 : vector<24x32xf32>
    %245 = arith.truncf %244 : vector<24x32xf32> to vector<24x32xbf16>
    %cst_116 = arith.constant dense<0.000000e+00> : vector<24x96xf32>
    %246 = tpu.matmul %245, %202, %cst_116 {dimension_numbers = #tpu.dot_dimension_numbers<[1], [0], [0], [1], [0, 0, 1, 1], [], []>} : vector<24x32xbf16>, vector<32x96xbf16>, vector<24x96xf32> -> vector<24x96xf32>
    %247 = vector.broadcast %222 : vector<1x96xf32> to vector<24x96xf32>
    %248 = arith.addf %246, %247 : vector<24x96xf32>
    %249 = vector.extract_strided_slice %248 {offsets = [0, 0], sizes = [24, 32], strides = [1, 1]} : vector<24x96xf32> to vector<24x32xf32>
    %250 = vector.extract_strided_slice %248 {offsets = [0, 32], sizes = [24, 32], strides = [1, 1]} : vector<24x96xf32> to vector<24x32xf32>
    %251 = vector.extract_strided_slice %248 {offsets = [0, 64], sizes = [24, 32], strides = [1, 1]} : vector<24x96xf32> to vector<24x32xf32>
    %252 = arith.truncf %249 : vector<24x32xf32> to vector<24x32xbf16>
    %253 = arith.truncf %250 : vector<24x32xf32> to vector<24x32xbf16>
    %254 = arith.truncf %251 : vector<24x32xf32> to vector<24x32xbf16>
    %255 = vector.extract_strided_slice %252 {offsets = [0, 0], sizes = [24, 8], strides = [1, 1]} : vector<24x32xbf16> to vector<24x8xbf16>
    %256 = vector.extract_strided_slice %253 {offsets = [0, 0], sizes = [24, 8], strides = [1, 1]} : vector<24x32xbf16> to vector<24x8xbf16>
    %cst_117 = arith.constant dense<0.000000e+00> : vector<24x24xf32>
    %257 = tpu.matmul %255, %256, %cst_117 {dimension_numbers = #tpu.dot_dimension_numbers<[1], [1], [0], [0], [0, 0, 1, 0], [], []>} : vector<24x8xbf16>, vector<24x8xbf16>, vector<24x24xf32> -> vector<24x24xf32>
    %cst_118 = arith.constant 0.353553385 : f32
    %258 = vector.broadcast %cst_118 : f32 to vector<24x24xf32>
    %259 = arith.mulf %257, %258 : vector<24x24xf32>
    %260 = arith.addf %259, %17 : vector<24x24xf32>
    %cst_119 = arith.constant dense<0xFF800000> : vector<24xf32>
    %261 = vector.multi_reduction <maximumf>, %260, %cst_119 [1] : vector<24x24xf32> to vector<24xf32>
    %262 = vector.shape_cast %261 : vector<24xf32> to vector<24x1xf32>
    %263 = vector.broadcast %262 : vector<24x1xf32> to vector<24x24xf32>
    %264 = arith.subf %260, %263 : vector<24x24xf32>
    %265 = math.exp %264 : vector<24x24xf32>
    %cst_120 = arith.constant dense<0.000000e+00> : vector<24xf32>
    %266 = vector.multi_reduction <add>, %265, %cst_120 [1] : vector<24x24xf32> to vector<24xf32>
    %267 = vector.shape_cast %266 : vector<24xf32> to vector<24x1xf32>
    %268 = tpu.reciprocal %267 {approx = true} : vector<24x1xf32> -> vector<24x1xf32>
    %269 = vector.broadcast %268 : vector<24x1xf32> to vector<24x24xf32>
    %270 = arith.mulf %265, %269 : vector<24x24xf32>
    %271 = arith.truncf %270 : vector<24x24xf32> to vector<24x24xbf16>
    %272 = vector.extract_strided_slice %254 {offsets = [0, 0], sizes = [24, 8], strides = [1, 1]} : vector<24x32xbf16> to vector<24x8xbf16>
    %cst_121 = arith.constant dense<0.000000e+00> : vector<24x8xf32>
    %273 = tpu.matmul %271, %272, %cst_121 {dimension_numbers = #tpu.dot_dimension_numbers<[1], [0], [0], [1], [0, 0, 1, 1], [], []>} : vector<24x24xbf16>, vector<24x8xbf16>, vector<24x8xf32> -> vector<24x8xf32>
    %274 = vector.extract_strided_slice %252 {offsets = [0, 8], sizes = [24, 8], strides = [1, 1]} : vector<24x32xbf16> to vector<24x8xbf16>
    %275 = vector.extract_strided_slice %253 {offsets = [0, 8], sizes = [24, 8], strides = [1, 1]} : vector<24x32xbf16> to vector<24x8xbf16>
    %cst_122 = arith.constant dense<0.000000e+00> : vector<24x24xf32>
    %276 = tpu.matmul %274, %275, %cst_122 {dimension_numbers = #tpu.dot_dimension_numbers<[1], [1], [0], [0], [0, 0, 1, 0], [], []>} : vector<24x8xbf16>, vector<24x8xbf16>, vector<24x24xf32> -> vector<24x24xf32>
    %cst_123 = arith.constant 0.353553385 : f32
    %277 = vector.broadcast %cst_123 : f32 to vector<24x24xf32>
    %278 = arith.mulf %276, %277 : vector<24x24xf32>
    %279 = arith.addf %278, %17 : vector<24x24xf32>
    %cst_124 = arith.constant dense<0xFF800000> : vector<24xf32>
    %280 = vector.multi_reduction <maximumf>, %279, %cst_124 [1] : vector<24x24xf32> to vector<24xf32>
    %281 = vector.shape_cast %280 : vector<24xf32> to vector<24x1xf32>
    %282 = vector.broadcast %281 : vector<24x1xf32> to vector<24x24xf32>
    %283 = arith.subf %279, %282 : vector<24x24xf32>
    %284 = math.exp %283 : vector<24x24xf32>
    %cst_125 = arith.constant dense<0.000000e+00> : vector<24xf32>
    %285 = vector.multi_reduction <add>, %284, %cst_125 [1] : vector<24x24xf32> to vector<24xf32>
    %286 = vector.shape_cast %285 : vector<24xf32> to vector<24x1xf32>
    %287 = tpu.reciprocal %286 {approx = true} : vector<24x1xf32> -> vector<24x1xf32>
    %288 = vector.broadcast %287 : vector<24x1xf32> to vector<24x24xf32>
    %289 = arith.mulf %284, %288 : vector<24x24xf32>
    %290 = arith.truncf %289 : vector<24x24xf32> to vector<24x24xbf16>
    %291 = vector.extract_strided_slice %254 {offsets = [0, 8], sizes = [24, 8], strides = [1, 1]} : vector<24x32xbf16> to vector<24x8xbf16>
    %cst_126 = arith.constant dense<0.000000e+00> : vector<24x8xf32>
    %292 = tpu.matmul %290, %291, %cst_126 {dimension_numbers = #tpu.dot_dimension_numbers<[1], [0], [0], [1], [0, 0, 1, 1], [], []>} : vector<24x24xbf16>, vector<24x8xbf16>, vector<24x8xf32> -> vector<24x8xf32>
    %293 = vector.extract_strided_slice %252 {offsets = [0, 16], sizes = [24, 8], strides = [1, 1]} : vector<24x32xbf16> to vector<24x8xbf16>
    %294 = vector.extract_strided_slice %253 {offsets = [0, 16], sizes = [24, 8], strides = [1, 1]} : vector<24x32xbf16> to vector<24x8xbf16>
    %cst_127 = arith.constant dense<0.000000e+00> : vector<24x24xf32>
    %295 = tpu.matmul %293, %294, %cst_127 {dimension_numbers = #tpu.dot_dimension_numbers<[1], [1], [0], [0], [0, 0, 1, 0], [], []>} : vector<24x8xbf16>, vector<24x8xbf16>, vector<24x24xf32> -> vector<24x24xf32>
    %cst_128 = arith.constant 0.353553385 : f32
    %296 = vector.broadcast %cst_128 : f32 to vector<24x24xf32>
    %297 = arith.mulf %295, %296 : vector<24x24xf32>
    %298 = arith.addf %297, %17 : vector<24x24xf32>
    %cst_129 = arith.constant dense<0xFF800000> : vector<24xf32>
    %299 = vector.multi_reduction <maximumf>, %298, %cst_129 [1] : vector<24x24xf32> to vector<24xf32>
    %300 = vector.shape_cast %299 : vector<24xf32> to vector<24x1xf32>
    %301 = vector.broadcast %300 : vector<24x1xf32> to vector<24x24xf32>
    %302 = arith.subf %298, %301 : vector<24x24xf32>
    %303 = math.exp %302 : vector<24x24xf32>
    %cst_130 = arith.constant dense<0.000000e+00> : vector<24xf32>
    %304 = vector.multi_reduction <add>, %303, %cst_130 [1] : vector<24x24xf32> to vector<24xf32>
    %305 = vector.shape_cast %304 : vector<24xf32> to vector<24x1xf32>
    %306 = tpu.reciprocal %305 {approx = true} : vector<24x1xf32> -> vector<24x1xf32>
    %307 = vector.broadcast %306 : vector<24x1xf32> to vector<24x24xf32>
    %308 = arith.mulf %303, %307 : vector<24x24xf32>
    %309 = arith.truncf %308 : vector<24x24xf32> to vector<24x24xbf16>
    %310 = vector.extract_strided_slice %254 {offsets = [0, 16], sizes = [24, 8], strides = [1, 1]} : vector<24x32xbf16> to vector<24x8xbf16>
    %cst_131 = arith.constant dense<0.000000e+00> : vector<24x8xf32>
    %311 = tpu.matmul %309, %310, %cst_131 {dimension_numbers = #tpu.dot_dimension_numbers<[1], [0], [0], [1], [0, 0, 1, 1], [], []>} : vector<24x24xbf16>, vector<24x8xbf16>, vector<24x8xf32> -> vector<24x8xf32>
    %312 = vector.extract_strided_slice %252 {offsets = [0, 24], sizes = [24, 8], strides = [1, 1]} : vector<24x32xbf16> to vector<24x8xbf16>
    %313 = vector.extract_strided_slice %253 {offsets = [0, 24], sizes = [24, 8], strides = [1, 1]} : vector<24x32xbf16> to vector<24x8xbf16>
    %cst_132 = arith.constant dense<0.000000e+00> : vector<24x24xf32>
    %314 = tpu.matmul %312, %313, %cst_132 {dimension_numbers = #tpu.dot_dimension_numbers<[1], [1], [0], [0], [0, 0, 1, 0], [], []>} : vector<24x8xbf16>, vector<24x8xbf16>, vector<24x24xf32> -> vector<24x24xf32>
    %cst_133 = arith.constant 0.353553385 : f32
    %315 = vector.broadcast %cst_133 : f32 to vector<24x24xf32>
    %316 = arith.mulf %314, %315 : vector<24x24xf32>
    %317 = arith.addf %316, %17 : vector<24x24xf32>
    %cst_134 = arith.constant dense<0xFF800000> : vector<24xf32>
    %318 = vector.multi_reduction <maximumf>, %317, %cst_134 [1] : vector<24x24xf32> to vector<24xf32>
    %319 = vector.shape_cast %318 : vector<24xf32> to vector<24x1xf32>
    %320 = vector.broadcast %319 : vector<24x1xf32> to vector<24x24xf32>
    %321 = arith.subf %317, %320 : vector<24x24xf32>
    %322 = math.exp %321 : vector<24x24xf32>
    %cst_135 = arith.constant dense<0.000000e+00> : vector<24xf32>
    %323 = vector.multi_reduction <add>, %322, %cst_135 [1] : vector<24x24xf32> to vector<24xf32>
    %324 = vector.shape_cast %323 : vector<24xf32> to vector<24x1xf32>
    %325 = tpu.reciprocal %324 {approx = true} : vector<24x1xf32> -> vector<24x1xf32>
    %326 = vector.broadcast %325 : vector<24x1xf32> to vector<24x24xf32>
    %327 = arith.mulf %322, %326 : vector<24x24xf32>
    %328 = arith.truncf %327 : vector<24x24xf32> to vector<24x24xbf16>
    %329 = vector.extract_strided_slice %254 {offsets = [0, 24], sizes = [24, 8], strides = [1, 1]} : vector<24x32xbf16> to vector<24x8xbf16>
    %cst_136 = arith.constant dense<0.000000e+00> : vector<24x8xf32>
    %330 = tpu.matmul %328, %329, %cst_136 {dimension_numbers = #tpu.dot_dimension_numbers<[1], [0], [0], [1], [0, 0, 1, 1], [], []>} : vector<24x24xbf16>, vector<24x8xbf16>, vector<24x8xf32> -> vector<24x8xf32>
    %331 = tpu.concatenate %273, %292, %311, %330 in 1 : vector<24x8xf32>, vector<24x8xf32>, vector<24x8xf32>, vector<24x8xf32> -> vector<24x32xf32>
    %332 = arith.truncf %331 : vector<24x32xf32> to vector<24x32xbf16>
    %cst_137 = arith.constant dense<0.000000e+00> : vector<24x32xf32>
    %333 = tpu.matmul %332, %204, %cst_137 {dimension_numbers = #tpu.dot_dimension_numbers<[1], [0], [0], [1], [0, 0, 1, 1], [], []>} : vector<24x32xbf16>, vector<32x32xbf16>, vector<24x32xf32> -> vector<24x32xf32>
    %334 = vector.broadcast %218 : vector<1x32xf32> to vector<24x32xf32>
    %335 = arith.addf %333, %334 : vector<24x32xf32>
    %336 = arith.addf %200, %335 : vector<24x32xf32>
    %cst_138 = arith.constant dense<0.000000e+00> : vector<24xf32>
    %337 = vector.multi_reduction <add>, %336, %cst_138 [1] : vector<24x32xf32> to vector<24xf32>
    %338 = vector.shape_cast %337 : vector<24xf32> to vector<24x1xf32>
    %cst_139 = arith.constant 3.200000e+01 : f32
    %339 = vector.broadcast %cst_139 : f32 to vector<24x1xf32>
    %340 = arith.divf %338, %339 : vector<24x1xf32>
    %341 = vector.broadcast %340 : vector<24x1xf32> to vector<24x32xf32>
    %342 = arith.subf %336, %341 : vector<24x32xf32>
    %343 = arith.mulf %342, %342 : vector<24x32xf32>
    %cst_140 = arith.constant dense<0.000000e+00> : vector<24xf32>
    %344 = vector.multi_reduction <add>, %343, %cst_140 [1] : vector<24x32xf32> to vector<24xf32>
    %345 = vector.shape_cast %344 : vector<24xf32> to vector<24x1xf32>
    %cst_141 = arith.constant 3.200000e+01 : f32
    %346 = vector.broadcast %cst_141 : f32 to vector<24x1xf32>
    %347 = arith.divf %345, %346 : vector<24x1xf32>
    %cst_142 = arith.constant 9.99999997E-7 : f32
    %348 = vector.broadcast %cst_142 : f32 to vector<24x1xf32>
    %349 = arith.addf %347, %348 : vector<24x1xf32>
    %350 = math.rsqrt %349 : vector<24x1xf32>
    %351 = vector.broadcast %350 : vector<24x1xf32> to vector<24x32xf32>
    %352 = arith.mulf %342, %351 : vector<24x32xf32>
    %353 = vector.broadcast %214 : vector<1x32xf32> to vector<24x32xf32>
    %354 = arith.mulf %352, %353 : vector<24x32xf32>
    %355 = vector.broadcast %216 : vector<1x32xf32> to vector<24x32xf32>
    %356 = arith.addf %354, %355 : vector<24x32xf32>
    %357 = arith.truncf %356 : vector<24x32xf32> to vector<24x32xbf16>
    %cst_143 = arith.constant dense<0.000000e+00> : vector<24x64xf32>
    %358 = tpu.matmul %357, %206, %cst_143 {dimension_numbers = #tpu.dot_dimension_numbers<[1], [0], [0], [1], [0, 0, 1, 1], [], []>} : vector<24x32xbf16>, vector<32x64xbf16>, vector<24x64xf32> -> vector<24x64xf32>
    %359 = vector.broadcast %224 : vector<1x64xf32> to vector<24x64xf32>
    %360 = arith.addf %358, %359 : vector<24x64xf32>
    %361 = arith.mulf %360, %360 : vector<24x64xf32>
    %362 = arith.mulf %360, %361 : vector<24x64xf32>
    %cst_144 = arith.constant 4.471500e-02 : f32
    %363 = vector.broadcast %cst_144 : f32 to vector<24x64xf32>
    %364 = arith.mulf %363, %362 : vector<24x64xf32>
    %365 = arith.addf %360, %364 : vector<24x64xf32>
    %cst_145 = arith.constant 0.797884583 : f32
    %366 = vector.broadcast %cst_145 : f32 to vector<24x64xf32>
    %367 = arith.mulf %366, %365 : vector<24x64xf32>
    %368 = math.tanh %367 : vector<24x64xf32>
    %cst_146 = arith.constant 1.000000e+00 : f32
    %369 = vector.broadcast %cst_146 : f32 to vector<24x64xf32>
    %370 = arith.addf %369, %368 : vector<24x64xf32>
    %cst_147 = arith.constant 5.000000e-01 : f32
    %371 = vector.broadcast %cst_147 : f32 to vector<24x64xf32>
    %372 = arith.mulf %371, %370 : vector<24x64xf32>
    %373 = arith.mulf %360, %372 : vector<24x64xf32>
    %374 = arith.truncf %373 : vector<24x64xf32> to vector<24x64xbf16>
    %cst_148 = arith.constant dense<0.000000e+00> : vector<24x32xf32>
    %375 = tpu.matmul %374, %208, %cst_148 {dimension_numbers = #tpu.dot_dimension_numbers<[1], [0], [0], [1], [0, 0, 1, 1], [], []>} : vector<24x64xbf16>, vector<64x32xbf16>, vector<24x32xf32> -> vector<24x32xf32>
    %376 = arith.addf %336, %375 : vector<24x32xf32>
    %377 = vector.broadcast %220 : vector<1x32xf32> to vector<24x32xf32>
    %378 = arith.addf %376, %377 : vector<24x32xf32>
    %c0_149 = arith.constant 0 : index
    %c0_150 = arith.constant 0 : index
    %379 = vector.load %arg10[%c0_149, %c0_150] : memref<24x32xf32, #tpu.memory_space<vmem>>, vector<24x32xf32>
    tpu.vector_store %arg10[%c0_149, %c0_150], %378 {strides = array<i32>} : memref<24x32xf32, #tpu.memory_space<vmem>>, vector<24x32xf32>,
    %c0_151 = arith.constant 0 : index
    %c0_152 = arith.constant 0 : index
    %380 = vector.load %arg10[%c0_151, %c0_152] : memref<24x32xf32, #tpu.memory_space<vmem>>, vector<1x32xf32>
    %c6_153 = arith.constant 6 : index
    %c0_154 = arith.constant 0 : index
    %381 = vector.load %arg10[%c6_153, %c0_154] : memref<24x32xf32, #tpu.memory_space<vmem>>, vector<1x32xf32>
    %382 = tpu.concatenate %380, %381 in 0 : vector<1x32xf32>, vector<1x32xf32> -> vector<2x32xf32>
    %c13 = arith.constant 13 : index
    %c0_155 = arith.constant 0 : index
    %383 = vector.load %arg10[%c13, %c0_155] : memref<24x32xf32, #tpu.memory_space<vmem>>, vector<1x32xf32>
    %c19 = arith.constant 19 : index
    %c0_156 = arith.constant 0 : index
    %384 = vector.load %arg10[%c19, %c0_156] : memref<24x32xf32, #tpu.memory_space<vmem>>, vector<1x32xf32>
    %385 = tpu.concatenate %383, %384 in 0 : vector<1x32xf32>, vector<1x32xf32> -> vector<2x32xf32>
    %c14 = arith.constant 14 : index
    %c0_157 = arith.constant 0 : index
    %386 = vector.load %arg10[%c14, %c0_157] : memref<24x32xf32, #tpu.memory_space<vmem>>, vector<4x32xf32>
    %c20 = arith.constant 20 : index
    %c0_158 = arith.constant 0 : index
    %387 = vector.load %arg10[%c20, %c0_158] : memref<24x32xf32, #tpu.memory_space<vmem>>, vector<4x32xf32>
    %388 = tpu.concatenate %386, %387 in 0 : vector<4x32xf32>, vector<4x32xf32> -> vector<8x32xf32>
    %c2_159 = arith.constant 2 : index
    %c0_160 = arith.constant 0 : index
    %389 = vector.load %arg10[%c2_159, %c0_160] : memref<24x32xf32, #tpu.memory_space<vmem>>, vector<4x32xf32>
    %c8 = arith.constant 8 : index
    %c0_161 = arith.constant 0 : index
    %390 = vector.load %arg10[%c8, %c0_161] : memref<24x32xf32, #tpu.memory_space<vmem>>, vector<4x32xf32>
    %391 = tpu.concatenate %389, %390 in 0 : vector<4x32xf32>, vector<4x32xf32> -> vector<8x32xf32>
    %c0_162 = arith.constant 0 : index
    %c768 = arith.constant 768 : index
    %392 = vector.load %arg5[%c0_162, %c768] : memref<32x1024xbf16, #tpu.memory_space<vmem>>, vector<32x128xbf16>
    %c12 = arith.constant 12 : index
    %c0_163 = arith.constant 0 : index
    %393 = vector.load %arg6[%c12, %c0_163] : memref<16x128xf32, #tpu.memory_space<vmem>>, vector<1x128xf32>
    %394 = arith.truncf %382 : vector<2x32xf32> to vector<2x32xbf16>
    %cst_164 = arith.constant dense<0.000000e+00> : vector<2x128xf32>
    %395 = tpu.matmul %394, %392, %cst_164 {dimension_numbers = #tpu.dot_dimension_numbers<[1], [0], [0], [1], [0, 0, 1, 1], [], []>} : vector<2x32xbf16>, vector<32x128xbf16>, vector<2x128xf32> -> vector<2x128xf32>
    %396 = vector.broadcast %393 : vector<1x128xf32> to vector<2x128xf32>
    %397 = arith.addf %395, %396 : vector<2x128xf32>
    %c0_165 = arith.constant 0 : index
    %c0_166 = arith.constant 0 : index
    %398 = vector.load %arg7[%c0_165, %c0_166] : memref<2x128xf32, #tpu.memory_space<vmem>>, vector<2x128xf32>
    tpu.vector_store %arg7[%c0_165, %c0_166], %397 {strides = array<i32>} : memref<2x128xf32, #tpu.memory_space<vmem>>, vector<2x128xf32>,
    %399 = arith.truncf %385 : vector<2x32xf32> to vector<2x32xbf16>
    %cst_167 = arith.constant dense<0.000000e+00> : vector<2x128xf32>
    %400 = tpu.matmul %399, %392, %cst_167 {dimension_numbers = #tpu.dot_dimension_numbers<[1], [0], [0], [1], [0, 0, 1, 1], [], []>} : vector<2x32xbf16>, vector<32x128xbf16>, vector<2x128xf32> -> vector<2x128xf32>
    %401 = vector.broadcast %393 : vector<1x128xf32> to vector<2x128xf32>
    %402 = arith.addf %400, %401 : vector<2x128xf32>
    %c0_168 = arith.constant 0 : index
    %c0_169 = arith.constant 0 : index
    %403 = vector.load %arg8[%c0_168, %c0_169] : memref<2x128xf32, #tpu.memory_space<vmem>>, vector<2x128xf32>
    tpu.vector_store %arg8[%c0_168, %c0_169], %402 {strides = array<i32>} : memref<2x128xf32, #tpu.memory_space<vmem>>, vector<2x128xf32>,
    %404 = tpu.iota {dimensions = array<i32: 0>} : vector<8x8xi32>
    %405 = arith.sitofp %404 : vector<8x8xi32> to vector<8x8xf32>
    %406 = tpu.iota {dimensions = array<i32: 1>} : vector<8x8xi32>
    %407 = arith.sitofp %406 : vector<8x8xi32> to vector<8x8xf32>
    %cst_170 = arith.constant 5.000000e-01 : f32
    %408 = vector.broadcast %cst_170 : f32 to vector<8x8xf32>
    %409 = arith.addf %405, %408 : vector<8x8xf32>
    %cst_171 = arith.constant 2.500000e-01 : f32
    %410 = vector.broadcast %cst_171 : f32 to vector<8x8xf32>
    %411 = arith.mulf %409, %410 : vector<8x8xf32>
    %412 = math.floor %411 : vector<8x8xf32>
    %cst_172 = arith.constant 5.000000e-01 : f32
    %413 = vector.broadcast %cst_172 : f32 to vector<8x8xf32>
    %414 = arith.addf %407, %413 : vector<8x8xf32>
    %cst_173 = arith.constant 2.500000e-01 : f32
    %415 = vector.broadcast %cst_173 : f32 to vector<8x8xf32>
    %416 = arith.mulf %414, %415 : vector<8x8xf32>
    %417 = math.floor %416 : vector<8x8xf32>
    %418 = arith.cmpf oeq, %412, %417 : vector<8x8xf32>
    %cst_174 = arith.constant 0.000000e+00 : f32
    %cst_175 = arith.constant -1.000000e+09 : f32
    %419 = vector.broadcast %cst_174 : f32 to vector<8x8xf32>
    %420 = vector.broadcast %cst_175 : f32 to vector<8x8xf32>
    %421 = arith.select %418, %419, %420 : vector<8x8xi1>, vector<8x8xf32>
    %c0_176 = arith.constant 0 : index
    %c0_177 = arith.constant 0 : index
    %422 = vector.load %arg5[%c0_176, %c0_177] : memref<32x1024xbf16, #tpu.memory_space<vmem>>, vector<32x96xbf16>
    %c0_178 = arith.constant 0 : index
    %c128_179 = arith.constant 128 : index
    %423 = vector.load %arg5[%c0_178, %c128_179] : memref<32x1024xbf16, #tpu.memory_space<vmem>>, vector<32x32xbf16>
    %c0_180 = arith.constant 0 : index
    %c256_181 = arith.constant 256 : index
    %424 = vector.load %arg5[%c0_180, %c256_181] : memref<32x1024xbf16, #tpu.memory_space<vmem>>, vector<32x96xbf16>
    %c0_182 = arith.constant 0 : index
    %c384_183 = arith.constant 384 : index
    %425 = vector.load %arg5[%c0_182, %c384_183] : memref<32x1024xbf16, #tpu.memory_space<vmem>>, vector<32x32xbf16>
    %c0_184 = arith.constant 0 : index
    %c512 = arith.constant 512 : index
    %426 = vector.load %arg5[%c0_184, %c512] : memref<32x1024xbf16, #tpu.memory_space<vmem>>, vector<32x16xbf16>
    %c0_185 = arith.constant 0 : index
    %c640 = arith.constant 640 : index
    %427 = vector.load %arg5[%c0_185, %c640] : memref<32x1024xbf16, #tpu.memory_space<vmem>>, vector<16x32xbf16>
    %c0_186 = arith.constant 0 : index
    %c896 = arith.constant 896 : index
    %428 = vector.load %arg5[%c0_186, %c896] : memref<32x1024xbf16, #tpu.memory_space<vmem>>, vector<32x128xbf16>
    %c0_187 = arith.constant 0 : index
    %c0_188 = arith.constant 0 : index
    %429 = vector.load %arg6[%c0_187, %c0_188] : memref<16x128xf32, #tpu.memory_space<vmem>>, vector<1x96xf32>
    %c1_189 = arith.constant 1 : index
    %c0_190 = arith.constant 0 : index
    %430 = vector.load %arg6[%c1_189, %c0_190] : memref<16x128xf32, #tpu.memory_space<vmem>>, vector<1x32xf32>
    %c2_191 = arith.constant 2 : index
    %c0_192 = arith.constant 0 : index
    %431 = vector.load %arg6[%c2_191, %c0_192] : memref<16x128xf32, #tpu.memory_space<vmem>>, vector<1x96xf32>
    %c3_193 = arith.constant 3 : index
    %c0_194 = arith.constant 0 : index
    %432 = vector.load %arg6[%c3_193, %c0_194] : memref<16x128xf32, #tpu.memory_space<vmem>>, vector<1x32xf32>
    %c4_195 = arith.constant 4 : index
    %c0_196 = arith.constant 0 : index
    %433 = vector.load %arg6[%c4_195, %c0_196] : memref<16x128xf32, #tpu.memory_space<vmem>>, vector<1x32xf32>
    %c5_197 = arith.constant 5 : index
    %c0_198 = arith.constant 0 : index
    %434 = vector.load %arg6[%c5_197, %c0_198] : memref<16x128xf32, #tpu.memory_space<vmem>>, vector<1x32xf32>
    %c6_199 = arith.constant 6 : index
    %c0_200 = arith.constant 0 : index
    %435 = vector.load %arg6[%c6_199, %c0_200] : memref<16x128xf32, #tpu.memory_space<vmem>>, vector<1x32xf32>
    %c7_201 = arith.constant 7 : index
    %c0_202 = arith.constant 0 : index
    %436 = vector.load %arg6[%c7_201, %c0_202] : memref<16x128xf32, #tpu.memory_space<vmem>>, vector<1x32xf32>
    %c8_203 = arith.constant 8 : index
    %c0_204 = arith.constant 0 : index
    %437 = vector.load %arg6[%c8_203, %c0_204] : memref<16x128xf32, #tpu.memory_space<vmem>>, vector<1x32xf32>
    %c9 = arith.constant 9 : index
    %c0_205 = arith.constant 0 : index
    %438 = vector.load %arg6[%c9, %c0_205] : memref<16x128xf32, #tpu.memory_space<vmem>>, vector<1x32xf32>
    %c10 = arith.constant 10 : index
    %c0_206 = arith.constant 0 : index
    %439 = vector.load %arg6[%c10, %c0_206] : memref<16x128xf32, #tpu.memory_space<vmem>>, vector<1x16xf32>
    %c11 = arith.constant 11 : index
    %c0_207 = arith.constant 0 : index
    %440 = vector.load %arg6[%c11, %c0_207] : memref<16x128xf32, #tpu.memory_space<vmem>>, vector<1x32xf32>
    %c13_208 = arith.constant 13 : index
    %c0_209 = arith.constant 0 : index
    %441 = vector.load %arg6[%c13_208, %c0_209] : memref<16x128xf32, #tpu.memory_space<vmem>>, vector<1x32xf32>
    %c14_210 = arith.constant 14 : index
    %c0_211 = arith.constant 0 : index
    %442 = vector.load %arg6[%c14_210, %c0_211] : memref<16x128xf32, #tpu.memory_space<vmem>>, vector<1x32xf32>
    %c15 = arith.constant 15 : index
    %c0_212 = arith.constant 0 : index
    %443 = vector.load %arg6[%c15, %c0_212] : memref<16x128xf32, #tpu.memory_space<vmem>>, vector<1x128xf32>
    %444 = arith.truncf %388 : vector<8x32xf32> to vector<8x32xbf16>
    %cst_213 = arith.constant dense<0.000000e+00> : vector<8x96xf32>
    %445 = tpu.matmul %444, %422, %cst_213 {dimension_numbers = #tpu.dot_dimension_numbers<[1], [0], [0], [1], [0, 0, 1, 1], [], []>} : vector<8x32xbf16>, vector<32x96xbf16>, vector<8x96xf32> -> vector<8x96xf32>
    %446 = vector.broadcast %429 : vector<1x96xf32> to vector<8x96xf32>
    %447 = arith.addf %445, %446 : vector<8x96xf32>
    %448 = vector.extract_strided_slice %447 {offsets = [0, 0], sizes = [8, 32], strides = [1, 1]} : vector<8x96xf32> to vector<8x32xf32>
    %449 = vector.extract_strided_slice %447 {offsets = [0, 32], sizes = [8, 32], strides = [1, 1]} : vector<8x96xf32> to vector<8x32xf32>
    %450 = vector.extract_strided_slice %447 {offsets = [0, 64], sizes = [8, 32], strides = [1, 1]} : vector<8x96xf32> to vector<8x32xf32>
    %451 = arith.truncf %448 : vector<8x32xf32> to vector<8x32xbf16>
    %452 = arith.truncf %449 : vector<8x32xf32> to vector<8x32xbf16>
    %453 = arith.truncf %450 : vector<8x32xf32> to vector<8x32xbf16>
    %454 = vector.extract_strided_slice %451 {offsets = [0, 0], sizes = [8, 8], strides = [1, 1]} : vector<8x32xbf16> to vector<8x8xbf16>
    %455 = vector.extract_strided_slice %452 {offsets = [0, 0], sizes = [8, 8], strides = [1, 1]} : vector<8x32xbf16> to vector<8x8xbf16>
    %cst_214 = arith.constant dense<0.000000e+00> : vector<8x8xf32>
    %456 = tpu.matmul %454, %455, %cst_214 {dimension_numbers = #tpu.dot_dimension_numbers<[1], [1], [0], [0], [0, 0, 1, 0], [], []>} : vector<8x8xbf16>, vector<8x8xbf16>, vector<8x8xf32> -> vector<8x8xf32>
    %cst_215 = arith.constant 0.353553385 : f32
    %457 = vector.broadcast %cst_215 : f32 to vector<8x8xf32>
    %458 = arith.mulf %456, %457 : vector<8x8xf32>
    %459 = arith.addf %458, %421 : vector<8x8xf32>
    %cst_216 = arith.constant dense<0xFF800000> : vector<8xf32>
    %460 = vector.multi_reduction <maximumf>, %459, %cst_216 [1] : vector<8x8xf32> to vector<8xf32>
    %461 = vector.shape_cast %460 : vector<8xf32> to vector<8x1xf32>
    %462 = vector.broadcast %461 : vector<8x1xf32> to vector<8x8xf32>
    %463 = arith.subf %459, %462 : vector<8x8xf32>
    %464 = math.exp %463 : vector<8x8xf32>
    %cst_217 = arith.constant dense<0.000000e+00> : vector<8xf32>
    %465 = vector.multi_reduction <add>, %464, %cst_217 [1] : vector<8x8xf32> to vector<8xf32>
    %466 = vector.shape_cast %465 : vector<8xf32> to vector<8x1xf32>
    %467 = tpu.reciprocal %466 {approx = true} : vector<8x1xf32> -> vector<8x1xf32>
    %468 = vector.broadcast %467 : vector<8x1xf32> to vector<8x8xf32>
    %469 = arith.mulf %464, %468 : vector<8x8xf32>
    %470 = arith.truncf %469 : vector<8x8xf32> to vector<8x8xbf16>
    %471 = vector.extract_strided_slice %453 {offsets = [0, 0], sizes = [8, 8], strides = [1, 1]} : vector<8x32xbf16> to vector<8x8xbf16>
    %cst_218 = arith.constant dense<0.000000e+00> : vector<8x8xf32>
    %472 = tpu.matmul %470, %471, %cst_218 {dimension_numbers = #tpu.dot_dimension_numbers<[1], [0], [0], [1], [0, 0, 1, 1], [], []>} : vector<8x8xbf16>, vector<8x8xbf16>, vector<8x8xf32> -> vector<8x8xf32>
    %473 = vector.extract_strided_slice %451 {offsets = [0, 8], sizes = [8, 8], strides = [1, 1]} : vector<8x32xbf16> to vector<8x8xbf16>
    %474 = vector.extract_strided_slice %452 {offsets = [0, 8], sizes = [8, 8], strides = [1, 1]} : vector<8x32xbf16> to vector<8x8xbf16>
    %cst_219 = arith.constant dense<0.000000e+00> : vector<8x8xf32>
    %475 = tpu.matmul %473, %474, %cst_219 {dimension_numbers = #tpu.dot_dimension_numbers<[1], [1], [0], [0], [0, 0, 1, 0], [], []>} : vector<8x8xbf16>, vector<8x8xbf16>, vector<8x8xf32> -> vector<8x8xf32>
    %cst_220 = arith.constant 0.353553385 : f32
    %476 = vector.broadcast %cst_220 : f32 to vector<8x8xf32>
    %477 = arith.mulf %475, %476 : vector<8x8xf32>
    %478 = arith.addf %477, %421 : vector<8x8xf32>
    %cst_221 = arith.constant dense<0xFF800000> : vector<8xf32>
    %479 = vector.multi_reduction <maximumf>, %478, %cst_221 [1] : vector<8x8xf32> to vector<8xf32>
    %480 = vector.shape_cast %479 : vector<8xf32> to vector<8x1xf32>
    %481 = vector.broadcast %480 : vector<8x1xf32> to vector<8x8xf32>
    %482 = arith.subf %478, %481 : vector<8x8xf32>
    %483 = math.exp %482 : vector<8x8xf32>
    %cst_222 = arith.constant dense<0.000000e+00> : vector<8xf32>
    %484 = vector.multi_reduction <add>, %483, %cst_222 [1] : vector<8x8xf32> to vector<8xf32>
    %485 = vector.shape_cast %484 : vector<8xf32> to vector<8x1xf32>
    %486 = tpu.reciprocal %485 {approx = true} : vector<8x1xf32> -> vector<8x1xf32>
    %487 = vector.broadcast %486 : vector<8x1xf32> to vector<8x8xf32>
    %488 = arith.mulf %483, %487 : vector<8x8xf32>
    %489 = arith.truncf %488 : vector<8x8xf32> to vector<8x8xbf16>
    %490 = vector.extract_strided_slice %453 {offsets = [0, 8], sizes = [8, 8], strides = [1, 1]} : vector<8x32xbf16> to vector<8x8xbf16>
    %cst_223 = arith.constant dense<0.000000e+00> : vector<8x8xf32>
    %491 = tpu.matmul %489, %490, %cst_223 {dimension_numbers = #tpu.dot_dimension_numbers<[1], [0], [0], [1], [0, 0, 1, 1], [], []>} : vector<8x8xbf16>, vector<8x8xbf16>, vector<8x8xf32> -> vector<8x8xf32>
    %492 = vector.extract_strided_slice %451 {offsets = [0, 16], sizes = [8, 8], strides = [1, 1]} : vector<8x32xbf16> to vector<8x8xbf16>
    %493 = vector.extract_strided_slice %452 {offsets = [0, 16], sizes = [8, 8], strides = [1, 1]} : vector<8x32xbf16> to vector<8x8xbf16>
    %cst_224 = arith.constant dense<0.000000e+00> : vector<8x8xf32>
    %494 = tpu.matmul %492, %493, %cst_224 {dimension_numbers = #tpu.dot_dimension_numbers<[1], [1], [0], [0], [0, 0, 1, 0], [], []>} : vector<8x8xbf16>, vector<8x8xbf16>, vector<8x8xf32> -> vector<8x8xf32>
    %cst_225 = arith.constant 0.353553385 : f32
    %495 = vector.broadcast %cst_225 : f32 to vector<8x8xf32>
    %496 = arith.mulf %494, %495 : vector<8x8xf32>
    %497 = arith.addf %496, %421 : vector<8x8xf32>
    %cst_226 = arith.constant dense<0xFF800000> : vector<8xf32>
    %498 = vector.multi_reduction <maximumf>, %497, %cst_226 [1] : vector<8x8xf32> to vector<8xf32>
    %499 = vector.shape_cast %498 : vector<8xf32> to vector<8x1xf32>
    %500 = vector.broadcast %499 : vector<8x1xf32> to vector<8x8xf32>
    %501 = arith.subf %497, %500 : vector<8x8xf32>
    %502 = math.exp %501 : vector<8x8xf32>
    %cst_227 = arith.constant dense<0.000000e+00> : vector<8xf32>
    %503 = vector.multi_reduction <add>, %502, %cst_227 [1] : vector<8x8xf32> to vector<8xf32>
    %504 = vector.shape_cast %503 : vector<8xf32> to vector<8x1xf32>
    %505 = tpu.reciprocal %504 {approx = true} : vector<8x1xf32> -> vector<8x1xf32>
    %506 = vector.broadcast %505 : vector<8x1xf32> to vector<8x8xf32>
    %507 = arith.mulf %502, %506 : vector<8x8xf32>
    %508 = arith.truncf %507 : vector<8x8xf32> to vector<8x8xbf16>
    %509 = vector.extract_strided_slice %453 {offsets = [0, 16], sizes = [8, 8], strides = [1, 1]} : vector<8x32xbf16> to vector<8x8xbf16>
    %cst_228 = arith.constant dense<0.000000e+00> : vector<8x8xf32>
    %510 = tpu.matmul %508, %509, %cst_228 {dimension_numbers = #tpu.dot_dimension_numbers<[1], [0], [0], [1], [0, 0, 1, 1], [], []>} : vector<8x8xbf16>, vector<8x8xbf16>, vector<8x8xf32> -> vector<8x8xf32>
    %511 = vector.extract_strided_slice %451 {offsets = [0, 24], sizes = [8, 8], strides = [1, 1]} : vector<8x32xbf16> to vector<8x8xbf16>
    %512 = vector.extract_strided_slice %452 {offsets = [0, 24], sizes = [8, 8], strides = [1, 1]} : vector<8x32xbf16> to vector<8x8xbf16>
    %cst_229 = arith.constant dense<0.000000e+00> : vector<8x8xf32>
    %513 = tpu.matmul %511, %512, %cst_229 {dimension_numbers = #tpu.dot_dimension_numbers<[1], [1], [0], [0], [0, 0, 1, 0], [], []>} : vector<8x8xbf16>, vector<8x8xbf16>, vector<8x8xf32> -> vector<8x8xf32>
    %cst_230 = arith.constant 0.353553385 : f32
    %514 = vector.broadcast %cst_230 : f32 to vector<8x8xf32>
    %515 = arith.mulf %513, %514 : vector<8x8xf32>
    %516 = arith.addf %515, %421 : vector<8x8xf32>
    %cst_231 = arith.constant dense<0xFF800000> : vector<8xf32>
    %517 = vector.multi_reduction <maximumf>, %516, %cst_231 [1] : vector<8x8xf32> to vector<8xf32>
    %518 = vector.shape_cast %517 : vector<8xf32> to vector<8x1xf32>
    %519 = vector.broadcast %518 : vector<8x1xf32> to vector<8x8xf32>
    %520 = arith.subf %516, %519 : vector<8x8xf32>
    %521 = math.exp %520 : vector<8x8xf32>
    %cst_232 = arith.constant dense<0.000000e+00> : vector<8xf32>
    %522 = vector.multi_reduction <add>, %521, %cst_232 [1] : vector<8x8xf32> to vector<8xf32>
    %523 = vector.shape_cast %522 : vector<8xf32> to vector<8x1xf32>
    %524 = tpu.reciprocal %523 {approx = true} : vector<8x1xf32> -> vector<8x1xf32>
    %525 = vector.broadcast %524 : vector<8x1xf32> to vector<8x8xf32>
    %526 = arith.mulf %521, %525 : vector<8x8xf32>
    %527 = arith.truncf %526 : vector<8x8xf32> to vector<8x8xbf16>
    %528 = vector.extract_strided_slice %453 {offsets = [0, 24], sizes = [8, 8], strides = [1, 1]} : vector<8x32xbf16> to vector<8x8xbf16>
    %cst_233 = arith.constant dense<0.000000e+00> : vector<8x8xf32>
    %529 = tpu.matmul %527, %528, %cst_233 {dimension_numbers = #tpu.dot_dimension_numbers<[1], [0], [0], [1], [0, 0, 1, 1], [], []>} : vector<8x8xbf16>, vector<8x8xbf16>, vector<8x8xf32> -> vector<8x8xf32>
    %530 = tpu.concatenate %472, %491, %510, %529 in 1 : vector<8x8xf32>, vector<8x8xf32>, vector<8x8xf32>, vector<8x8xf32> -> vector<8x32xf32>
    %531 = arith.truncf %530 : vector<8x32xf32> to vector<8x32xbf16>
    %cst_234 = arith.constant dense<0.000000e+00> : vector<8x32xf32>
    %532 = tpu.matmul %531, %423, %cst_234 {dimension_numbers = #tpu.dot_dimension_numbers<[1], [0], [0], [1], [0, 0, 1, 1], [], []>} : vector<8x32xbf16>, vector<32x32xbf16>, vector<8x32xf32> -> vector<8x32xf32>
    %533 = vector.broadcast %430 : vector<1x32xf32> to vector<8x32xf32>
    %534 = arith.addf %532, %533 : vector<8x32xf32>
    %535 = arith.addf %388, %534 : vector<8x32xf32>
    %cst_235 = arith.constant dense<0.000000e+00> : vector<8xf32>
    %536 = vector.multi_reduction <add>, %535, %cst_235 [1] : vector<8x32xf32> to vector<8xf32>
    %537 = vector.shape_cast %536 : vector<8xf32> to vector<8x1xf32>
    %cst_236 = arith.constant 3.200000e+01 : f32
    %538 = vector.broadcast %cst_236 : f32 to vector<8x1xf32>
    %539 = arith.divf %537, %538 : vector<8x1xf32>
    %540 = vector.broadcast %539 : vector<8x1xf32> to vector<8x32xf32>
    %541 = arith.subf %535, %540 : vector<8x32xf32>
    %542 = arith.mulf %541, %541 : vector<8x32xf32>
    %cst_237 = arith.constant dense<0.000000e+00> : vector<8xf32>
    %543 = vector.multi_reduction <add>, %542, %cst_237 [1] : vector<8x32xf32> to vector<8xf32>
    %544 = vector.shape_cast %543 : vector<8xf32> to vector<8x1xf32>
    %cst_238 = arith.constant 3.200000e+01 : f32
    %545 = vector.broadcast %cst_238 : f32 to vector<8x1xf32>
    %546 = arith.divf %544, %545 : vector<8x1xf32>
    %cst_239 = arith.constant 9.99999974E-6 : f32
    %547 = vector.broadcast %cst_239 : f32 to vector<8x1xf32>
    %548 = arith.addf %546, %547 : vector<8x1xf32>
    %549 = math.rsqrt %548 : vector<8x1xf32>
    %550 = vector.broadcast %549 : vector<8x1xf32> to vector<8x32xf32>
    %551 = arith.mulf %541, %550 : vector<8x32xf32>
    %552 = vector.broadcast %433 : vector<1x32xf32> to vector<8x32xf32>
    %553 = arith.mulf %551, %552 : vector<8x32xf32>
    %554 = vector.broadcast %434 : vector<1x32xf32> to vector<8x32xf32>
    %555 = arith.addf %553, %554 : vector<8x32xf32>
    %556 = arith.truncf %555 : vector<8x32xf32> to vector<8x32xbf16>
    %557 = vector.extract_strided_slice %424 {offsets = [0, 0], sizes = [32, 32], strides = [1, 1]} : vector<32x96xbf16> to vector<32x32xbf16>
    %cst_240 = arith.constant dense<0.000000e+00> : vector<8x32xf32>
    %558 = tpu.matmul %556, %557, %cst_240 {dimension_numbers = #tpu.dot_dimension_numbers<[1], [0], [0], [1], [0, 0, 1, 1], [], []>} : vector<8x32xbf16>, vector<32x32xbf16>, vector<8x32xf32> -> vector<8x32xf32>
    %559 = vector.extract_strided_slice %431 {offsets = [0, 0], sizes = [1, 32], strides = [1, 1]} : vector<1x96xf32> to vector<1x32xf32>
    %560 = vector.broadcast %559 : vector<1x32xf32> to vector<8x32xf32>
    %561 = arith.addf %558, %560 : vector<8x32xf32>
    %562 = arith.truncf %391 : vector<8x32xf32> to vector<8x32xbf16>
    %563 = vector.extract_strided_slice %424 {offsets = [0, 32], sizes = [32, 64], strides = [1, 1]} : vector<32x96xbf16> to vector<32x64xbf16>
    %cst_241 = arith.constant dense<0.000000e+00> : vector<8x64xf32>
    %564 = tpu.matmul %562, %563, %cst_241 {dimension_numbers = #tpu.dot_dimension_numbers<[1], [0], [0], [1], [0, 0, 1, 1], [], []>} : vector<8x32xbf16>, vector<32x64xbf16>, vector<8x64xf32> -> vector<8x64xf32>
    %565 = vector.extract_strided_slice %431 {offsets = [0, 32], sizes = [1, 64], strides = [1, 1]} : vector<1x96xf32> to vector<1x64xf32>
    %566 = vector.broadcast %565 : vector<1x64xf32> to vector<8x64xf32>
    %567 = arith.addf %564, %566 : vector<8x64xf32>
    %568 = vector.extract_strided_slice %567 {offsets = [0, 0], sizes = [8, 32], strides = [1, 1]} : vector<8x64xf32> to vector<8x32xf32>
    %569 = vector.extract_strided_slice %567 {offsets = [0, 32], sizes = [8, 32], strides = [1, 1]} : vector<8x64xf32> to vector<8x32xf32>
    %570 = arith.truncf %561 : vector<8x32xf32> to vector<8x32xbf16>
    %571 = arith.truncf %568 : vector<8x32xf32> to vector<8x32xbf16>
    %572 = arith.truncf %569 : vector<8x32xf32> to vector<8x32xbf16>
    %573 = vector.extract_strided_slice %570 {offsets = [0, 0], sizes = [8, 8], strides = [1, 1]} : vector<8x32xbf16> to vector<8x8xbf16>
    %574 = vector.extract_strided_slice %571 {offsets = [0, 0], sizes = [8, 8], strides = [1, 1]} : vector<8x32xbf16> to vector<8x8xbf16>
    %cst_242 = arith.constant dense<0.000000e+00> : vector<8x8xf32>
    %575 = tpu.matmul %573, %574, %cst_242 {dimension_numbers = #tpu.dot_dimension_numbers<[1], [1], [0], [0], [0, 0, 1, 0], [], []>} : vector<8x8xbf16>, vector<8x8xbf16>, vector<8x8xf32> -> vector<8x8xf32>
    %cst_243 = arith.constant 0.353553385 : f32
    %576 = vector.broadcast %cst_243 : f32 to vector<8x8xf32>
    %577 = arith.mulf %575, %576 : vector<8x8xf32>
    %578 = arith.addf %577, %421 : vector<8x8xf32>
    %cst_244 = arith.constant dense<0xFF800000> : vector<8xf32>
    %579 = vector.multi_reduction <maximumf>, %578, %cst_244 [1] : vector<8x8xf32> to vector<8xf32>
    %580 = vector.shape_cast %579 : vector<8xf32> to vector<8x1xf32>
    %581 = vector.broadcast %580 : vector<8x1xf32> to vector<8x8xf32>
    %582 = arith.subf %578, %581 : vector<8x8xf32>
    %583 = math.exp %582 : vector<8x8xf32>
    %cst_245 = arith.constant dense<0.000000e+00> : vector<8xf32>
    %584 = vector.multi_reduction <add>, %583, %cst_245 [1] : vector<8x8xf32> to vector<8xf32>
    %585 = vector.shape_cast %584 : vector<8xf32> to vector<8x1xf32>
    %586 = tpu.reciprocal %585 {approx = true} : vector<8x1xf32> -> vector<8x1xf32>
    %587 = vector.broadcast %586 : vector<8x1xf32> to vector<8x8xf32>
    %588 = arith.mulf %583, %587 : vector<8x8xf32>
    %589 = arith.truncf %588 : vector<8x8xf32> to vector<8x8xbf16>
    %590 = vector.extract_strided_slice %572 {offsets = [0, 0], sizes = [8, 8], strides = [1, 1]} : vector<8x32xbf16> to vector<8x8xbf16>
    %cst_246 = arith.constant dense<0.000000e+00> : vector<8x8xf32>
    %591 = tpu.matmul %589, %590, %cst_246 {dimension_numbers = #tpu.dot_dimension_numbers<[1], [0], [0], [1], [0, 0, 1, 1], [], []>} : vector<8x8xbf16>, vector<8x8xbf16>, vector<8x8xf32> -> vector<8x8xf32>
    %592 = vector.extract_strided_slice %570 {offsets = [0, 8], sizes = [8, 8], strides = [1, 1]} : vector<8x32xbf16> to vector<8x8xbf16>
    %593 = vector.extract_strided_slice %571 {offsets = [0, 8], sizes = [8, 8], strides = [1, 1]} : vector<8x32xbf16> to vector<8x8xbf16>
    %cst_247 = arith.constant dense<0.000000e+00> : vector<8x8xf32>
    %594 = tpu.matmul %592, %593, %cst_247 {dimension_numbers = #tpu.dot_dimension_numbers<[1], [1], [0], [0], [0, 0, 1, 0], [], []>} : vector<8x8xbf16>, vector<8x8xbf16>, vector<8x8xf32> -> vector<8x8xf32>
    %cst_248 = arith.constant 0.353553385 : f32
    %595 = vector.broadcast %cst_248 : f32 to vector<8x8xf32>
    %596 = arith.mulf %594, %595 : vector<8x8xf32>
    %597 = arith.addf %596, %421 : vector<8x8xf32>
    %cst_249 = arith.constant dense<0xFF800000> : vector<8xf32>
    %598 = vector.multi_reduction <maximumf>, %597, %cst_249 [1] : vector<8x8xf32> to vector<8xf32>
    %599 = vector.shape_cast %598 : vector<8xf32> to vector<8x1xf32>
    %600 = vector.broadcast %599 : vector<8x1xf32> to vector<8x8xf32>
    %601 = arith.subf %597, %600 : vector<8x8xf32>
    %602 = math.exp %601 : vector<8x8xf32>
    %cst_250 = arith.constant dense<0.000000e+00> : vector<8xf32>
    %603 = vector.multi_reduction <add>, %602, %cst_250 [1] : vector<8x8xf32> to vector<8xf32>
    %604 = vector.shape_cast %603 : vector<8xf32> to vector<8x1xf32>
    %605 = tpu.reciprocal %604 {approx = true} : vector<8x1xf32> -> vector<8x1xf32>
    %606 = vector.broadcast %605 : vector<8x1xf32> to vector<8x8xf32>
    %607 = arith.mulf %602, %606 : vector<8x8xf32>
    %608 = arith.truncf %607 : vector<8x8xf32> to vector<8x8xbf16>
    %609 = vector.extract_strided_slice %572 {offsets = [0, 8], sizes = [8, 8], strides = [1, 1]} : vector<8x32xbf16> to vector<8x8xbf16>
    %cst_251 = arith.constant dense<0.000000e+00> : vector<8x8xf32>
    %610 = tpu.matmul %608, %609, %cst_251 {dimension_numbers = #tpu.dot_dimension_numbers<[1], [0], [0], [1], [0, 0, 1, 1], [], []>} : vector<8x8xbf16>, vector<8x8xbf16>, vector<8x8xf32> -> vector<8x8xf32>
    %611 = vector.extract_strided_slice %570 {offsets = [0, 16], sizes = [8, 8], strides = [1, 1]} : vector<8x32xbf16> to vector<8x8xbf16>
    %612 = vector.extract_strided_slice %571 {offsets = [0, 16], sizes = [8, 8], strides = [1, 1]} : vector<8x32xbf16> to vector<8x8xbf16>
    %cst_252 = arith.constant dense<0.000000e+00> : vector<8x8xf32>
    %613 = tpu.matmul %611, %612, %cst_252 {dimension_numbers = #tpu.dot_dimension_numbers<[1], [1], [0], [0], [0, 0, 1, 0], [], []>} : vector<8x8xbf16>, vector<8x8xbf16>, vector<8x8xf32> -> vector<8x8xf32>
    %cst_253 = arith.constant 0.353553385 : f32
    %614 = vector.broadcast %cst_253 : f32 to vector<8x8xf32>
    %615 = arith.mulf %613, %614 : vector<8x8xf32>
    %616 = arith.addf %615, %421 : vector<8x8xf32>
    %cst_254 = arith.constant dense<0xFF800000> : vector<8xf32>
    %617 = vector.multi_reduction <maximumf>, %616, %cst_254 [1] : vector<8x8xf32> to vector<8xf32>
    %618 = vector.shape_cast %617 : vector<8xf32> to vector<8x1xf32>
    %619 = vector.broadcast %618 : vector<8x1xf32> to vector<8x8xf32>
    %620 = arith.subf %616, %619 : vector<8x8xf32>
    %621 = math.exp %620 : vector<8x8xf32>
    %cst_255 = arith.constant dense<0.000000e+00> : vector<8xf32>
    %622 = vector.multi_reduction <add>, %621, %cst_255 [1] : vector<8x8xf32> to vector<8xf32>
    %623 = vector.shape_cast %622 : vector<8xf32> to vector<8x1xf32>
    %624 = tpu.reciprocal %623 {approx = true} : vector<8x1xf32> -> vector<8x1xf32>
    %625 = vector.broadcast %624 : vector<8x1xf32> to vector<8x8xf32>
    %626 = arith.mulf %621, %625 : vector<8x8xf32>
    %627 = arith.truncf %626 : vector<8x8xf32> to vector<8x8xbf16>
    %628 = vector.extract_strided_slice %572 {offsets = [0, 16], sizes = [8, 8], strides = [1, 1]} : vector<8x32xbf16> to vector<8x8xbf16>
    %cst_256 = arith.constant dense<0.000000e+00> : vector<8x8xf32>
    %629 = tpu.matmul %627, %628, %cst_256 {dimension_numbers = #tpu.dot_dimension_numbers<[1], [0], [0], [1], [0, 0, 1, 1], [], []>} : vector<8x8xbf16>, vector<8x8xbf16>, vector<8x8xf32> -> vector<8x8xf32>
    %630 = vector.extract_strided_slice %570 {offsets = [0, 24], sizes = [8, 8], strides = [1, 1]} : vector<8x32xbf16> to vector<8x8xbf16>
    %631 = vector.extract_strided_slice %571 {offsets = [0, 24], sizes = [8, 8], strides = [1, 1]} : vector<8x32xbf16> to vector<8x8xbf16>
    %cst_257 = arith.constant dense<0.000000e+00> : vector<8x8xf32>
    %632 = tpu.matmul %630, %631, %cst_257 {dimension_numbers = #tpu.dot_dimension_numbers<[1], [1], [0], [0], [0, 0, 1, 0], [], []>} : vector<8x8xbf16>, vector<8x8xbf16>, vector<8x8xf32> -> vector<8x8xf32>
    %cst_258 = arith.constant 0.353553385 : f32
    %633 = vector.broadcast %cst_258 : f32 to vector<8x8xf32>
    %634 = arith.mulf %632, %633 : vector<8x8xf32>
    %635 = arith.addf %634, %421 : vector<8x8xf32>
    %cst_259 = arith.constant dense<0xFF800000> : vector<8xf32>
    %636 = vector.multi_reduction <maximumf>, %635, %cst_259 [1] : vector<8x8xf32> to vector<8xf32>
    %637 = vector.shape_cast %636 : vector<8xf32> to vector<8x1xf32>
    %638 = vector.broadcast %637 : vector<8x1xf32> to vector<8x8xf32>
    %639 = arith.subf %635, %638 : vector<8x8xf32>
    %640 = math.exp %639 : vector<8x8xf32>
    %cst_260 = arith.constant dense<0.000000e+00> : vector<8xf32>
    %641 = vector.multi_reduction <add>, %640, %cst_260 [1] : vector<8x8xf32> to vector<8xf32>
    %642 = vector.shape_cast %641 : vector<8xf32> to vector<8x1xf32>
    %643 = tpu.reciprocal %642 {approx = true} : vector<8x1xf32> -> vector<8x1xf32>
    %644 = vector.broadcast %643 : vector<8x1xf32> to vector<8x8xf32>
    %645 = arith.mulf %640, %644 : vector<8x8xf32>
    %646 = arith.truncf %645 : vector<8x8xf32> to vector<8x8xbf16>
    %647 = vector.extract_strided_slice %572 {offsets = [0, 24], sizes = [8, 8], strides = [1, 1]} : vector<8x32xbf16> to vector<8x8xbf16>
    %cst_261 = arith.constant dense<0.000000e+00> : vector<8x8xf32>
    %648 = tpu.matmul %646, %647, %cst_261 {dimension_numbers = #tpu.dot_dimension_numbers<[1], [0], [0], [1], [0, 0, 1, 1], [], []>} : vector<8x8xbf16>, vector<8x8xbf16>, vector<8x8xf32> -> vector<8x8xf32>
    %649 = tpu.concatenate %591, %610, %629, %648 in 1 : vector<8x8xf32>, vector<8x8xf32>, vector<8x8xf32>, vector<8x8xf32> -> vector<8x32xf32>
    %650 = arith.truncf %649 : vector<8x32xf32> to vector<8x32xbf16>
    %cst_262 = arith.constant dense<0.000000e+00> : vector<8x32xf32>
    %651 = tpu.matmul %650, %425, %cst_262 {dimension_numbers = #tpu.dot_dimension_numbers<[1], [0], [0], [1], [0, 0, 1, 1], [], []>} : vector<8x32xbf16>, vector<32x32xbf16>, vector<8x32xf32> -> vector<8x32xf32>
    %652 = vector.broadcast %432 : vector<1x32xf32> to vector<8x32xf32>
    %653 = arith.addf %651, %652 : vector<8x32xf32>
    %654 = arith.addf %555, %653 : vector<8x32xf32>
    %cst_263 = arith.constant dense<0.000000e+00> : vector<8xf32>
    %655 = vector.multi_reduction <add>, %654, %cst_263 [1] : vector<8x32xf32> to vector<8xf32>
    %656 = vector.shape_cast %655 : vector<8xf32> to vector<8x1xf32>
    %cst_264 = arith.constant 3.200000e+01 : f32
    %657 = vector.broadcast %cst_264 : f32 to vector<8x1xf32>
    %658 = arith.divf %656, %657 : vector<8x1xf32>
    %659 = vector.broadcast %658 : vector<8x1xf32> to vector<8x32xf32>
    %660 = arith.subf %654, %659 : vector<8x32xf32>
    %661 = arith.mulf %660, %660 : vector<8x32xf32>
    %cst_265 = arith.constant dense<0.000000e+00> : vector<8xf32>
    %662 = vector.multi_reduction <add>, %661, %cst_265 [1] : vector<8x32xf32> to vector<8xf32>
    %663 = vector.shape_cast %662 : vector<8xf32> to vector<8x1xf32>
    %cst_266 = arith.constant 3.200000e+01 : f32
    %664 = vector.broadcast %cst_266 : f32 to vector<8x1xf32>
    %665 = arith.divf %663, %664 : vector<8x1xf32>
    %cst_267 = arith.constant 9.99999974E-6 : f32
    %666 = vector.broadcast %cst_267 : f32 to vector<8x1xf32>
    %667 = arith.addf %665, %666 : vector<8x1xf32>
    %668 = math.rsqrt %667 : vector<8x1xf32>
    %669 = vector.broadcast %668 : vector<8x1xf32> to vector<8x32xf32>
    %670 = arith.mulf %660, %669 : vector<8x32xf32>
    %671 = vector.broadcast %435 : vector<1x32xf32> to vector<8x32xf32>
    %672 = arith.mulf %670, %671 : vector<8x32xf32>
    %673 = vector.broadcast %436 : vector<1x32xf32> to vector<8x32xf32>
    %674 = arith.addf %672, %673 : vector<8x32xf32>
    %675 = arith.truncf %674 : vector<8x32xf32> to vector<8x32xbf16>
    %cst_268 = arith.constant dense<0.000000e+00> : vector<8x16xf32>
    %676 = tpu.matmul %675, %426, %cst_268 {dimension_numbers = #tpu.dot_dimension_numbers<[1], [0], [0], [1], [0, 0, 1, 1], [], []>} : vector<8x32xbf16>, vector<32x16xbf16>, vector<8x16xf32> -> vector<8x16xf32>
    %677 = vector.broadcast %439 : vector<1x16xf32> to vector<8x16xf32>
    %678 = arith.addf %676, %677 : vector<8x16xf32>
    %cst_269 = arith.constant 0.000000e+00 : f32
    %679 = vector.broadcast %cst_269 : f32 to vector<8x16xf32>
    %680 = arith.maximumf %678, %679 : vector<8x16xf32>
    %681 = arith.truncf %680 : vector<8x16xf32> to vector<8x16xbf16>
    %cst_270 = arith.constant dense<0.000000e+00> : vector<8x32xf32>
    %682 = tpu.matmul %681, %427, %cst_270 {dimension_numbers = #tpu.dot_dimension_numbers<[1], [0], [0], [1], [0, 0, 1, 1], [], []>} : vector<8x16xbf16>, vector<16x32xbf16>, vector<8x32xf32> -> vector<8x32xf32>
    %683 = vector.broadcast %440 : vector<1x32xf32> to vector<8x32xf32>
    %684 = arith.addf %682, %683 : vector<8x32xf32>
    %685 = arith.addf %674, %684 : vector<8x32xf32>
    %cst_271 = arith.constant dense<0.000000e+00> : vector<8xf32>
    %686 = vector.multi_reduction <add>, %685, %cst_271 [1] : vector<8x32xf32> to vector<8xf32>
    %687 = vector.shape_cast %686 : vector<8xf32> to vector<8x1xf32>
    %cst_272 = arith.constant 3.200000e+01 : f32
    %688 = vector.broadcast %cst_272 : f32 to vector<8x1xf32>
    %689 = arith.divf %687, %688 : vector<8x1xf32>
    %690 = vector.broadcast %689 : vector<8x1xf32> to vector<8x32xf32>
    %691 = arith.subf %685, %690 : vector<8x32xf32>
    %692 = arith.mulf %691, %691 : vector<8x32xf32>
    %cst_273 = arith.constant dense<0.000000e+00> : vector<8xf32>
    %693 = vector.multi_reduction <add>, %692, %cst_273 [1] : vector<8x32xf32> to vector<8xf32>
    %694 = vector.shape_cast %693 : vector<8xf32> to vector<8x1xf32>
    %cst_274 = arith.constant 3.200000e+01 : f32
    %695 = vector.broadcast %cst_274 : f32 to vector<8x1xf32>
    %696 = arith.divf %694, %695 : vector<8x1xf32>
    %cst_275 = arith.constant 9.99999974E-6 : f32
    %697 = vector.broadcast %cst_275 : f32 to vector<8x1xf32>
    %698 = arith.addf %696, %697 : vector<8x1xf32>
    %699 = math.rsqrt %698 : vector<8x1xf32>
    %700 = vector.broadcast %699 : vector<8x1xf32> to vector<8x32xf32>
    %701 = arith.mulf %691, %700 : vector<8x32xf32>
    %702 = vector.broadcast %437 : vector<1x32xf32> to vector<8x32xf32>
    %703 = arith.mulf %701, %702 : vector<8x32xf32>
    %704 = vector.broadcast %438 : vector<1x32xf32> to vector<8x32xf32>
    %705 = arith.addf %703, %704 : vector<8x32xf32>
    %c0_276 = arith.constant 0 : index
    %c0_277 = arith.constant 0 : index
    %706 = vector.load %arg11[%c0_276, %c0_277] : memref<8x32xf32, #tpu.memory_space<vmem>>, vector<8x32xf32>
    tpu.vector_store %arg11[%c0_276, %c0_277], %705 {strides = array<i32>} : memref<8x32xf32, #tpu.memory_space<vmem>>, vector<8x32xf32>,
    %c0_278 = arith.constant 0 : index
    %c0_279 = arith.constant 0 : index
    %707 = vector.load %arg11[%c0_278, %c0_279] : memref<8x32xf32, #tpu.memory_space<vmem>>, vector<4x32xf32>
    %cst_280 = arith.constant dense<0.000000e+00> : vector<32xf32>
    %708 = vector.multi_reduction <add>, %707, %cst_280 [0] : vector<4x32xf32> to vector<32xf32>
    %709 = vector.shape_cast %708 : vector<32xf32> to vector<1x32xf32>
    %cst_281 = arith.constant 4.000000e+00 : f32
    %710 = vector.broadcast %cst_281 : f32 to vector<1x32xf32>
    %711 = arith.divf %709, %710 : vector<1x32xf32>
    %c4_282 = arith.constant 4 : index
    %c0_283 = arith.constant 0 : index
    %712 = vector.load %arg11[%c4_282, %c0_283] : memref<8x32xf32, #tpu.memory_space<vmem>>, vector<4x32xf32>
    %cst_284 = arith.constant dense<0.000000e+00> : vector<32xf32>
    %713 = vector.multi_reduction <add>, %712, %cst_284 [0] : vector<4x32xf32> to vector<32xf32>
    %714 = vector.shape_cast %713 : vector<32xf32> to vector<1x32xf32>
    %cst_285 = arith.constant 4.000000e+00 : f32
    %715 = vector.broadcast %cst_285 : f32 to vector<1x32xf32>
    %716 = arith.divf %714, %715 : vector<1x32xf32>
    %717 = tpu.concatenate %711, %716 in 0 : vector<1x32xf32>, vector<1x32xf32> -> vector<2x32xf32>
    %cst_286 = arith.constant dense<0.000000e+00> : vector<2xf32>
    %718 = vector.multi_reduction <add>, %717, %cst_286 [1] : vector<2x32xf32> to vector<2xf32>
    %719 = vector.shape_cast %718 : vector<2xf32> to vector<2x1xf32>
    %cst_287 = arith.constant 3.200000e+01 : f32
    %720 = vector.broadcast %cst_287 : f32 to vector<2x1xf32>
    %721 = arith.divf %719, %720 : vector<2x1xf32>
    %722 = vector.broadcast %721 : vector<2x1xf32> to vector<2x32xf32>
    %723 = arith.subf %717, %722 : vector<2x32xf32>
    %724 = arith.mulf %723, %723 : vector<2x32xf32>
    %cst_288 = arith.constant dense<0.000000e+00> : vector<2xf32>
    %725 = vector.multi_reduction <add>, %724, %cst_288 [1] : vector<2x32xf32> to vector<2xf32>
    %726 = vector.shape_cast %725 : vector<2xf32> to vector<2x1xf32>
    %cst_289 = arith.constant 3.200000e+01 : f32
    %727 = vector.broadcast %cst_289 : f32 to vector<2x1xf32>
    %728 = arith.divf %726, %727 : vector<2x1xf32>
    %cst_290 = arith.constant 9.99999974E-6 : f32
    %729 = vector.broadcast %cst_290 : f32 to vector<2x1xf32>
    %730 = arith.addf %728, %729 : vector<2x1xf32>
    %731 = math.rsqrt %730 : vector<2x1xf32>
    %732 = vector.broadcast %731 : vector<2x1xf32> to vector<2x32xf32>
    %733 = arith.mulf %723, %732 : vector<2x32xf32>
    %734 = vector.broadcast %441 : vector<1x32xf32> to vector<2x32xf32>
    %735 = arith.mulf %733, %734 : vector<2x32xf32>
    %736 = vector.broadcast %442 : vector<1x32xf32> to vector<2x32xf32>
    %737 = arith.addf %735, %736 : vector<2x32xf32>
    %738 = arith.truncf %737 : vector<2x32xf32> to vector<2x32xbf16>
    %cst_291 = arith.constant dense<0.000000e+00> : vector<2x128xf32>
    %739 = tpu.matmul %738, %428, %cst_291 {dimension_numbers = #tpu.dot_dimension_numbers<[1], [0], [0], [1], [0, 0, 1, 1], [], []>} : vector<2x32xbf16>, vector<32x128xbf16>, vector<2x128xf32> -> vector<2x128xf32>
    %740 = vector.broadcast %443 : vector<1x128xf32> to vector<2x128xf32>
    %741 = arith.addf %739, %740 : vector<2x128xf32>
    %c0_292 = arith.constant 0 : index
    %c0_293 = arith.constant 0 : index
    %742 = vector.load %arg9[%c0_292, %c0_293] : memref<2x128xf32, #tpu.memory_space<vmem>>, vector<2x128xf32>
    tpu.vector_store %arg9[%c0_292, %c0_293], %741 {strides = array<i32>} : memref<2x128xf32, #tpu.memory_space<vmem>>, vector<2x128xf32>,
    return
  }
}

</mosaic_0001>

<llo_original>
// kernel: model_forward.1
$region0: #{model_forward.1}
  #allocation0 [shape = 'u32[]', space=smem, size = 0x4, offset = 0x4, fixed_abs, tag = 'smem constant byte address 0x4 - core index']
  #allocation1 [shape = 'u32[72,128]{1,0:T(1,128)}', space=vmem, size = 0x9000, scoped, tag = 'internal scratch']
  #allocation2 [shape = 'f32[24,32]{1,0:T(8,128)}', space=vmem, size = 0x3000, scoped, tag = 'scratch operand']
  #allocation3 [shape = 'f32[8,32]{1,0:T(8,128)}', space=vmem, size = 0x1000, scoped, tag = 'scratch operand']
  %s0 = inlined_call_operand.vmem [shape: bf16[24,192], index: 0, kind: input, shape index: {}]
  %s1 = inlined_call_operand.vmem [shape: bf16[192,32], index: 1, kind: input, shape index: {}]
  %s2 = inlined_call_operand.vmem [shape: f32[24,32], index: 2, kind: input, shape index: {}]
  %s3 = inlined_call_operand.vmem [shape: bf16[2,64,512], index: 3, kind: input, shape index: {}]
  %s4 = inlined_call_operand.vmem [shape: f32[2,8,128], index: 4, kind: input, shape index: {}]
  %s5 = inlined_call_operand.vmem [shape: bf16[32,1024], index: 5, kind: input, shape index: {}]
  %s6 = inlined_call_operand.vmem [shape: f32[16,128], index: 6, kind: input, shape index: {}]
  %s7 = inlined_call_operand.hbm [shape: f32[2,128], index: 7, kind: output, shape index: {0}]
  %s8 = inlined_call_operand.hbm [shape: f32[2,128], index: 8, kind: output, shape index: {1}]
  %s9 = inlined_call_operand.hbm [shape: f32[2,128], index: 9, kind: output, shape index: {2}]
  %10 = xla_tuple %s7, %s8, %s9
  %s11 = sld [smem:[#allocation0]]
  $region54: #{model_forward.1} parent=0
    _
  %s13 = ssub.s32 1, %s11
  %s14 = scalar_select 0, %s13, %s11
  $region1: #{model_forward.1} parent=0
    #allocation4 [shape = 'u8[1024]{0}', space=vmem, size = 0x400, scoped, tag = 'output window, operand 0, single buffered']
    #allocation5 [shape = 's32[1]{0}', space=sflag, size = 0x4, scoped, tag = 'scoped memory for model_forward.1']
    #allocation6 [shape = 'u8[1024]{0}', space=vmem, size = 0x400, scoped, tag = 'output window, operand 1, single buffered']
    #allocation7 [shape = 's32[1]{0}', space=sflag, size = 0x4, scoped, tag = 'scoped memory for model_forward.1']
    #allocation8 [shape = 'u8[1024]{0}', space=vmem, size = 0x400, scoped, tag = 'output window, operand 2, single buffered']
    %15 = vsyncpa [#allocation5], 0
    %16 = vsyncpa [#allocation7], 0
    // Predicated region
    $region2: #{model_forward.1} parent=1 // pred_check
      _
    $region3: #{model_forward.1} parent=1 // pred_check_branch
      %18 = sbr.rel (0) target = $region5
    $region4: #{model_forward.1} parent=1 // pred_region
      _
    $region5: #{model_forward.1} parent=1 // pred_fallthru
      _
    // Predicated region
    $region6: #{model_forward.1} parent=1 // pred_check
      _
    $region7: #{model_forward.1} parent=1 // pred_check_branch
      %20 = sbr.rel (0) target = $region9
    $region8: #{model_forward.1} parent=1 // pred_region
      _
    $region9: #{model_forward.1} parent=1 // pred_fallthru
      _
    // Predicated region
    $region10: #{model_forward.1} parent=1 // pred_check
      _
    $region11: #{model_forward.1} parent=1 // pred_check_branch
      %22 = sbr.rel (0) target = $region13
    $region12: #{model_forward.1} parent=1 // pred_region
      _
    $region13: #{model_forward.1} parent=1 // pred_fallthru
      _
    // Predicated region
    $region14: #{model_forward.1} parent=1 // pred_check
      _
    $region15: #{model_forward.1} parent=1 // pred_check_branch
      %24 = sbr.rel (0) target = $region17
    $region16: #{model_forward.1} parent=1 // pred_region
      _
    $region17: #{model_forward.1} parent=1 // pred_fallthru
      _
    // Predicated region
    $region18: #{model_forward.1} parent=1 // pred_check
      _
    $region19: #{model_forward.1} parent=1 // pred_check_branch
      %26 = sbr.rel (0) target = $region21
    $region20: #{model_forward.1} parent=1 // pred_region
      _
    $region21: #{model_forward.1} parent=1 // pred_fallthru
      _
    // Predicated region
    $region22: #{model_forward.1} parent=1 // pred_check
      _
    $region23: #{model_forward.1} parent=1 // pred_check_branch
      %28 = sbr.rel (0) target = $region25
    $region24: #{model_forward.1} parent=1 // pred_region
      _
    $region25: #{model_forward.1} parent=1 // pred_fallthru
      _
    // Predicated region
    $region26: #{model_forward.1} parent=1 // pred_check
      _
    $region27: #{model_forward.1} parent=1 // pred_check_branch
      %30 = sbr.rel (0) target = $region29
    $region28: #{model_forward.1} parent=1 // pred_region
      _
    $region29: #{model_forward.1} parent=1 // pred_fallthru
      _
    %v32 = vlaneseq
    %v33 = vshrl.u32 %v32, 7
    %v34 = vadd.s32 %v33, 8
    %v35 = vadd.s32 %v33, 16
    %v36 = vcvt.s32.f32 %v33
    %v37 = vcvt.s32.f32 %v34
    %v38 = vcvt.s32.f32 %v35
    %v39 = vlaneseq
    %v40 = vand.u32 %v39, 127
    %v41 = vcvt.s32.f32 %v40
    %v42 = vadd.f32 %v36, 0.5
    %v43 = vadd.f32 %v37, 0.5
    %v44 = vadd.f32 %v38, 0.5
    %v45 = vmul.f32 %v42, 0.16666667
    %v46 = vmul.f32 %v43, 0.16666667
    %v47 = vmul.f32 %v44, 0.16666667
    %v48 = vfloor.f32 %v45
    %v49 = vfloor.f32 %v46
    %v50 = vfloor.f32 %v47
    %v51 = vadd.f32 %v41, 0.5
    %v52 = vmul.f32 %v51, 0.16666667
    %v53 = vfloor.f32 %v52
    %vm54 = vcmp.eq.f32.partialorder %v48, %v53
    %vm55 = vcmp.eq.f32.partialorder %v49, %v53
    %vm56 = vcmp.eq.f32.partialorder %v50, %v53
    %v57 = vsel %vm54, 0.0, -1e+09
    %v58 = vsel %vm55, 0.0, -1e+09
    %v59 = vsel %vm56, 0.0, -1e+09
    %v60 = vld [vmem:[%s0] sm:$0xff]
    %v61 = vld [vmem:[%s0 + $0x8] sm:$0xff]
    %v62 = vld [vmem:[%s0 + $0x10] sm:$0xff]
    %v63 = vld [vmem:[%s1] sm:$0xf]
    %v64 = vld [vmem:[%s1 + $0x4] sm:$0xf]
    %v65 = vld [vmem:[%s1 + $0x8] sm:$0xf]
    %v66 = vld [vmem:[%s1 + $0xc] sm:$0xf]
    %v67 = vld [vmem:[%s1 + $0x10] sm:$0xf]
    %v68 = vld [vmem:[%s1 + $0x14] sm:$0xf]
    %v69 = vld [vmem:[%s1 + $0x18] sm:$0xf]
    %v70 = vld [vmem:[%s1 + $0x1c] sm:$0xf]
    %v71 = vld [vmem:[%s1 + $0x20] sm:$0xf]
    %v72 = vld [vmem:[%s1 + $0x24] sm:$0xf]
    %v73 = vld [vmem:[%s1 + $0x28] sm:$0xf]
    %v74 = vld [vmem:[%s1 + $0x2c] sm:$0xf]
    %v75 = vld [vmem:[%s1 + $0x30] sm:$0xf]
    %v76 = vld [vmem:[%s1 + $0x34] sm:$0xf]
    %v77 = vld [vmem:[%s1 + $0x38] sm:$0xf]
    %v78 = vld [vmem:[%s1 + $0x3c] sm:$0xf]
    %v79 = vld [vmem:[%s1 + $0x40] sm:$0xf]
    %v80 = vld [vmem:[%s1 + $0x44] sm:$0xf]
    %v81 = vld [vmem:[%s1 + $0x48] sm:$0xf]
    %v82 = vld [vmem:[%s1 + $0x4c] sm:$0xf]
    %v83 = vld [vmem:[%s1 + $0x50] sm:$0xf]
    %v84 = vld [vmem:[%s1 + $0x54] sm:$0xf]
    %v85 = vld [vmem:[%s1 + $0x58] sm:$0xf]
    %v86 = vld [vmem:[%s1 + $0x5c] sm:$0xf]
    %v87 = vld [vmem:[%s2] sm:$0xff]
    %v88 = vld [vmem:[%s2 + $0x8] sm:$0xff]
    %v89 = vld [vmem:[%s2 + $0x10] sm:$0xff]
    %v93 = vunpack.c.l.b16 %v60
    %v94 = vunpack.c.h.b16 %v60
    %v95 = vunpack.c.l.b16 %v61
    %v96 = vunpack.c.h.b16 %v61
    %v97 = vunpack.c.l.b16 %v62
    %v98 = vunpack.c.h.b16 %v62
    %v99 = vpack.c.b16 %v95, %v93
    %v100 = vpack.c.b16 %v96, %v94
    %v101 = vpack.c.b16 %v97, %v97
    %v102 = vpack.c.b16 %v98, %v98
    %v129 = vunpack.c.l.b16 %v63
    %v130 = vunpack.c.l.b16 %v64
    %v131 = vunpack.c.l.b16 %v65
    %v132 = vunpack.c.l.b16 %v66
    %v133 = vunpack.c.l.b16 %v67
    %v134 = vunpack.c.l.b16 %v68
    %v135 = vunpack.c.l.b16 %v69
    %v136 = vunpack.c.l.b16 %v70
    %v137 = vunpack.c.l.b16 %v71
    %v138 = vunpack.c.l.b16 %v72
    %v139 = vunpack.c.l.b16 %v73
    %v140 = vunpack.c.l.b16 %v74
    %v141 = vunpack.c.l.b16 %v75
    %v142 = vunpack.c.l.b16 %v76
    %v143 = vunpack.c.l.b16 %v77
    %v144 = vunpack.c.l.b16 %v78
    %v145 = vunpack.c.l.b16 %v79
    %v146 = vunpack.c.l.b16 %v80
    %v147 = vunpack.c.l.b16 %v81
    %v148 = vunpack.c.l.b16 %v82
    %v149 = vunpack.c.l.b16 %v83
    %v150 = vunpack.c.l.b16 %v84
    %v151 = vunpack.c.l.b16 %v85
    %v152 = vunpack.c.l.b16 %v86
    %v153 = vpack.c.b16 %v130, %v129
    %v154 = vpack.c.b16 %v132, %v131
    %v155 = vpack.c.b16 %v134, %v133
    %v156 = vpack.c.b16 %v136, %v135
    %v157 = vpack.c.b16 %v138, %v137
    %v158 = vpack.c.b16 %v140, %v139
    %v159 = vpack.c.b16 %v142, %v141
    %v160 = vpack.c.b16 %v144, %v143
    %v161 = vpack.c.b16 %v146, %v145
    %v162 = vpack.c.b16 %v148, %v147
    %v163 = vpack.c.b16 %v150, %v149
    %v164 = vpack.c.b16 %v152, %v151
    %vm177 = vcmask 523264
    %v179 = vsel %vm177, %v100, 0
    %v182 = vsel %vm177, %v102, 0
    %184 = vmatpush.bf16.msra.mxu0 %v160
    %185 = vmatpush.bf16.msra.mxu0 %v159
    %186 = vmatpush.bf16.msra.mxu0 %v158
    %187 = vmatpush.bf16.msra.mxu0 %v157
    %188 = vmatpush.bf16.msra.mxu0 %v156
    %189 = vmatpush.bf16.msra.mxu0 %v155
    %190 = vmatpush.bf16.msra.mxu0 %v154
    %191 = vmatpush.bf16.msra.mxu0 %v153
    %192 = vmatmul.bf16.gmra.mxu0 %v99
    %v193 = vpop.f32.mrf.mxu0
    %v194 = vadd.f32 %v87, %v193
    %v195 = vpop.f32.mrf.mxu0
    %v196 = vadd.f32 %v88, %v195
    %197 = vmatmul.bf16.gmra.mxu0 %v101
    %v198 = vpop.f32.mrf.mxu0
    %v199 = vadd.f32 %v89, %v198
    %v200 = vpop.f32.mrf.mxu0
    %201 = vdwg.mxu0
    %202 = vmatpush.bf16.msra.mxu0 0
    %203 = vmatpush.bf16.msra.mxu0 0
    %204 = vmatpush.bf16.msra.mxu0 0
    %205 = vmatpush.bf16.msra.mxu0 0
    %206 = vmatpush.bf16.msra.mxu0 %v164
    %207 = vmatpush.bf16.msra.mxu0 %v163
    %208 = vmatpush.bf16.msra.mxu0 %v162
    %209 = vmatpush.bf16.msra.mxu0 %v161
    %210 = vmatmul.bf16.gmra.mxu0 %v179
    %v211 = vpop.f32.mrf.mxu0
    %v212 = vadd.f32 %v194, %v211
    %v213 = vpop.f32.mrf.mxu0
    %v214 = vadd.f32 %v196, %v213
    %215 = vmatmul.bf16.gmra.mxu0 %v182
    %v216 = vpop.f32.mrf.mxu0
    %v217 = vadd.f32 %v199, %v216
    %v218 = vpop.f32.mrf.mxu0
    %219 = vdwg.mxu0
    %v220 = vld [vmem:[%s3] sm:$0xf]
    %v221 = vld [vmem:[%s3 + $0x10] sm:$0xf]
    %v222 = vld [vmem:[%s3 + $0x20] sm:$0xf]
    %v223 = vld [vmem:[%s3 + $0x30] sm:$0xf]
    %v224 = vld [vmem:[%s3 + $0x4] sm:$0xf]
    %v225 = vld [vmem:[%s3 + $0x14] sm:$0xf]
    %v226 = vld [vmem:[%s3 + $0x24] sm:$0xf]
    %v227 = vld [vmem:[%s3 + $0x34] sm:$0xf]
    %v228 = vld [vmem:[%s3 + $0x8] sm:$0xf]
    %v229 = vld [vmem:[%s3 + $0x18] sm:$0xf]
    %v230 = vld [vmem:[%s3 + $0x28] sm:$0xf]
    %v231 = vld [vmem:[%s3 + $0x38] sm:$0xf]
    %v232 = vld [vmem:[%s3 + $0xc] sm:$0xf]
    %v233 = vld [vmem:[%s3 + $0x1c] sm:$0xf]
    %v234 = vld [vmem:[%s3 + $0x2c] sm:$0xf]
    %v235 = vld [vmem:[%s3 + $0x3c] sm:$0xf]
    %v236 = vld [vmem:[%s3 + $0x4c] sm:$0xf]
    %v237 = vld [vmem:[%s3 + $0x5c] sm:$0xf]
    %v238 = vld [vmem:[%s3 + $0x6c] sm:$0xf]
    %v239 = vld [vmem:[%s3 + $0x7c] sm:$0xf]
    %v240 = vld [vmem:[%s4] sm:$0x1]
    %v241 = vld [vmem:[%s4 + $0x1] sm:$0x1]
    %v242 = vld [vmem:[%s4 + $0x2] sm:$0x1]
    %v243 = vld [vmem:[%s4 + $0x3] sm:$0x1]
    %v244 = vld [vmem:[%s4 + $0x4] sm:$0x1]
    %v245 = vld [vmem:[%s4 + $0x5] sm:$0x1]
    %v246 = vld [vmem:[%s4 + $0x6] sm:$0x1]
    %v247 = vld [vmem:[%s4 + $0x7] sm:$0x1]
    %vm248 = vcmask 261120
    %v249 = vsel %vm248, %v212, 0.0
    %250 = vadd.xlane.f32.xlu0 %v249
    %v251 = vpop.xlane.xlu0 %250
    %v252 = vsel %vm248, %v214, 0.0
    %253 = vadd.xlane.f32.xlu0 %v252
    %v254 = vpop.xlane.xlu0 %253
    %v255 = vsel %vm248, %v217, 0.0
    %256 = vadd.xlane.f32.xlu0 %v255
    %v257 = vpop.xlane.xlu0 %256
    %v258 = vrcp.pop 32.0
    %v259 = vmul.f32 32.0, %v258
    %v260 = vsub.f32 1.0, %v259
    %v261 = vmul.f32 %v258, %v260
    %v262 = vadd.f32 %v258, %v261
    %vm263 = vweird.f32 %v258
    %v264 = vsel %vm263, %v258, %v262
    %v265 = vmul.f32 %v251, %v264
    %v266 = vmul.f32 %v254, %v264
    %v267 = vmul.f32 %v257, %v264
    %v268 = vsub.f32 %v212, %v265
    %v269 = vsub.f32 %v214, %v266
    %v270 = vsub.f32 %v217, %v267
    %v271 = vmul.f32 %v268, %v268
    %v272 = vmul.f32 %v269, %v269
    %v273 = vmul.f32 %v270, %v270
    %v274 = vsel %vm248, %v271, 0.0
    %275 = vadd.xlane.f32.xlu0 %v274
    %v276 = vpop.xlane.xlu0 %275
    %v277 = vsel %vm248, %v272, 0.0
    %278 = vadd.xlane.f32.xlu0 %v277
    %v279 = vpop.xlane.xlu0 %278
    %v280 = vsel %vm248, %v273, 0.0
    %281 = vadd.xlane.f32.xlu0 %v280
    %v282 = vpop.xlane.xlu0 %281
    %v283 = vmul.f32 %v276, %v264
    %v284 = vmul.f32 %v279, %v264
    %v285 = vmul.f32 %v282, %v264
    %v286 = vadd.f32 %v283, 1e-06
    %v287 = vadd.f32 %v284, 1e-06
    %v288 = vadd.f32 %v285, 1e-06
    %v289 = vrsqrt.pop %v286
    %v290 = vmul.f32 %v289, %v286
    %v291 = vmul.f32 %v290, %v289
    %v292 = vmul.f32 0.5, %v291
    %v293 = vsub.f32 1.5, %v292
    %v294 = vmul.f32 %v289, %v293
    %vm295 = vweird.f32 %v286
    %vm296 = vweird.f32 %v289
    %vm297 = vmor %vm295, %vm296
    %v298 = vsel %vm297, %v289, %v294
    %v299 = vrsqrt.pop %v287
    %v300 = vmul.f32 %v299, %v287
    %v301 = vmul.f32 %v300, %v299
    %v302 = vmul.f32 0.5, %v301
    %v303 = vsub.f32 1.5, %v302
    %v304 = vmul.f32 %v299, %v303
    %vm305 = vweird.f32 %v287
    %vm306 = vweird.f32 %v299
    %vm307 = vmor %vm305, %vm306
    %v308 = vsel %vm307, %v299, %v304
    %v309 = vrsqrt.pop %v288
    %v310 = vmul.f32 %v309, %v288
    %v311 = vmul.f32 %v310, %v309
    %v312 = vmul.f32 0.5, %v311
    %v313 = vsub.f32 1.5, %v312
    %v314 = vmul.f32 %v309, %v313
    %vm315 = vweird.f32 %v288
    %vm316 = vweird.f32 %v309
    %vm317 = vmor %vm315, %vm316
    %v318 = vsel %vm317, %v309, %v314
    %v319 = vmul.f32 %v268, %v298
    %v320 = vmul.f32 %v269, %v308
    %v321 = vmul.f32 %v270, %v318
    %v322 = vperm.slane %v240, 0
    %v323 = vmul.f32 %v319, %v322
    %v324 = vmul.f32 %v320, %v322
    %v325 = vmul.f32 %v321, %v322
    %v326 = vperm.slane %v241, 0
    %v327 = vadd.f32 %v323, %v326
    %v328 = vadd.f32 %v324, %v326
    %v329 = vadd.f32 %v325, %v326
    %v330 = vpack.c.bf16 %v328, %v327
    %v331 = vpack.c.bf16 %v329, %v329
    %v332 = vperm.slane %v246, 0
    %v337 = vunpack.c.l.b16 %v220
    %v338 = vunpack.c.l.b16 %v221
    %v339 = vunpack.c.l.b16 %v222
    %v340 = vunpack.c.l.b16 %v223
    %v341 = vpack.c.b16 %v338, %v337
    %v342 = vpack.c.b16 %v340, %v339
    %v346 = vsel %vm248, %v330, 0
    %v349 = vsel %vm248, %v331, 0
    %351 = vmatpush.bf16.msra.mxu0 0
    %352 = vmatpush.bf16.msra.mxu0 0
    %353 = vmatpush.bf16.msra.mxu0 0
    %354 = vmatpush.bf16.msra.mxu0 0
    %355 = vmatpush.bf16.msra.mxu0 0
    %356 = vmatpush.bf16.msra.mxu0 0
    %357 = vmatpush.bf16.msra.mxu0 %v342
    %358 = vmatpush.bf16.msra.mxu0 %v341
    %359 = vmatmul.bf16.gmra.mxu0 %v346
    %v360 = vpop.f32.mrf.mxu0
    %v361 = vadd.f32 %v332, %v360
    %v362 = vpop.f32.mrf.mxu0
    %v363 = vadd.f32 %v332, %v362
    %364 = vmatmul.bf16.gmra.mxu0 %v349
    %v365 = vpop.f32.mrf.mxu0
    %v366 = vadd.f32 %v332, %v365
    %v367 = vpop.f32.mrf.mxu0
    %368 = vdwg.mxu0
    %v369 = vpack.c.bf16 %v361, %v361
    %v370 = vpack.c.bf16 %v363, %v363
    %v371 = vpack.c.bf16 %v366, %v366
    %v375 = vunpack.c.l.b16 %v369
    %v376 = vunpack.c.l.b16 %v370
    %v377 = vunpack.c.l.b16 %v371
    %v378 = vpack.c.b16 %v376, %v375
    %v379 = vpack.c.b16 %v377, %v377
    %380 = vrot.lane.b32.xlu0 %v378, 96
    %v381 = vpop.permute.xlu0 %380
    %382 = vrot.lane.b32.xlu0 %v379, 96
    %v383 = vpop.permute.xlu0 %382
    %vm384 = vcmask 64512
    %v386 = vsel %vm384, %v378, 0
    %v389 = vsel %vm384, %v379, 0
    %v392 = vsel %vm384, %v381, 0
    %v395 = vsel %vm384, %v383, 0
    %397 = vmatpush.bf16.xpose.msra.mxu0 0
    %398 = vmatpush.bf16.xpose.msra.mxu0 0
    %399 = vmatpush.bf16.xpose.msra.mxu0 0
    %400 = vmatpush.bf16.xpose.msra.mxu0 0
    %401 = vmatpush.bf16.xpose.msra.mxu0 0
    %402 = vmatpush.bf16.xpose.msra.mxu0 0
    %403 = vmatpush.bf16.xpose.msra.mxu0 %v395
    %404 = vmatpush.bf16.xpose.msra.mxu0 %v392
    %405 = vmatmul.bf16.gmra.mxu0 %v386
    %v406 = vpop.f32.mrf.mxu0
    %v407 = vadd.f32 0.0, %v406
    %v408 = vpop.f32.mrf.mxu0
    %v409 = vadd.f32 0.0, %v408
    %410 = vmatmul.bf16.gmra.mxu0 %v389
    %v411 = vpop.f32.mrf.mxu0
    %v412 = vadd.f32 0.0, %v411
    %v413 = vpop.f32.mrf.mxu0
    %414 = vdwg.mxu0
    %v415 = vmul.f32 %v407, 0.35355338
    %v416 = vmul.f32 %v409, 0.35355338
    %v417 = vmul.f32 %v412, 0.35355338
    %v418 = vadd.f32 %v415, %v57
    %v419 = vadd.f32 %v416, %v58
    %v420 = vadd.f32 %v417, %v59
    %vm421 = vcmask 195584
    %v422 = vsel %vm421, %v418, -inf
    %423 = vmax.xlane.f32.xlu0 %v422
    %v424 = vpop.xlane.xlu0 %423
    %v425 = vsel %vm421, %v419, -inf
    %426 = vmax.xlane.f32.xlu0 %v425
    %v427 = vpop.xlane.xlu0 %426
    %v428 = vsel %vm421, %v420, -inf
    %429 = vmax.xlane.f32.xlu0 %v428
    %v430 = vpop.xlane.xlu0 %429
    %v431 = vsub.f32 %v418, %v424
    %v432 = vsub.f32 %v419, %v427
    %v433 = vsub.f32 %v420, %v430
    %v434 = vmul.f32 %v431, 1.442695
    %v435 = vpow.pop %v434
    %v436 = vmul.f32 %v432, 1.442695
    %v437 = vpow.pop %v436
    %v438 = vmul.f32 %v433, 1.442695
    %v439 = vpow.pop %v438
    %v440 = vsel %vm421, %v435, 0.0
    %441 = vadd.xlane.f32.xlu0 %v440
    %v442 = vpop.xlane.xlu0 %441
    %v443 = vsel %vm421, %v437, 0.0
    %444 = vadd.xlane.f32.xlu0 %v443
    %v445 = vpop.xlane.xlu0 %444
    %v446 = vsel %vm421, %v439, 0.0
    %447 = vadd.xlane.f32.xlu0 %v446
    %v448 = vpop.xlane.xlu0 %447
    %v449 = vrcp.pop %v442
    %v450 = vrcp.pop %v445
    %v451 = vrcp.pop %v448
    %v452 = vmul.f32 %v435, %v449
    %v453 = vmul.f32 %v437, %v450
    %v454 = vmul.f32 %v439, %v451
    %v455 = vpack.c.bf16 %v453, %v452
    %v456 = vpack.c.bf16 %v454, %v454
    %457 = vrot.lane.b32.xlu0 %v378, 64
    %v458 = vpop.permute.xlu0 %457
    %459 = vrot.lane.b32.xlu0 %v379, 64
    %v460 = vpop.permute.xlu0 %459
    %v463 = vsel %vm421, %v455, 0
    %v466 = vsel %vm421, %v456, 0
    %vm468 = vcmask 1043456
    %v470 = vsel %vm468, %v460, 0
    %472 = vmatpush.bf16.msra.mxu0 0
    %473 = vmatpush.bf16.msra.mxu0 0
    %474 = vmatpush.bf16.msra.mxu0 0
    %475 = vmatpush.bf16.msra.mxu0 0
    %476 = vmatpush.bf16.msra.mxu0 0
    %477 = vmatpush.bf16.msra.mxu0 0
    %478 = vmatpush.bf16.msra.mxu0 %v470
    %479 = vmatpush.bf16.msra.mxu0 %v458
    %480 = vmatmul.bf16.gmra.mxu0 %v463
    %v481 = vpop.f32.mrf.mxu0
    %v482 = vadd.f32 0.0, %v481
    %v483 = vpop.f32.mrf.mxu0
    %v484 = vadd.f32 0.0, %v483
    %485 = vmatmul.bf16.gmra.mxu0 %v466
    %v486 = vpop.f32.mrf.mxu0
    %v487 = vadd.f32 0.0, %v486
    %v488 = vpop.f32.mrf.mxu0
    %489 = vdwg.mxu0
    %490 = vrot.lane.b32.xlu0 %v378, 120
    %v491 = vpop.permute.xlu0 %490
    %492 = vrot.lane.b32.xlu0 %v379, 120
    %v493 = vpop.permute.xlu0 %492
    %494 = vrot.lane.b32.xlu0 %v378, 88
    %v495 = vpop.permute.xlu0 %494
    %496 = vrot.lane.b32.xlu0 %v379, 88
    %v497 = vpop.permute.xlu0 %496
    %v499 = vsel %vm384, %v491, 0
    %v502 = vsel %vm384, %v493, 0
    %v505 = vsel %vm384, %v495, 0
    %v508 = vsel %vm384, %v497, 0
    %510 = vmatpush.bf16.xpose.msra.mxu0 0
    %511 = vmatpush.bf16.xpose.msra.mxu0 0
    %512 = vmatpush.bf16.xpose.msra.mxu0 0
    %513 = vmatpush.bf16.xpose.msra.mxu0 0
    %514 = vmatpush.bf16.xpose.msra.mxu0 0
    %515 = vmatpush.bf16.xpose.msra.mxu0 0
    %516 = vmatpush.bf16.xpose.msra.mxu0 %v508
    %517 = vmatpush.bf16.xpose.msra.mxu0 %v505
    %518 = vmatmul.bf16.gmra.mxu0 %v499
    %v519 = vpop.f32.mrf.mxu0
    %v520 = vadd.f32 0.0, %v519
    %v521 = vpop.f32.mrf.mxu0
    %v522 = vadd.f32 0.0, %v521
    %523 = vmatmul.bf16.gmra.mxu0 %v502
    %v524 = vpop.f32.mrf.mxu0
    %v525 = vadd.f32 0.0, %v524
    %v526 = vpop.f32.mrf.mxu0
    %527 = vdwg.mxu0
    %v528 = vmul.f32 %v520, 0.35355338
    %v529 = vmul.f32 %v522, 0.35355338
    %v530 = vmul.f32 %v525, 0.35355338
    %v531 = vadd.f32 %v528, %v57
    %v532 = vadd.f32 %v529, %v58
    %v533 = vadd.f32 %v530, %v59
    %v534 = vsel %vm421, %v531, -inf
    %535 = vmax.xlane.f32.xlu0 %v534
    %v536 = vpop.xlane.xlu0 %535
    %v537 = vsel %vm421, %v532, -inf
    %538 = vmax.xlane.f32.xlu0 %v537
    %v539 = vpop.xlane.xlu0 %538
    %v540 = vsel %vm421, %v533, -inf
    %541 = vmax.xlane.f32.xlu0 %v540
    %v542 = vpop.xlane.xlu0 %541
    %v543 = vsub.f32 %v531, %v536
    %v544 = vsub.f32 %v532, %v539
    %v545 = vsub.f32 %v533, %v542
    %v546 = vmul.f32 %v543, 1.442695
    %v547 = vpow.pop %v546
    %v548 = vmul.f32 %v544, 1.442695
    %v549 = vpow.pop %v548
    %v550 = vmul.f32 %v545, 1.442695
    %v551 = vpow.pop %v550
    %v552 = vsel %vm421, %v547, 0.0
    %553 = vadd.xlane.f32.xlu0 %v552
    %v554 = vpop.xlane.xlu0 %553
    %v555 = vsel %vm421, %v549, 0.0
    %556 = vadd.xlane.f32.xlu0 %v555
    %v557 = vpop.xlane.xlu0 %556
    %v558 = vsel %vm421, %v551, 0.0
    %559 = vadd.xlane.f32.xlu0 %v558
    %v560 = vpop.xlane.xlu0 %559
    %v561 = vrcp.pop %v554
    %v562 = vrcp.pop %v557
    %v563 = vrcp.pop %v560
    %v564 = vmul.f32 %v547, %v561
    %v565 = vmul.f32 %v549, %v562
    %v566 = vmul.f32 %v551, %v563
    %v567 = vpack.c.bf16 %v565, %v564
    %v568 = vpack.c.bf16 %v566, %v566
    %569 = vrot.lane.b32.xlu0 %v378, 56
    %v570 = vpop.permute.xlu0 %569
    %571 = vrot.lane.b32.xlu0 %v379, 56
    %v572 = vpop.permute.xlu0 %571
    %v575 = vsel %vm421, %v567, 0
    %v578 = vsel %vm421, %v568, 0
    %v581 = vsel %vm468, %v572, 0
    %583 = vmatpush.bf16.msra.mxu0 0
    %584 = vmatpush.bf16.msra.mxu0 0
    %585 = vmatpush.bf16.msra.mxu0 0
    %586 = vmatpush.bf16.msra.mxu0 0
    %587 = vmatpush.bf16.msra.mxu0 0
    %588 = vmatpush.bf16.msra.mxu0 0
    %589 = vmatpush.bf16.msra.mxu0 %v581
    %590 = vmatpush.bf16.msra.mxu0 %v570
    %591 = vmatmul.bf16.gmra.mxu0 %v575
    %v592 = vpop.f32.mrf.mxu0
    %v593 = vadd.f32 0.0, %v592
    %v594 = vpop.f32.mrf.mxu0
    %v595 = vadd.f32 0.0, %v594
    %596 = vmatmul.bf16.gmra.mxu0 %v578
    %v597 = vpop.f32.mrf.mxu0
    %v598 = vadd.f32 0.0, %v597
    %v599 = vpop.f32.mrf.mxu0
    %600 = vdwg.mxu0
    %601 = vrot.lane.b32.xlu0 %v378, 112
    %v602 = vpop.permute.xlu0 %601
    %603 = vrot.lane.b32.xlu0 %v379, 112
    %v604 = vpop.permute.xlu0 %603
    %605 = vrot.lane.b32.xlu0 %v378, 80
    %v606 = vpop.permute.xlu0 %605
    %607 = vrot.lane.b32.xlu0 %v379, 80
    %v608 = vpop.permute.xlu0 %607
    %v610 = vsel %vm384, %v602, 0
    %v613 = vsel %vm384, %v604, 0
    %v616 = vsel %vm384, %v606, 0
    %v619 = vsel %vm384, %v608, 0
    %621 = vmatpush.bf16.xpose.msra.mxu0 0
    %622 = vmatpush.bf16.xpose.msra.mxu0 0
    %623 = vmatpush.bf16.xpose.msra.mxu0 0
    %624 = vmatpush.bf16.xpose.msra.mxu0 0
    %625 = vmatpush.bf16.xpose.msra.mxu0 0
    %626 = vmatpush.bf16.xpose.msra.mxu0 0
    %627 = vmatpush.bf16.xpose.msra.mxu0 %v619
    %628 = vmatpush.bf16.xpose.msra.mxu0 %v616
    %629 = vmatmul.bf16.gmra.mxu0 %v610
    %v630 = vpop.f32.mrf.mxu0
    %v631 = vadd.f32 0.0, %v630
    %v632 = vpop.f32.mrf.mxu0
    %v633 = vadd.f32 0.0, %v632
    %634 = vmatmul.bf16.gmra.mxu0 %v613
    %v635 = vpop.f32.mrf.mxu0
    %v636 = vadd.f32 0.0, %v635
    %v637 = vpop.f32.mrf.mxu0
    %638 = vdwg.mxu0
    %v639 = vmul.f32 %v631, 0.35355338
    %v640 = vmul.f32 %v633, 0.35355338
    %v641 = vmul.f32 %v636, 0.35355338
    %v642 = vadd.f32 %v639, %v57
    %v643 = vadd.f32 %v640, %v58
    %v644 = vadd.f32 %v641, %v59
    %v645 = vsel %vm421, %v642, -inf
    %646 = vmax.xlane.f32.xlu0 %v645
    %v647 = vpop.xlane.xlu0 %646
    %v648 = vsel %vm421, %v643, -inf
    %649 = vmax.xlane.f32.xlu0 %v648
    %v650 = vpop.xlane.xlu0 %649
    %v651 = vsel %vm421, %v644, -inf
    %652 = vmax.xlane.f32.xlu0 %v651
    %v653 = vpop.xlane.xlu0 %652
    %v654 = vsub.f32 %v642, %v647
    %v655 = vsub.f32 %v643, %v650
    %v656 = vsub.f32 %v644, %v653
    %v657 = vmul.f32 %v654, 1.442695
    %v658 = vpow.pop %v657
    %v659 = vmul.f32 %v655, 1.442695
    %v660 = vpow.pop %v659
    %v661 = vmul.f32 %v656, 1.442695
    %v662 = vpow.pop %v661
    %v663 = vsel %vm421, %v658, 0.0
    %664 = vadd.xlane.f32.xlu0 %v663
    %v665 = vpop.xlane.xlu0 %664
    %v666 = vsel %vm421, %v660, 0.0
    %667 = vadd.xlane.f32.xlu0 %v666
    %v668 = vpop.xlane.xlu0 %667
    %v669 = vsel %vm421, %v662, 0.0
    %670 = vadd.xlane.f32.xlu0 %v669
    %v671 = vpop.xlane.xlu0 %670
    %v672 = vrcp.pop %v665
    %v673 = vrcp.pop %v668
    %v674 = vrcp.pop %v671
    %v675 = vmul.f32 %v658, %v672
    %v676 = vmul.f32 %v660, %v673
    %v677 = vmul.f32 %v662, %v674
    %v678 = vpack.c.bf16 %v676, %v675
    %v679 = vpack.c.bf16 %v677, %v677
    %680 = vrot.lane.b32.xlu0 %v378, 48
    %v681 = vpop.permute.xlu0 %680
    %682 = vrot.lane.b32.xlu0 %v379, 48
    %v683 = vpop.permute.xlu0 %682
    %v686 = vsel %vm421, %v678, 0
    %v689 = vsel %vm421, %v679, 0
    %v692 = vsel %vm468, %v683, 0
    %694 = vmatpush.bf16.msra.mxu0 0
    %695 = vmatpush.bf16.msra.mxu0 0
    %696 = vmatpush.bf16.msra.mxu0 0
    %697 = vmatpush.bf16.msra.mxu0 0
    %698 = vmatpush.bf16.msra.mxu0 0
    %699 = vmatpush.bf16.msra.mxu0 0
    %700 = vmatpush.bf16.msra.mxu0 %v692
    %701 = vmatpush.bf16.msra.mxu0 %v681
    %702 = vmatmul.bf16.gmra.mxu0 %v686
    %v703 = vpop.f32.mrf.mxu0
    %v704 = vadd.f32 0.0, %v703
    %v705 = vpop.f32.mrf.mxu0
    %v706 = vadd.f32 0.0, %v705
    %707 = vmatmul.bf16.gmra.mxu0 %v689
    %v708 = vpop.f32.mrf.mxu0
    %v709 = vadd.f32 0.0, %v708
    %v710 = vpop.f32.mrf.mxu0
    %711 = vdwg.mxu0
    %712 = vrot.lane.b32.xlu0 %v378, 104
    %v713 = vpop.permute.xlu0 %712
    %714 = vrot.lane.b32.xlu0 %v379, 104
    %v715 = vpop.permute.xlu0 %714
    %716 = vrot.lane.b32.xlu0 %v378, 72
    %v717 = vpop.permute.xlu0 %716
    %718 = vrot.lane.b32.xlu0 %v379, 72
    %v719 = vpop.permute.xlu0 %718
    %v721 = vsel %vm384, %v713, 0
    %v724 = vsel %vm384, %v715, 0
    %v727 = vsel %vm384, %v717, 0
    %v730 = vsel %vm384, %v719, 0
    %732 = vmatpush.bf16.xpose.msra.mxu0 0
    %733 = vmatpush.bf16.xpose.msra.mxu0 0
    %734 = vmatpush.bf16.xpose.msra.mxu0 0
    %735 = vmatpush.bf16.xpose.msra.mxu0 0
    %736 = vmatpush.bf16.xpose.msra.mxu0 0
    %737 = vmatpush.bf16.xpose.msra.mxu0 0
    %738 = vmatpush.bf16.xpose.msra.mxu0 %v730
    %739 = vmatpush.bf16.xpose.msra.mxu0 %v727
    %740 = vmatmul.bf16.gmra.mxu0 %v721
    %v741 = vpop.f32.mrf.mxu0
    %v742 = vadd.f32 0.0, %v741
    %v743 = vpop.f32.mrf.mxu0
    %v744 = vadd.f32 0.0, %v743
    %745 = vmatmul.bf16.gmra.mxu0 %v724
    %v746 = vpop.f32.mrf.mxu0
    %v747 = vadd.f32 0.0, %v746
    %v748 = vpop.f32.mrf.mxu0
    %749 = vdwg.mxu0
    %v750 = vmul.f32 %v742, 0.35355338
    %v751 = vmul.f32 %v744, 0.35355338
    %v752 = vmul.f32 %v747, 0.35355338
    %v753 = vadd.f32 %v750, %v57
    %v754 = vadd.f32 %v751, %v58
    %v755 = vadd.f32 %v752, %v59
    %v756 = vsel %vm421, %v753, -inf
    %757 = vmax.xlane.f32.xlu0 %v756
    %v758 = vpop.xlane.xlu0 %757
    %v759 = vsel %vm421, %v754, -inf
    %760 = vmax.xlane.f32.xlu0 %v759
    %v761 = vpop.xlane.xlu0 %760
    %v762 = vsel %vm421, %v755, -inf
    %763 = vmax.xlane.f32.xlu0 %v762
    %v764 = vpop.xlane.xlu0 %763
    %v765 = vsub.f32 %v753, %v758
    %v766 = vsub.f32 %v754, %v761
    %v767 = vsub.f32 %v755, %v764
    %v768 = vmul.f32 %v765, 1.442695
    %v769 = vpow.pop %v768
    %v770 = vmul.f32 %v766, 1.442695
    %v771 = vpow.pop %v770
    %v772 = vmul.f32 %v767, 1.442695
    %v773 = vpow.pop %v772
    %v774 = vsel %vm421, %v769, 0.0
    %775 = vadd.xlane.f32.xlu0 %v774
    %v776 = vpop.xlane.xlu0 %775
    %v777 = vsel %vm421, %v771, 0.0
    %778 = vadd.xlane.f32.xlu0 %v777
    %v779 = vpop.xlane.xlu0 %778
    %v780 = vsel %vm421, %v773, 0.0
    %781 = vadd.xlane.f32.xlu0 %v780
    %v782 = vpop.xlane.xlu0 %781
    %v783 = vrcp.pop %v776
    %v784 = vrcp.pop %v779
    %v785 = vrcp.pop %v782
    %v786 = vmul.f32 %v769, %v783
    %v787 = vmul.f32 %v771, %v784
    %v788 = vmul.f32 %v773, %v785
    %v789 = vpack.c.bf16 %v787, %v786
    %v790 = vpack.c.bf16 %v788, %v788
    %791 = vrot.lane.b32.xlu0 %v378, 40
    %v792 = vpop.permute.xlu0 %791
    %793 = vrot.lane.b32.xlu0 %v379, 40
    %v794 = vpop.permute.xlu0 %793
    %v797 = vsel %vm421, %v789, 0
    %v800 = vsel %vm421, %v790, 0
    %v803 = vsel %vm468, %v794, 0
    %805 = vmatpush.bf16.msra.mxu0 0
    %806 = vmatpush.bf16.msra.mxu0 0
    %807 = vmatpush.bf16.msra.mxu0 0
    %808 = vmatpush.bf16.msra.mxu0 0
    %809 = vmatpush.bf16.msra.mxu0 0
    %810 = vmatpush.bf16.msra.mxu0 0
    %811 = vmatpush.bf16.msra.mxu0 %v803
    %812 = vmatpush.bf16.msra.mxu0 %v792
    %813 = vmatmul.bf16.gmra.mxu0 %v797
    %v814 = vpop.f32.mrf.mxu0
    %v815 = vadd.f32 0.0, %v814
    %v816 = vpop.f32.mrf.mxu0
    %v817 = vadd.f32 0.0, %v816
    %818 = vmatmul.bf16.gmra.mxu0 %v800
    %v819 = vpop.f32.mrf.mxu0
    %v820 = vadd.f32 0.0, %v819
    %v821 = vpop.f32.mrf.mxu0
    %822 = vdwg.mxu0
    %826 = vrot.lane.b32.xlu0 %v593, 8
    %v827 = vpop.permute.xlu0 %826
    %828 = vrot.lane.b32.xlu0 %v595, 8
    %v829 = vpop.permute.xlu0 %828
    %830 = vrot.lane.b32.xlu0 %v598, 8
    %v831 = vpop.permute.xlu0 %830
    %838 = vrot.lane.b32.xlu0 %v704, 16
    %v839 = vpop.permute.xlu0 %838
    %840 = vrot.lane.b32.xlu0 %v706, 16
    %v841 = vpop.permute.xlu0 %840
    %842 = vrot.lane.b32.xlu0 %v709, 16
    %v843 = vpop.permute.xlu0 %842
    %850 = vrot.lane.b32.xlu0 %v815, 24
    %v851 = vpop.permute.xlu0 %850
    %852 = vrot.lane.b32.xlu0 %v817, 24
    %v853 = vpop.permute.xlu0 %852
    %854 = vrot.lane.b32.xlu0 %v820, 24
    %v855 = vpop.permute.xlu0 %854
    %v859 = vsel %vm384, %v482, %v827
    %v860 = vsel %vm384, %v484, %v829
    %v861 = vsel %vm384, %v487, %v831
    %vm862 = vcmask 130048
    %v863 = vsel %vm862, %v859, %v839
    %v864 = vsel %vm862, %v860, %v841
    %v865 = vsel %vm862, %v861, %v843
    %v866 = vsel %vm421, %v863, %v851
    %v867 = vsel %vm421, %v864, %v853
    %v868 = vsel %vm421, %v865, %v855
    %v869 = vpack.c.bf16 %v867, %v866
    %v870 = vpack.c.bf16 %v868, %v868
    %v871 = vperm.slane %v244, 0
    %v876 = vunpack.c.l.b16 %v224
    %v877 = vunpack.c.l.b16 %v225
    %v878 = vunpack.c.l.b16 %v226
    %v879 = vunpack.c.l.b16 %v227
    %v880 = vpack.c.b16 %v877, %v876
    %v881 = vpack.c.b16 %v879, %v878
    %v885 = vsel %vm248, %v869, 0
    %v888 = vsel %vm248, %v870, 0
    %890 = vmatpush.bf16.msra.mxu0 0
    %891 = vmatpush.bf16.msra.mxu0 0
    %892 = vmatpush.bf16.msra.mxu0 0
    %893 = vmatpush.bf16.msra.mxu0 0
    %894 = vmatpush.bf16.msra.mxu0 0
    %895 = vmatpush.bf16.msra.mxu0 0
    %896 = vmatpush.bf16.msra.mxu0 %v881
    %897 = vmatpush.bf16.msra.mxu0 %v880
    %898 = vmatmul.bf16.gmra.mxu0 %v885
    %v899 = vpop.f32.mrf.mxu0
    %v900 = vadd.f32 %v871, %v899
    %v901 = vpop.f32.mrf.mxu0
    %v902 = vadd.f32 %v871, %v901
    %903 = vmatmul.bf16.gmra.mxu0 %v888
    %v904 = vpop.f32.mrf.mxu0
    %v905 = vadd.f32 %v871, %v904
    %v906 = vpop.f32.mrf.mxu0
    %907 = vdwg.mxu0
    %v908 = vadd.f32 %v212, %v900
    %v909 = vadd.f32 %v214, %v902
    %v910 = vadd.f32 %v217, %v905
    %v911 = vsel %vm248, %v908, 0.0
    %912 = vadd.xlane.f32.xlu0 %v911
    %v913 = vpop.xlane.xlu0 %912
    %v914 = vsel %vm248, %v909, 0.0
    %915 = vadd.xlane.f32.xlu0 %v914
    %v916 = vpop.xlane.xlu0 %915
    %v917 = vsel %vm248, %v910, 0.0
    %918 = vadd.xlane.f32.xlu0 %v917
    %v919 = vpop.xlane.xlu0 %918
    %v920 = vmul.f32 %v913, %v264
    %v921 = vmul.f32 %v916, %v264
    %v922 = vmul.f32 %v919, %v264
    %v923 = vsub.f32 %v908, %v920
    %v924 = vsub.f32 %v909, %v921
    %v925 = vsub.f32 %v910, %v922
    %v926 = vmul.f32 %v923, %v923
    %v927 = vmul.f32 %v924, %v924
    %v928 = vmul.f32 %v925, %v925
    %v929 = vsel %vm248, %v926, 0.0
    %930 = vadd.xlane.f32.xlu0 %v929
    %v931 = vpop.xlane.xlu0 %930
    %v932 = vsel %vm248, %v927, 0.0
    %933 = vadd.xlane.f32.xlu0 %v932
    %v934 = vpop.xlane.xlu0 %933
    %v935 = vsel %vm248, %v928, 0.0
    %936 = vadd.xlane.f32.xlu0 %v935
    %v937 = vpop.xlane.xlu0 %936
    %v938 = vmul.f32 %v931, %v264
    %v939 = vmul.f32 %v934, %v264
    %v940 = vmul.f32 %v937, %v264
    %v941 = vadd.f32 %v938, 1e-06
    %v942 = vadd.f32 %v939, 1e-06
    %v943 = vadd.f32 %v940, 1e-06
    %v944 = vrsqrt.pop %v941
    %v945 = vmul.f32 %v944, %v941
    %v946 = vmul.f32 %v945, %v944
    %v947 = vmul.f32 0.5, %v946
    %v948 = vsub.f32 1.5, %v947
    %v949 = vmul.f32 %v944, %v948
    %vm950 = vweird.f32 %v941
    %vm951 = vweird.f32 %v944
    %vm952 = vmor %vm950, %vm951
    %v953 = vsel %vm952, %v944, %v949
    %v954 = vrsqrt.pop %v942
    %v955 = vmul.f32 %v954, %v942
    %v956 = vmul.f32 %v955, %v954
    %v957 = vmul.f32 0.5, %v956
    %v958 = vsub.f32 1.5, %v957
    %v959 = vmul.f32 %v954, %v958
    %vm960 = vweird.f32 %v942
    %vm961 = vweird.f32 %v954
    %vm962 = vmor %vm960, %vm961
    %v963 = vsel %vm962, %v954, %v959
    %v964 = vrsqrt.pop %v943
    %v965 = vmul.f32 %v964, %v943
    %v966 = vmul.f32 %v965, %v964
    %v967 = vmul.f32 0.5, %v966
    %v968 = vsub.f32 1.5, %v967
    %v969 = vmul.f32 %v964, %v968
    %vm970 = vweird.f32 %v943
    %vm971 = vweird.f32 %v964
    %vm972 = vmor %vm970, %vm971
    %v973 = vsel %vm972, %v964, %v969
    %v974 = vmul.f32 %v923, %v953
    %v975 = vmul.f32 %v924, %v963
    %v976 = vmul.f32 %v925, %v973
    %v977 = vperm.slane %v242, 0
    %v978 = vmul.f32 %v974, %v977
    %v979 = vmul.f32 %v975, %v977
    %v980 = vmul.f32 %v976, %v977
    %v981 = vperm.slane %v243, 0
    %v982 = vadd.f32 %v978, %v981
    %v983 = vadd.f32 %v979, %v981
    %v984 = vadd.f32 %v980, %v981
    %v985 = vpack.c.bf16 %v983, %v982
    %v986 = vpack.c.bf16 %v984, %v984
    %v987 = vperm.slane %v247, 0
    %v992 = vunpack.c.l.b16 %v228
    %v993 = vunpack.c.l.b16 %v229
    %v994 = vunpack.c.l.b16 %v230
    %v995 = vunpack.c.l.b16 %v231
    %v996 = vpack.c.b16 %v993, %v992
    %v997 = vpack.c.b16 %v995, %v994
    %v1001 = vsel %vm248, %v985, 0
    %v1004 = vsel %vm248, %v986, 0
    %1006 = vmatpush.bf16.msra.mxu0 0
    %1007 = vmatpush.bf16.msra.mxu0 0
    %1008 = vmatpush.bf16.msra.mxu0 0
    %1009 = vmatpush.bf16.msra.mxu0 0
    %1010 = vmatpush.bf16.msra.mxu0 0
    %1011 = vmatpush.bf16.msra.mxu0 0
    %1012 = vmatpush.bf16.msra.mxu0 %v997
    %1013 = vmatpush.bf16.msra.mxu0 %v996
    %1014 = vmatmul.bf16.gmra.mxu0 %v1001
    %v1015 = vpop.f32.mrf.mxu0
    %v1016 = vadd.f32 %v987, %v1015
    %v1017 = vpop.f32.mrf.mxu0
    %v1018 = vadd.f32 %v987, %v1017
    %1019 = vmatmul.bf16.gmra.mxu0 %v1004
    %v1020 = vpop.f32.mrf.mxu0
    %v1021 = vadd.f32 %v987, %v1020
    %v1022 = vpop.f32.mrf.mxu0
    %1023 = vdwg.mxu0
    %v1024 = vmul.f32 %v1016, %v1016
    %v1025 = vmul.f32 %v1018, %v1018
    %v1026 = vmul.f32 %v1021, %v1021
    %v1027 = vmul.f32 %v1016, %v1024
    %v1028 = vmul.f32 %v1018, %v1025
    %v1029 = vmul.f32 %v1021, %v1026
    %v1030 = vmul.f32 %v1027, 0.044715
    %v1031 = vmul.f32 %v1028, 0.044715
    %v1032 = vmul.f32 %v1029, 0.044715
    %v1033 = vadd.f32 %v1016, %v1030
    %v1034 = vadd.f32 %v1018, %v1031
    %v1035 = vadd.f32 %v1021, %v1032
    %v1036 = vmul.f32 %v1033, 0.7978846
    %v1037 = vmul.f32 %v1034, 0.7978846
    %v1038 = vmul.f32 %v1035, 0.7978846
    %v1039 = vtanh.pop %v1036
    %v1040 = vtanh.pop %v1037
    %v1041 = vtanh.pop %v1038
    %v1042 = vadd.f32 %v1039, 1.0
    %v1043 = vadd.f32 %v1040, 1.0
    %v1044 = vadd.f32 %v1041, 1.0
    %v1045 = vmul.f32 %v1042, 0.5
    %v1046 = vmul.f32 %v1043, 0.5
    %v1047 = vmul.f32 %v1044, 0.5
    %v1048 = vmul.f32 %v1016, %v1045
    %v1049 = vmul.f32 %v1018, %v1046
    %v1050 = vmul.f32 %v1021, %v1047
    %v1051 = vpack.c.bf16 %v1049, %v1048
    %v1052 = vpack.c.bf16 %v1050, %v1050
    %v1061 = vunpack.c.l.b16 %v232
    %v1062 = vunpack.c.l.b16 %v233
    %v1063 = vunpack.c.l.b16 %v234
    %v1064 = vunpack.c.l.b16 %v235
    %v1065 = vunpack.c.l.b16 %v236
    %v1066 = vunpack.c.l.b16 %v237
    %v1067 = vunpack.c.l.b16 %v238
    %v1068 = vunpack.c.l.b16 %v239
    %v1069 = vpack.c.b16 %v1062, %v1061
    %v1070 = vpack.c.b16 %v1064, %v1063
    %v1071 = vpack.c.b16 %v1066, %v1065
    %v1072 = vpack.c.b16 %v1068, %v1067
    %v1078 = vsel %vm177, %v1051, 0
    %v1081 = vsel %vm177, %v1052, 0
    %1083 = vmatpush.bf16.msra.mxu0 0
    %1084 = vmatpush.bf16.msra.mxu0 0
    %1085 = vmatpush.bf16.msra.mxu0 0
    %1086 = vmatpush.bf16.msra.mxu0 0
    %1087 = vmatpush.bf16.msra.mxu0 %v1072
    %1088 = vmatpush.bf16.msra.mxu0 %v1071
    %1089 = vmatpush.bf16.msra.mxu0 %v1070
    %1090 = vmatpush.bf16.msra.mxu0 %v1069
    %1091 = vmatmul.bf16.gmra.mxu0 %v1078
    %v1092 = vpop.f32.mrf.mxu0
    %v1093 = vadd.f32 0.0, %v1092
    %v1094 = vpop.f32.mrf.mxu0
    %v1095 = vadd.f32 0.0, %v1094
    %1096 = vmatmul.bf16.gmra.mxu0 %v1081
    %v1097 = vpop.f32.mrf.mxu0
    %v1098 = vadd.f32 0.0, %v1097
    %v1099 = vpop.f32.mrf.mxu0
    %1100 = vdwg.mxu0
    %v1101 = vadd.f32 %v908, %v1093
    %v1102 = vadd.f32 %v909, %v1095
    %v1103 = vadd.f32 %v910, %v1098
    %v1104 = vperm.slane %v245, 0
    %v1105 = vadd.f32 %v1101, %v1104
    %v1106 = vadd.f32 %v1102, %v1104
    %v1107 = vadd.f32 %v1103, %v1104
    %s1108 = scalar_lea.vmem %s3, 128
    %v1109 = vld [vmem:[%s1108] sm:$0xf]
    %v1110 = vld [vmem:[%s1108 + $0x10] sm:$0xf]
    %v1111 = vld [vmem:[%s1108 + $0x20] sm:$0xf]
    %v1112 = vld [vmem:[%s1108 + $0x30] sm:$0xf]
    %v1113 = vld [vmem:[%s1108 + $0x4] sm:$0xf]
    %v1114 = vld [vmem:[%s1108 + $0x14] sm:$0xf]
    %v1115 = vld [vmem:[%s1108 + $0x24] sm:$0xf]
    %v1116 = vld [vmem:[%s1108 + $0x34] sm:$0xf]
    %v1117 = vld [vmem:[%s1108 + $0x8] sm:$0xf]
    %v1118 = vld [vmem:[%s1108 + $0x18] sm:$0xf]
    %v1119 = vld [vmem:[%s1108 + $0x28] sm:$0xf]
    %v1120 = vld [vmem:[%s1108 + $0x38] sm:$0xf]
    %v1121 = vld [vmem:[%s1108 + $0xc] sm:$0xf]
    %v1122 = vld [vmem:[%s1108 + $0x1c] sm:$0xf]
    %v1123 = vld [vmem:[%s1108 + $0x2c] sm:$0xf]
    %v1124 = vld [vmem:[%s1108 + $0x3c] sm:$0xf]
    %v1125 = vld [vmem:[%s1108 + $0x4c] sm:$0xf]
    %v1126 = vld [vmem:[%s1108 + $0x5c] sm:$0xf]
    %v1127 = vld [vmem:[%s1108 + $0x6c] sm:$0xf]
    %v1128 = vld [vmem:[%s1108 + $0x7c] sm:$0xf]
    %s1129 = scalar_lea.vmem %s4, 8
    %v1130 = vld [vmem:[%s1129] sm:$0x1]
    %v1131 = vld [vmem:[%s1129 + $0x1] sm:$0x1]
    %v1132 = vld [vmem:[%s1129 + $0x2] sm:$0x1]
    %v1133 = vld [vmem:[%s1129 + $0x3] sm:$0x1]
    %v1134 = vld [vmem:[%s1129 + $0x4] sm:$0x1]
    %v1135 = vld [vmem:[%s1129 + $0x5] sm:$0x1]
    %v1136 = vld [vmem:[%s1129 + $0x6] sm:$0x1]
    %v1137 = vld [vmem:[%s1129 + $0x7] sm:$0x1]
    %v1138 = vsel %vm248, %v1105, 0.0
    %1139 = vadd.xlane.f32.xlu0 %v1138
    %v1140 = vpop.xlane.xlu0 %1139
    %v1141 = vsel %vm248, %v1106, 0.0
    %1142 = vadd.xlane.f32.xlu0 %v1141
    %v1143 = vpop.xlane.xlu0 %1142
    %v1144 = vsel %vm248, %v1107, 0.0
    %1145 = vadd.xlane.f32.xlu0 %v1144
    %v1146 = vpop.xlane.xlu0 %1145
    %v1147 = vmul.f32 %v1140, %v264
    %v1148 = vmul.f32 %v1143, %v264
    %v1149 = vmul.f32 %v1146, %v264
    %v1150 = vsub.f32 %v1105, %v1147
    %v1151 = vsub.f32 %v1106, %v1148
    %v1152 = vsub.f32 %v1107, %v1149
    %v1153 = vmul.f32 %v1150, %v1150
    %v1154 = vmul.f32 %v1151, %v1151
    %v1155 = vmul.f32 %v1152, %v1152
    %v1156 = vsel %vm248, %v1153, 0.0
    %1157 = vadd.xlane.f32.xlu0 %v1156
    %v1158 = vpop.xlane.xlu0 %1157
    %v1159 = vsel %vm248, %v1154, 0.0
    %1160 = vadd.xlane.f32.xlu0 %v1159
    %v1161 = vpop.xlane.xlu0 %1160
    %v1162 = vsel %vm248, %v1155, 0.0
    %1163 = vadd.xlane.f32.xlu0 %v1162
    %v1164 = vpop.xlane.xlu0 %1163
    %v1165 = vmul.f32 %v1158, %v264
    %v1166 = vmul.f32 %v1161, %v264
    %v1167 = vmul.f32 %v1164, %v264
    %v1168 = vadd.f32 %v1165, 1e-06
    %v1169 = vadd.f32 %v1166, 1e-06
    %v1170 = vadd.f32 %v1167, 1e-06
    %v1171 = vrsqrt.pop %v1168
    %v1172 = vmul.f32 %v1171, %v1168
    %v1173 = vmul.f32 %v1172, %v1171
    %v1174 = vmul.f32 0.5, %v1173
    %v1175 = vsub.f32 1.5, %v1174
    %v1176 = vmul.f32 %v1171, %v1175
    %vm1177 = vweird.f32 %v1168
    %vm1178 = vweird.f32 %v1171
    %vm1179 = vmor %vm1177, %vm1178
    %v1180 = vsel %vm1179, %v1171, %v1176
    %v1181 = vrsqrt.pop %v1169
    %v1182 = vmul.f32 %v1181, %v1169
    %v1183 = vmul.f32 %v1182, %v1181
    %v1184 = vmul.f32 0.5, %v1183
    %v1185 = vsub.f32 1.5, %v1184
    %v1186 = vmul.f32 %v1181, %v1185
    %vm1187 = vweird.f32 %v1169
    %vm1188 = vweird.f32 %v1181
    %vm1189 = vmor %vm1187, %vm1188
    %v1190 = vsel %vm1189, %v1181, %v1186
    %v1191 = vrsqrt.pop %v1170
    %v1192 = vmul.f32 %v1191, %v1170
    %v1193 = vmul.f32 %v1192, %v1191
    %v1194 = vmul.f32 0.5, %v1193
    %v1195 = vsub.f32 1.5, %v1194
    %v1196 = vmul.f32 %v1191, %v1195
    %vm1197 = vweird.f32 %v1170
    %vm1198 = vweird.f32 %v1191
    %vm1199 = vmor %vm1197, %vm1198
    %v1200 = vsel %vm1199, %v1191, %v1196
    %v1201 = vmul.f32 %v1150, %v1180
    %v1202 = vmul.f32 %v1151, %v1190
    %v1203 = vmul.f32 %v1152, %v1200
    %v1204 = vperm.slane %v1130, 0
    %v1205 = vmul.f32 %v1201, %v1204
    %v1206 = vmul.f32 %v1202, %v1204
    %v1207 = vmul.f32 %v1203, %v1204
    %v1208 = vperm.slane %v1131, 0
    %v1209 = vadd.f32 %v1205, %v1208
    %v1210 = vadd.f32 %v1206, %v1208
    %v1211 = vadd.f32 %v1207, %v1208
    %v1212 = vpack.c.bf16 %v1210, %v1209
    %v1213 = vpack.c.bf16 %v1211, %v1211
    %v1214 = vperm.slane %v1136, 0
    %v1219 = vunpack.c.l.b16 %v1109
    %v1220 = vunpack.c.l.b16 %v1110
    %v1221 = vunpack.c.l.b16 %v1111
    %v1222 = vunpack.c.l.b16 %v1112
    %v1223 = vpack.c.b16 %v1220, %v1219
    %v1224 = vpack.c.b16 %v1222, %v1221
    %v1228 = vsel %vm248, %v1212, 0
    %v1231 = vsel %vm248, %v1213, 0
    %1233 = vmatpush.bf16.msra.mxu0 0
    %1234 = vmatpush.bf16.msra.mxu0 0
    %1235 = vmatpush.bf16.msra.mxu0 0
    %1236 = vmatpush.bf16.msra.mxu0 0
    %1237 = vmatpush.bf16.msra.mxu0 0
    %1238 = vmatpush.bf16.msra.mxu0 0
    %1239 = vmatpush.bf16.msra.mxu0 %v1224
    %1240 = vmatpush.bf16.msra.mxu0 %v1223
    %1241 = vmatmul.bf16.gmra.mxu0 %v1228
    %v1242 = vpop.f32.mrf.mxu0
    %v1243 = vadd.f32 %v1214, %v1242
    %v1244 = vpop.f32.mrf.mxu0
    %v1245 = vadd.f32 %v1214, %v1244
    %1246 = vmatmul.bf16.gmra.mxu0 %v1231
    %v1247 = vpop.f32.mrf.mxu0
    %v1248 = vadd.f32 %v1214, %v1247
    %v1249 = vpop.f32.mrf.mxu0
    %1250 = vdwg.mxu0
    %v1251 = vpack.c.bf16 %v1243, %v1243
    %v1252 = vpack.c.bf16 %v1245, %v1245
    %v1253 = vpack.c.bf16 %v1248, %v1248
    %v1257 = vunpack.c.l.b16 %v1251
    %v1258 = vunpack.c.l.b16 %v1252
    %v1259 = vunpack.c.l.b16 %v1253
    %v1260 = vpack.c.b16 %v1258, %v1257
    %v1261 = vpack.c.b16 %v1259, %v1259
    %1262 = vrot.lane.b32.xlu0 %v1260, 96
    %v1263 = vpop.permute.xlu0 %1262
    %1264 = vrot.lane.b32.xlu0 %v1261, 96
    %v1265 = vpop.permute.xlu0 %1264
    %v1267 = vsel %vm384, %v1260, 0
    %v1270 = vsel %vm384, %v1261, 0
    %v1273 = vsel %vm384, %v1263, 0
    %v1276 = vsel %vm384, %v1265, 0
    %1278 = vmatpush.bf16.xpose.msra.mxu0 0
    %1279 = vmatpush.bf16.xpose.msra.mxu0 0
    %1280 = vmatpush.bf16.xpose.msra.mxu0 0
    %1281 = vmatpush.bf16.xpose.msra.mxu0 0
    %1282 = vmatpush.bf16.xpose.msra.mxu0 0
    %1283 = vmatpush.bf16.xpose.msra.mxu0 0
    %1284 = vmatpush.bf16.xpose.msra.mxu0 %v1276
    %1285 = vmatpush.bf16.xpose.msra.mxu0 %v1273
    %1286 = vmatmul.bf16.gmra.mxu0 %v1267
    %v1287 = vpop.f32.mrf.mxu0
    %v1288 = vadd.f32 0.0, %v1287
    %v1289 = vpop.f32.mrf.mxu0
    %v1290 = vadd.f32 0.0, %v1289
    %1291 = vmatmul.bf16.gmra.mxu0 %v1270
    %v1292 = vpop.f32.mrf.mxu0
    %v1293 = vadd.f32 0.0, %v1292
    %v1294 = vpop.f32.mrf.mxu0
    %1295 = vdwg.mxu0
    %v1296 = vmul.f32 %v1288, 0.35355338
    %v1297 = vmul.f32 %v1290, 0.35355338
    %v1298 = vmul.f32 %v1293, 0.35355338
    %v1299 = vadd.f32 %v1296, %v57
    %v1300 = vadd.f32 %v1297, %v58
    %v1301 = vadd.f32 %v1298, %v59
    %v1302 = vsel %vm421, %v1299, -inf
    %1303 = vmax.xlane.f32.xlu0 %v1302
    %v1304 = vpop.xlane.xlu0 %1303
    %v1305 = vsel %vm421, %v1300, -inf
    %1306 = vmax.xlane.f32.xlu0 %v1305
    %v1307 = vpop.xlane.xlu0 %1306
    %v1308 = vsel %vm421, %v1301, -inf
    %1309 = vmax.xlane.f32.xlu0 %v1308
    %v1310 = vpop.xlane.xlu0 %1309
    %v1311 = vsub.f32 %v1299, %v1304
    %v1312 = vsub.f32 %v1300, %v1307
    %v1313 = vsub.f32 %v1301, %v1310
    %v1314 = vmul.f32 %v1311, 1.442695
    %v1315 = vpow.pop %v1314
    %v1316 = vmul.f32 %v1312, 1.442695
    %v1317 = vpow.pop %v1316
    %v1318 = vmul.f32 %v1313, 1.442695
    %v1319 = vpow.pop %v1318
    %v1320 = vsel %vm421, %v1315, 0.0
    %1321 = vadd.xlane.f32.xlu0 %v1320
    %v1322 = vpop.xlane.xlu0 %1321
    %v1323 = vsel %vm421, %v1317, 0.0
    %1324 = vadd.xlane.f32.xlu0 %v1323
    %v1325 = vpop.xlane.xlu0 %1324
    %v1326 = vsel %vm421, %v1319, 0.0
    %1327 = vadd.xlane.f32.xlu0 %v1326
    %v1328 = vpop.xlane.xlu0 %1327
    %v1329 = vrcp.pop %v1322
    %v1330 = vrcp.pop %v1325
    %v1331 = vrcp.pop %v1328
    %v1332 = vmul.f32 %v1315, %v1329
    %v1333 = vmul.f32 %v1317, %v1330
    %v1334 = vmul.f32 %v1319, %v1331
    %v1335 = vpack.c.bf16 %v1333, %v1332
    %v1336 = vpack.c.bf16 %v1334, %v1334
    %1337 = vrot.lane.b32.xlu0 %v1260, 64
    %v1338 = vpop.permute.xlu0 %1337
    %1339 = vrot.lane.b32.xlu0 %v1261, 64
    %v1340 = vpop.permute.xlu0 %1339
    %v1343 = vsel %vm421, %v1335, 0
    %v1346 = vsel %vm421, %v1336, 0
    %v1349 = vsel %vm468, %v1340, 0
    %1351 = vmatpush.bf16.msra.mxu0 0
    %1352 = vmatpush.bf16.msra.mxu0 0
    %1353 = vmatpush.bf16.msra.mxu0 0
    %1354 = vmatpush.bf16.msra.mxu0 0
    %1355 = vmatpush.bf16.msra.mxu0 0
    %1356 = vmatpush.bf16.msra.mxu0 0
    %1357 = vmatpush.bf16.msra.mxu0 %v1349
    %1358 = vmatpush.bf16.msra.mxu0 %v1338
    %1359 = vmatmul.bf16.gmra.mxu0 %v1343
    %v1360 = vpop.f32.mrf.mxu0
    %v1361 = vadd.f32 0.0, %v1360
    %v1362 = vpop.f32.mrf.mxu0
    %v1363 = vadd.f32 0.0, %v1362
    %1364 = vmatmul.bf16.gmra.mxu0 %v1346
    %v1365 = vpop.f32.mrf.mxu0
    %v1366 = vadd.f32 0.0, %v1365
    %v1367 = vpop.f32.mrf.mxu0
    %1368 = vdwg.mxu0
    %1369 = vrot.lane.b32.xlu0 %v1260, 120
    %v1370 = vpop.permute.xlu0 %1369
    %1371 = vrot.lane.b32.xlu0 %v1261, 120
    %v1372 = vpop.permute.xlu0 %1371
    %1373 = vrot.lane.b32.xlu0 %v1260, 88
    %v1374 = vpop.permute.xlu0 %1373
    %1375 = vrot.lane.b32.xlu0 %v1261, 88
    %v1376 = vpop.permute.xlu0 %1375
    %v1378 = vsel %vm384, %v1370, 0
    %v1381 = vsel %vm384, %v1372, 0
    %v1384 = vsel %vm384, %v1374, 0
    %v1387 = vsel %vm384, %v1376, 0
    %1389 = vmatpush.bf16.xpose.msra.mxu0 0
    %1390 = vmatpush.bf16.xpose.msra.mxu0 0
    %1391 = vmatpush.bf16.xpose.msra.mxu0 0
    %1392 = vmatpush.bf16.xpose.msra.mxu0 0
    %1393 = vmatpush.bf16.xpose.msra.mxu0 0
    %1394 = vmatpush.bf16.xpose.msra.mxu0 0
    %1395 = vmatpush.bf16.xpose.msra.mxu0 %v1387
    %1396 = vmatpush.bf16.xpose.msra.mxu0 %v1384
    %1397 = vmatmul.bf16.gmra.mxu0 %v1378
    %v1398 = vpop.f32.mrf.mxu0
    %v1399 = vadd.f32 0.0, %v1398
    %v1400 = vpop.f32.mrf.mxu0
    %v1401 = vadd.f32 0.0, %v1400
    %1402 = vmatmul.bf16.gmra.mxu0 %v1381
    %v1403 = vpop.f32.mrf.mxu0
    %v1404 = vadd.f32 0.0, %v1403
    %v1405 = vpop.f32.mrf.mxu0
    %1406 = vdwg.mxu0
    %v1407 = vmul.f32 %v1399, 0.35355338
    %v1408 = vmul.f32 %v1401, 0.35355338
    %v1409 = vmul.f32 %v1404, 0.35355338
    %v1410 = vadd.f32 %v1407, %v57
    %v1411 = vadd.f32 %v1408, %v58
    %v1412 = vadd.f32 %v1409, %v59
    %v1413 = vsel %vm421, %v1410, -inf
    %1414 = vmax.xlane.f32.xlu0 %v1413
    %v1415 = vpop.xlane.xlu0 %1414
    %v1416 = vsel %vm421, %v1411, -inf
    %1417 = vmax.xlane.f32.xlu0 %v1416
    %v1418 = vpop.xlane.xlu0 %1417
    %v1419 = vsel %vm421, %v1412, -inf
    %1420 = vmax.xlane.f32.xlu0 %v1419
    %v1421 = vpop.xlane.xlu0 %1420
    %v1422 = vsub.f32 %v1410, %v1415
    %v1423 = vsub.f32 %v1411, %v1418
    %v1424 = vsub.f32 %v1412, %v1421
    %v1425 = vmul.f32 %v1422, 1.442695
    %v1426 = vpow.pop %v1425
    %v1427 = vmul.f32 %v1423, 1.442695
    %v1428 = vpow.pop %v1427
    %v1429 = vmul.f32 %v1424, 1.442695
    %v1430 = vpow.pop %v1429
    %v1431 = vsel %vm421, %v1426, 0.0
    %1432 = vadd.xlane.f32.xlu0 %v1431
    %v1433 = vpop.xlane.xlu0 %1432
    %v1434 = vsel %vm421, %v1428, 0.0
    %1435 = vadd.xlane.f32.xlu0 %v1434
    %v1436 = vpop.xlane.xlu0 %1435
    %v1437 = vsel %vm421, %v1430, 0.0
    %1438 = vadd.xlane.f32.xlu0 %v1437
    %v1439 = vpop.xlane.xlu0 %1438
    %v1440 = vrcp.pop %v1433
    %v1441 = vrcp.pop %v1436
    %v1442 = vrcp.pop %v1439
    %v1443 = vmul.f32 %v1426, %v1440
    %v1444 = vmul.f32 %v1428, %v1441
    %v1445 = vmul.f32 %v1430, %v1442
    %v1446 = vpack.c.bf16 %v1444, %v1443
    %v1447 = vpack.c.bf16 %v1445, %v1445
    %1448 = vrot.lane.b32.xlu0 %v1260, 56
    %v1449 = vpop.permute.xlu0 %1448
    %1450 = vrot.lane.b32.xlu0 %v1261, 56
    %v1451 = vpop.permute.xlu0 %1450
    %v1454 = vsel %vm421, %v1446, 0
    %v1457 = vsel %vm421, %v1447, 0
    %v1460 = vsel %vm468, %v1451, 0
    %1462 = vmatpush.bf16.msra.mxu0 0
    %1463 = vmatpush.bf16.msra.mxu0 0
    %1464 = vmatpush.bf16.msra.mxu0 0
    %1465 = vmatpush.bf16.msra.mxu0 0
    %1466 = vmatpush.bf16.msra.mxu0 0
    %1467 = vmatpush.bf16.msra.mxu0 0
    %1468 = vmatpush.bf16.msra.mxu0 %v1460
    %1469 = vmatpush.bf16.msra.mxu0 %v1449
    %1470 = vmatmul.bf16.gmra.mxu0 %v1454
    %v1471 = vpop.f32.mrf.mxu0
    %v1472 = vadd.f32 0.0, %v1471
    %v1473 = vpop.f32.mrf.mxu0
    %v1474 = vadd.f32 0.0, %v1473
    %1475 = vmatmul.bf16.gmra.mxu0 %v1457
    %v1476 = vpop.f32.mrf.mxu0
    %v1477 = vadd.f32 0.0, %v1476
    %v1478 = vpop.f32.mrf.mxu0
    %1479 = vdwg.mxu0
    %1480 = vrot.lane.b32.xlu0 %v1260, 112
    %v1481 = vpop.permute.xlu0 %1480
    %1482 = vrot.lane.b32.xlu0 %v1261, 112
    %v1483 = vpop.permute.xlu0 %1482
    %1484 = vrot.lane.b32.xlu0 %v1260, 80
    %v1485 = vpop.permute.xlu0 %1484
    %1486 = vrot.lane.b32.xlu0 %v1261, 80
    %v1487 = vpop.permute.xlu0 %1486
    %v1489 = vsel %vm384, %v1481, 0
    %v1492 = vsel %vm384, %v1483, 0
    %v1495 = vsel %vm384, %v1485, 0
    %v1498 = vsel %vm384, %v1487, 0
    %1500 = vmatpush.bf16.xpose.msra.mxu0 0
    %1501 = vmatpush.bf16.xpose.msra.mxu0 0
    %1502 = vmatpush.bf16.xpose.msra.mxu0 0
    %1503 = vmatpush.bf16.xpose.msra.mxu0 0
    %1504 = vmatpush.bf16.xpose.msra.mxu0 0
    %1505 = vmatpush.bf16.xpose.msra.mxu0 0
    %1506 = vmatpush.bf16.xpose.msra.mxu0 %v1498
    %1507 = vmatpush.bf16.xpose.msra.mxu0 %v1495
    %1508 = vmatmul.bf16.gmra.mxu0 %v1489
    %v1509 = vpop.f32.mrf.mxu0
    %v1510 = vadd.f32 0.0, %v1509
    %v1511 = vpop.f32.mrf.mxu0
    %v1512 = vadd.f32 0.0, %v1511
    %1513 = vmatmul.bf16.gmra.mxu0 %v1492
    %v1514 = vpop.f32.mrf.mxu0
    %v1515 = vadd.f32 0.0, %v1514
    %v1516 = vpop.f32.mrf.mxu0
    %1517 = vdwg.mxu0
    %v1518 = vmul.f32 %v1510, 0.35355338
    %v1519 = vmul.f32 %v1512, 0.35355338
    %v1520 = vmul.f32 %v1515, 0.35355338
    %v1521 = vadd.f32 %v1518, %v57
    %v1522 = vadd.f32 %v1519, %v58
    %v1523 = vadd.f32 %v1520, %v59
    %v1524 = vsel %vm421, %v1521, -inf
    %1525 = vmax.xlane.f32.xlu0 %v1524
    %v1526 = vpop.xlane.xlu0 %1525
    %v1527 = vsel %vm421, %v1522, -inf
    %1528 = vmax.xlane.f32.xlu0 %v1527
    %v1529 = vpop.xlane.xlu0 %1528
    %v1530 = vsel %vm421, %v1523, -inf
    %1531 = vmax.xlane.f32.xlu0 %v1530
    %v1532 = vpop.xlane.xlu0 %1531
    %v1533 = vsub.f32 %v1521, %v1526
    %v1534 = vsub.f32 %v1522, %v1529
    %v1535 = vsub.f32 %v1523, %v1532
    %v1536 = vmul.f32 %v1533, 1.442695
    %v1537 = vpow.pop %v1536
    %v1538 = vmul.f32 %v1534, 1.442695
    %v1539 = vpow.pop %v1538
    %v1540 = vmul.f32 %v1535, 1.442695
    %v1541 = vpow.pop %v1540
    %v1542 = vsel %vm421, %v1537, 0.0
    %1543 = vadd.xlane.f32.xlu0 %v1542
    %v1544 = vpop.xlane.xlu0 %1543
    %v1545 = vsel %vm421, %v1539, 0.0
    %1546 = vadd.xlane.f32.xlu0 %v1545
    %v1547 = vpop.xlane.xlu0 %1546
    %v1548 = vsel %vm421, %v1541, 0.0
    %1549 = vadd.xlane.f32.xlu0 %v1548
    %v1550 = vpop.xlane.xlu0 %1549
    %v1551 = vrcp.pop %v1544
    %v1552 = vrcp.pop %v1547
    %v1553 = vrcp.pop %v1550
    %v1554 = vmul.f32 %v1537, %v1551
    %v1555 = vmul.f32 %v1539, %v1552
    %v1556 = vmul.f32 %v1541, %v1553
    %v1557 = vpack.c.bf16 %v1555, %v1554
    %v1558 = vpack.c.bf16 %v1556, %v1556
    %1559 = vrot.lane.b32.xlu0 %v1260, 48
    %v1560 = vpop.permute.xlu0 %1559
    %1561 = vrot.lane.b32.xlu0 %v1261, 48
    %v1562 = vpop.permute.xlu0 %1561
    %v1565 = vsel %vm421, %v1557, 0
    %v1568 = vsel %vm421, %v1558, 0
    %v1571 = vsel %vm468, %v1562, 0
    %1573 = vmatpush.bf16.msra.mxu0 0
    %1574 = vmatpush.bf16.msra.mxu0 0
    %1575 = vmatpush.bf16.msra.mxu0 0
    %1576 = vmatpush.bf16.msra.mxu0 0
    %1577 = vmatpush.bf16.msra.mxu0 0
    %1578 = vmatpush.bf16.msra.mxu0 0
    %1579 = vmatpush.bf16.msra.mxu0 %v1571
    %1580 = vmatpush.bf16.msra.mxu0 %v1560
    %1581 = vmatmul.bf16.gmra.mxu0 %v1565
    %v1582 = vpop.f32.mrf.mxu0
    %v1583 = vadd.f32 0.0, %v1582
    %v1584 = vpop.f32.mrf.mxu0
    %v1585 = vadd.f32 0.0, %v1584
    %1586 = vmatmul.bf16.gmra.mxu0 %v1568
    %v1587 = vpop.f32.mrf.mxu0
    %v1588 = vadd.f32 0.0, %v1587
    %v1589 = vpop.f32.mrf.mxu0
    %1590 = vdwg.mxu0
    %1591 = vrot.lane.b32.xlu0 %v1260, 104
    %v1592 = vpop.permute.xlu0 %1591
    %1593 = vrot.lane.b32.xlu0 %v1261, 104
    %v1594 = vpop.permute.xlu0 %1593
    %1595 = vrot.lane.b32.xlu0 %v1260, 72
    %v1596 = vpop.permute.xlu0 %1595
    %1597 = vrot.lane.b32.xlu0 %v1261, 72
    %v1598 = vpop.permute.xlu0 %1597
    %v1600 = vsel %vm384, %v1592, 0
    %v1603 = vsel %vm384, %v1594, 0
    %v1606 = vsel %vm384, %v1596, 0
    %v1609 = vsel %vm384, %v1598, 0
    %1611 = vmatpush.bf16.xpose.msra.mxu0 0
    %1612 = vmatpush.bf16.xpose.msra.mxu0 0
    %1613 = vmatpush.bf16.xpose.msra.mxu0 0
    %1614 = vmatpush.bf16.xpose.msra.mxu0 0
    %1615 = vmatpush.bf16.xpose.msra.mxu0 0
    %1616 = vmatpush.bf16.xpose.msra.mxu0 0
    %1617 = vmatpush.bf16.xpose.msra.mxu0 %v1609
    %1618 = vmatpush.bf16.xpose.msra.mxu0 %v1606
    %1619 = vmatmul.bf16.gmra.mxu0 %v1600
    %v1620 = vpop.f32.mrf.mxu0
    %v1621 = vadd.f32 0.0, %v1620
    %v1622 = vpop.f32.mrf.mxu0
    %v1623 = vadd.f32 0.0, %v1622
    %1624 = vmatmul.bf16.gmra.mxu0 %v1603
    %v1625 = vpop.f32.mrf.mxu0
    %v1626 = vadd.f32 0.0, %v1625
    %v1627 = vpop.f32.mrf.mxu0
    %1628 = vdwg.mxu0
    %v1629 = vmul.f32 %v1621, 0.35355338
    %v1630 = vmul.f32 %v1623, 0.35355338
    %v1631 = vmul.f32 %v1626, 0.35355338
    %v1632 = vadd.f32 %v1629, %v57
    %v1633 = vadd.f32 %v1630, %v58
    %v1634 = vadd.f32 %v1631, %v59
    %v1635 = vsel %vm421, %v1632, -inf
    %1636 = vmax.xlane.f32.xlu0 %v1635
    %v1637 = vpop.xlane.xlu0 %1636
    %v1638 = vsel %vm421, %v1633, -inf
    %1639 = vmax.xlane.f32.xlu0 %v1638
    %v1640 = vpop.xlane.xlu0 %1639
    %v1641 = vsel %vm421, %v1634, -inf
    %1642 = vmax.xlane.f32.xlu0 %v1641
    %v1643 = vpop.xlane.xlu0 %1642
    %v1644 = vsub.f32 %v1632, %v1637
    %v1645 = vsub.f32 %v1633, %v1640
    %v1646 = vsub.f32 %v1634, %v1643
    %v1647 = vmul.f32 %v1644, 1.442695
    %v1648 = vpow.pop %v1647
    %v1649 = vmul.f32 %v1645, 1.442695
    %v1650 = vpow.pop %v1649
    %v1651 = vmul.f32 %v1646, 1.442695
    %v1652 = vpow.pop %v1651
    %v1653 = vsel %vm421, %v1648, 0.0
    %1654 = vadd.xlane.f32.xlu0 %v1653
    %v1655 = vpop.xlane.xlu0 %1654
    %v1656 = vsel %vm421, %v1650, 0.0
    %1657 = vadd.xlane.f32.xlu0 %v1656
    %v1658 = vpop.xlane.xlu0 %1657
    %v1659 = vsel %vm421, %v1652, 0.0
    %1660 = vadd.xlane.f32.xlu0 %v1659
    %v1661 = vpop.xlane.xlu0 %1660
    %v1662 = vrcp.pop %v1655
    %v1663 = vrcp.pop %v1658
    %v1664 = vrcp.pop %v1661
    %v1665 = vmul.f32 %v1648, %v1662
    %v1666 = vmul.f32 %v1650, %v1663
    %v1667 = vmul.f32 %v1652, %v1664
    %v1668 = vpack.c.bf16 %v1666, %v1665
    %v1669 = vpack.c.bf16 %v1667, %v1667
    %1670 = vrot.lane.b32.xlu0 %v1260, 40
    %v1671 = vpop.permute.xlu0 %1670
    %1672 = vrot.lane.b32.xlu0 %v1261, 40
    %v1673 = vpop.permute.xlu0 %1672
    %v1676 = vsel %vm421, %v1668, 0
    %v1679 = vsel %vm421, %v1669, 0
    %v1682 = vsel %vm468, %v1673, 0
    %1684 = vmatpush.bf16.msra.mxu0 0
    %1685 = vmatpush.bf16.msra.mxu0 0
    %1686 = vmatpush.bf16.msra.mxu0 0
    %1687 = vmatpush.bf16.msra.mxu0 0
    %1688 = vmatpush.bf16.msra.mxu0 0
    %1689 = vmatpush.bf16.msra.mxu0 0
    %1690 = vmatpush.bf16.msra.mxu0 %v1682
    %1691 = vmatpush.bf16.msra.mxu0 %v1671
    %1692 = vmatmul.bf16.gmra.mxu0 %v1676
    %v1693 = vpop.f32.mrf.mxu0
    %v1694 = vadd.f32 0.0, %v1693
    %v1695 = vpop.f32.mrf.mxu0
    %v1696 = vadd.f32 0.0, %v1695
    %1697 = vmatmul.bf16.gmra.mxu0 %v1679
    %v1698 = vpop.f32.mrf.mxu0
    %v1699 = vadd.f32 0.0, %v1698
    %v1700 = vpop.f32.mrf.mxu0
    %1701 = vdwg.mxu0
    %1705 = vrot.lane.b32.xlu0 %v1472, 8
    %v1706 = vpop.permute.xlu0 %1705
    %1707 = vrot.lane.b32.xlu0 %v1474, 8
    %v1708 = vpop.permute.xlu0 %1707
    %1709 = vrot.lane.b32.xlu0 %v1477, 8
    %v1710 = vpop.permute.xlu0 %1709
    %1717 = vrot.lane.b32.xlu0 %v1583, 16
    %v1718 = vpop.permute.xlu0 %1717
    %1719 = vrot.lane.b32.xlu0 %v1585, 16
    %v1720 = vpop.permute.xlu0 %1719
    %1721 = vrot.lane.b32.xlu0 %v1588, 16
    %v1722 = vpop.permute.xlu0 %1721
    %1729 = vrot.lane.b32.xlu0 %v1694, 24
    %v1730 = vpop.permute.xlu0 %1729
    %1731 = vrot.lane.b32.xlu0 %v1696, 24
    %v1732 = vpop.permute.xlu0 %1731
    %1733 = vrot.lane.b32.xlu0 %v1699, 24
    %v1734 = vpop.permute.xlu0 %1733
    %v1738 = vsel %vm384, %v1361, %v1706
    %v1739 = vsel %vm384, %v1363, %v1708
    %v1740 = vsel %vm384, %v1366, %v1710
    %v1741 = vsel %vm862, %v1738, %v1718
    %v1742 = vsel %vm862, %v1739, %v1720
    %v1743 = vsel %vm862, %v1740, %v1722
    %v1744 = vsel %vm421, %v1741, %v1730
    %v1745 = vsel %vm421, %v1742, %v1732
    %v1746 = vsel %vm421, %v1743, %v1734
    %v1747 = vpack.c.bf16 %v1745, %v1744
    %v1748 = vpack.c.bf16 %v1746, %v1746
    %v1749 = vperm.slane %v1134, 0
    %v1754 = vunpack.c.l.b16 %v1113
    %v1755 = vunpack.c.l.b16 %v1114
    %v1756 = vunpack.c.l.b16 %v1115
    %v1757 = vunpack.c.l.b16 %v1116
    %v1758 = vpack.c.b16 %v1755, %v1754
    %v1759 = vpack.c.b16 %v1757, %v1756
    %v1763 = vsel %vm248, %v1747, 0
    %v1766 = vsel %vm248, %v1748, 0
    %1768 = vmatpush.bf16.msra.mxu0 0
    %1769 = vmatpush.bf16.msra.mxu0 0
    %1770 = vmatpush.bf16.msra.mxu0 0
    %1771 = vmatpush.bf16.msra.mxu0 0
    %1772 = vmatpush.bf16.msra.mxu0 0
    %1773 = vmatpush.bf16.msra.mxu0 0
    %1774 = vmatpush.bf16.msra.mxu0 %v1759
    %1775 = vmatpush.bf16.msra.mxu0 %v1758
    %1776 = vmatmul.bf16.gmra.mxu0 %v1763
    %v1777 = vpop.f32.mrf.mxu0
    %v1778 = vadd.f32 %v1749, %v1777
    %v1779 = vpop.f32.mrf.mxu0
    %v1780 = vadd.f32 %v1749, %v1779
    %1781 = vmatmul.bf16.gmra.mxu0 %v1766
    %v1782 = vpop.f32.mrf.mxu0
    %v1783 = vadd.f32 %v1749, %v1782
    %v1784 = vpop.f32.mrf.mxu0
    %1785 = vdwg.mxu0
    %v1786 = vadd.f32 %v1105, %v1778
    %v1787 = vadd.f32 %v1106, %v1780
    %v1788 = vadd.f32 %v1107, %v1783
    %v1789 = vsel %vm248, %v1786, 0.0
    %1790 = vadd.xlane.f32.xlu0 %v1789
    %v1791 = vpop.xlane.xlu0 %1790
    %v1792 = vsel %vm248, %v1787, 0.0
    %1793 = vadd.xlane.f32.xlu0 %v1792
    %v1794 = vpop.xlane.xlu0 %1793
    %v1795 = vsel %vm248, %v1788, 0.0
    %1796 = vadd.xlane.f32.xlu0 %v1795
    %v1797 = vpop.xlane.xlu0 %1796
    %v1798 = vmul.f32 %v1791, %v264
    %v1799 = vmul.f32 %v1794, %v264
    %v1800 = vmul.f32 %v1797, %v264
    %v1801 = vsub.f32 %v1786, %v1798
    %v1802 = vsub.f32 %v1787, %v1799
    %v1803 = vsub.f32 %v1788, %v1800
    %v1804 = vmul.f32 %v1801, %v1801
    %v1805 = vmul.f32 %v1802, %v1802
    %v1806 = vmul.f32 %v1803, %v1803
    %v1807 = vsel %vm248, %v1804, 0.0
    %1808 = vadd.xlane.f32.xlu0 %v1807
    %v1809 = vpop.xlane.xlu0 %1808
    %v1810 = vsel %vm248, %v1805, 0.0
    %1811 = vadd.xlane.f32.xlu0 %v1810
    %v1812 = vpop.xlane.xlu0 %1811
    %v1813 = vsel %vm248, %v1806, 0.0
    %1814 = vadd.xlane.f32.xlu0 %v1813
    %v1815 = vpop.xlane.xlu0 %1814
    %v1816 = vmul.f32 %v1809, %v264
    %v1817 = vmul.f32 %v1812, %v264
    %v1818 = vmul.f32 %v1815, %v264
    %v1819 = vadd.f32 %v1816, 1e-06
    %v1820 = vadd.f32 %v1817, 1e-06
    %v1821 = vadd.f32 %v1818, 1e-06
    %v1822 = vrsqrt.pop %v1819
    %v1823 = vmul.f32 %v1822, %v1819
    %v1824 = vmul.f32 %v1823, %v1822
    %v1825 = vmul.f32 0.5, %v1824
    %v1826 = vsub.f32 1.5, %v1825
    %v1827 = vmul.f32 %v1822, %v1826
    %vm1828 = vweird.f32 %v1819
    %vm1829 = vweird.f32 %v1822
    %vm1830 = vmor %vm1828, %vm1829
    %v1831 = vsel %vm1830, %v1822, %v1827
    %v1832 = vrsqrt.pop %v1820
    %v1833 = vmul.f32 %v1832, %v1820
    %v1834 = vmul.f32 %v1833, %v1832
    %v1835 = vmul.f32 0.5, %v1834
    %v1836 = vsub.f32 1.5, %v1835
    %v1837 = vmul.f32 %v1832, %v1836
    %vm1838 = vweird.f32 %v1820
    %vm1839 = vweird.f32 %v1832
    %vm1840 = vmor %vm1838, %vm1839
    %v1841 = vsel %vm1840, %v1832, %v1837
    %v1842 = vrsqrt.pop %v1821
    %v1843 = vmul.f32 %v1842, %v1821
    %v1844 = vmul.f32 %v1843, %v1842
    %v1845 = vmul.f32 0.5, %v1844
    %v1846 = vsub.f32 1.5, %v1845
    %v1847 = vmul.f32 %v1842, %v1846
    %vm1848 = vweird.f32 %v1821
    %vm1849 = vweird.f32 %v1842
    %vm1850 = vmor %vm1848, %vm1849
    %v1851 = vsel %vm1850, %v1842, %v1847
    %v1852 = vmul.f32 %v1801, %v1831
    %v1853 = vmul.f32 %v1802, %v1841
    %v1854 = vmul.f32 %v1803, %v1851
    %v1855 = vperm.slane %v1132, 0
    %v1856 = vmul.f32 %v1852, %v1855
    %v1857 = vmul.f32 %v1853, %v1855
    %v1858 = vmul.f32 %v1854, %v1855
    %v1859 = vperm.slane %v1133, 0
    %v1860 = vadd.f32 %v1856, %v1859
    %v1861 = vadd.f32 %v1857, %v1859
    %v1862 = vadd.f32 %v1858, %v1859
    %v1863 = vpack.c.bf16 %v1861, %v1860
    %v1864 = vpack.c.bf16 %v1862, %v1862
    %v1865 = vperm.slane %v1137, 0
    %v1870 = vunpack.c.l.b16 %v1117
    %v1871 = vunpack.c.l.b16 %v1118
    %v1872 = vunpack.c.l.b16 %v1119
    %v1873 = vunpack.c.l.b16 %v1120
    %v1874 = vpack.c.b16 %v1871, %v1870
    %v1875 = vpack.c.b16 %v1873, %v1872
    %v1879 = vsel %vm248, %v1863, 0
    %v1882 = vsel %vm248, %v1864, 0
    %1884 = vmatpush.bf16.msra.mxu0 0
    %1885 = vmatpush.bf16.msra.mxu0 0
    %1886 = vmatpush.bf16.msra.mxu0 0
    %1887 = vmatpush.bf16.msra.mxu0 0
    %1888 = vmatpush.bf16.msra.mxu0 0
    %1889 = vmatpush.bf16.msra.mxu0 0
    %1890 = vmatpush.bf16.msra.mxu0 %v1875
    %1891 = vmatpush.bf16.msra.mxu0 %v1874
    %1892 = vmatmul.bf16.gmra.mxu0 %v1879
    %v1893 = vpop.f32.mrf.mxu0
    %v1894 = vadd.f32 %v1865, %v1893
    %v1895 = vpop.f32.mrf.mxu0
    %v1896 = vadd.f32 %v1865, %v1895
    %1897 = vmatmul.bf16.gmra.mxu0 %v1882
    %v1898 = vpop.f32.mrf.mxu0
    %v1899 = vadd.f32 %v1865, %v1898
    %v1900 = vpop.f32.mrf.mxu0
    %1901 = vdwg.mxu0
    %v1902 = vmul.f32 %v1894, %v1894
    %v1903 = vmul.f32 %v1896, %v1896
    %v1904 = vmul.f32 %v1899, %v1899
    %v1905 = vmul.f32 %v1894, %v1902
    %v1906 = vmul.f32 %v1896, %v1903
    %v1907 = vmul.f32 %v1899, %v1904
    %v1908 = vmul.f32 %v1905, 0.044715
    %v1909 = vmul.f32 %v1906, 0.044715
    %v1910 = vmul.f32 %v1907, 0.044715
    %v1911 = vadd.f32 %v1894, %v1908
    %v1912 = vadd.f32 %v1896, %v1909
    %v1913 = vadd.f32 %v1899, %v1910
    %v1914 = vmul.f32 %v1911, 0.7978846
    %v1915 = vmul.f32 %v1912, 0.7978846
    %v1916 = vmul.f32 %v1913, 0.7978846
    %v1917 = vtanh.pop %v1914
    %v1918 = vtanh.pop %v1915
    %v1919 = vtanh.pop %v1916
    %v1920 = vadd.f32 %v1917, 1.0
    %v1921 = vadd.f32 %v1918, 1.0
    %v1922 = vadd.f32 %v1919, 1.0
    %v1923 = vmul.f32 %v1920, 0.5
    %v1924 = vmul.f32 %v1921, 0.5
    %v1925 = vmul.f32 %v1922, 0.5
    %v1926 = vmul.f32 %v1894, %v1923
    %v1927 = vmul.f32 %v1896, %v1924
    %v1928 = vmul.f32 %v1899, %v1925
    %v1929 = vpack.c.bf16 %v1927, %v1926
    %v1930 = vpack.c.bf16 %v1928, %v1928
    %v1939 = vunpack.c.l.b16 %v1121
    %v1940 = vunpack.c.l.b16 %v1122
    %v1941 = vunpack.c.l.b16 %v1123
    %v1942 = vunpack.c.l.b16 %v1124
    %v1943 = vunpack.c.l.b16 %v1125
    %v1944 = vunpack.c.l.b16 %v1126
    %v1945 = vunpack.c.l.b16 %v1127
    %v1946 = vunpack.c.l.b16 %v1128
    %v1947 = vpack.c.b16 %v1940, %v1939
    %v1948 = vpack.c.b16 %v1942, %v1941
    %v1949 = vpack.c.b16 %v1944, %v1943
    %v1950 = vpack.c.b16 %v1946, %v1945
    %v1956 = vsel %vm177, %v1929, 0
    %v1959 = vsel %vm177, %v1930, 0
    %1961 = vmatpush.bf16.msra.mxu0 0
    %1962 = vmatpush.bf16.msra.mxu0 0
    %1963 = vmatpush.bf16.msra.mxu0 0
    %1964 = vmatpush.bf16.msra.mxu0 0
    %1965 = vmatpush.bf16.msra.mxu0 %v1950
    %1966 = vmatpush.bf16.msra.mxu0 %v1949
    %1967 = vmatpush.bf16.msra.mxu0 %v1948
    %1968 = vmatpush.bf16.msra.mxu0 %v1947
    %1969 = vmatmul.bf16.gmra.mxu0 %v1956
    %v1970 = vpop.f32.mrf.mxu0
    %v1971 = vadd.f32 0.0, %v1970
    %v1972 = vpop.f32.mrf.mxu0
    %v1973 = vadd.f32 0.0, %v1972
    %1974 = vmatmul.bf16.gmra.mxu0 %v1959
    %v1975 = vpop.f32.mrf.mxu0
    %v1976 = vadd.f32 0.0, %v1975
    %v1977 = vpop.f32.mrf.mxu0
    %1978 = vdwg.mxu0
    %v1979 = vadd.f32 %v1786, %v1971
    %v1980 = vadd.f32 %v1787, %v1973
    %v1981 = vadd.f32 %v1788, %v1976
    %v1982 = vperm.slane %v1135, 0
    %v1983 = vadd.f32 %v1979, %v1982
    %v1984 = vadd.f32 %v1980, %v1982
    %v1985 = vadd.f32 %v1981, %v1982
    %1986 = vst.msk [vmem:[#allocation2] sm:$0xff] %vm248, %v1983
    %1987 = vst.msk [vmem:[#allocation2 + $0x8] sm:$0xff] %vm248, %v1984
    %1988 = vst.msk [vmem:[#allocation2 + $0x10] sm:$0xff] %vm248, %v1985
    %v1989 = vld [vmem:[#allocation2] sm:$0x1]
    %v1990 = vld [vmem:[#allocation2 + $0x6] sm:$0x1]
    %v1992 = vrot.slane %v1990, 7
    %vm1994 = vcmask 1040384
    %v1995 = vsel %vm1994, %v1989, %v1992
    %v1996 = vld [vmem:[#allocation2 + $0xd] sm:$0x1]
    %v1997 = vld [vmem:[#allocation2 + $0x13] sm:$0x1]
    %v1999 = vrot.slane %v1997, 7
    %v2001 = vsel %vm1994, %v1996, %v1999
    %v2002 = vld [vmem:[#allocation2 + $0xe] sm:$0xf]
    %v2003 = vld [vmem:[#allocation2 + $0x14] sm:$0xf]
    %v2005 = vrot.slane %v2003, 4
    %v2007 = vsel %vm468, %v2002, %v2005
    %v2008 = vld [vmem:[#allocation2 + $0x2] sm:$0xf]
    %v2009 = vld [vmem:[#allocation2 + $0x8] sm:$0xf]
    %v2011 = vrot.slane %v2009, 4
    %v2013 = vsel %vm468, %v2008, %v2011
    %v2014 = vld [vmem:[%s5 + $0x18] sm:$0xf]
    %v2015 = vld [vmem:[%s5 + $0x38] sm:$0xf]
    %v2016 = vld [vmem:[%s5 + $0x58] sm:$0xf]
    %v2017 = vld [vmem:[%s5 + $0x78] sm:$0xf]
    %v2018 = vld [vmem:[%s6 + $0xc] sm:$0x1]
    %v2019 = vpack.c.bf16 %v1995, %v1995
    %v2020 = vperm.slane %v2018, 0
    %v2025 = vunpack.c.l.b16 %v2014
    %v2026 = vunpack.c.l.b16 %v2015
    %v2027 = vunpack.c.l.b16 %v2016
    %v2028 = vunpack.c.l.b16 %v2017
    %v2029 = vpack.c.b16 %v2026, %v2025
    %v2030 = vpack.c.b16 %v2028, %v2027
    %v2034 = vsel %vm248, %v2019, 0
    %2036 = vmatpush.bf16.msra.mxu0 0
    %2037 = vmatpush.bf16.msra.mxu0 0
    %2038 = vmatpush.bf16.msra.mxu0 0
    %2039 = vmatpush.bf16.msra.mxu0 0
    %2040 = vmatpush.bf16.msra.mxu0 0
    %2041 = vmatpush.bf16.msra.mxu0 0
    %2042 = vmatpush.bf16.msra.mxu0 %v2030
    %2043 = vmatpush.bf16.msra.mxu0 %v2029
    %2044 = vmatmul.bf16.gmra.mxu0 %v2034
    %v2045 = vpop.f32.mrf.mxu0
    %v2046 = vadd.f32 %v2020, %v2045
    %v2047 = vpop.f32.mrf.mxu0
    %2048 = vdwg.mxu0
    %2049 = vst [vmem:[#allocation4] sm:$0x3] %v2046
    %v2050 = vpack.c.bf16 %v2001, %v2001
    %v2052 = vsel %vm248, %v2050, 0
    %2054 = vmatpush.bf16.msra.mxu0 0
    %2055 = vmatpush.bf16.msra.mxu0 0
    %2056 = vmatpush.bf16.msra.mxu0 0
    %2057 = vmatpush.bf16.msra.mxu0 0
    %2058 = vmatpush.bf16.msra.mxu0 0
    %2059 = vmatpush.bf16.msra.mxu0 0
    %2060 = vmatpush.bf16.msra.mxu0 %v2030
    %2061 = vmatpush.bf16.msra.mxu0 %v2029
    %2062 = vmatmul.bf16.gmra.mxu0 %v2052
    %v2063 = vpop.f32.mrf.mxu0
    %v2064 = vadd.f32 %v2020, %v2063
    %v2065 = vpop.f32.mrf.mxu0
    %2066 = vdwg.mxu0
    %2067 = vst [vmem:[#allocation6] sm:$0x3] %v2064
    %v2068 = vmul.f32 %v42, 0.25
    %v2069 = vfloor.f32 %v2068
    %v2070 = vmul.f32 %v51, 0.25
    %v2071 = vfloor.f32 %v2070
    %vm2072 = vcmp.eq.f32.partialorder %v2069, %v2071
    %v2073 = vsel %vm2072, 0.0, -1e+09
    %v2074 = vld [vmem:[%s5] sm:$0xf]
    %v2075 = vld [vmem:[%s5 + $0x20] sm:$0xf]
    %v2076 = vld [vmem:[%s5 + $0x40] sm:$0xf]
    %v2077 = vld [vmem:[%s5 + $0x60] sm:$0xf]
    %v2078 = vld [vmem:[%s5 + $0x4] sm:$0xf]
    %v2079 = vld [vmem:[%s5 + $0x24] sm:$0xf]
    %v2080 = vld [vmem:[%s5 + $0x44] sm:$0xf]
    %v2081 = vld [vmem:[%s5 + $0x64] sm:$0xf]
    %v2082 = vld [vmem:[%s5 + $0x8] sm:$0xf]
    %v2083 = vld [vmem:[%s5 + $0x28] sm:$0xf]
    %v2084 = vld [vmem:[%s5 + $0x48] sm:$0xf]
    %v2085 = vld [vmem:[%s5 + $0x68] sm:$0xf]
    %v2086 = vld [vmem:[%s5 + $0xc] sm:$0xf]
    %v2087 = vld [vmem:[%s5 + $0x2c] sm:$0xf]
    %v2088 = vld [vmem:[%s5 + $0x4c] sm:$0xf]
    %v2089 = vld [vmem:[%s5 + $0x6c] sm:$0xf]
    %v2090 = vld [vmem:[%s5 + $0x10] sm:$0xf]
    %v2091 = vld [vmem:[%s5 + $0x30] sm:$0xf]
    %v2092 = vld [vmem:[%s5 + $0x50] sm:$0xf]
    %v2093 = vld [vmem:[%s5 + $0x70] sm:$0xf]
    %v2094 = vld [vmem:[%s5 + $0x14] sm:$0xf]
    %v2095 = vld [vmem:[%s5 + $0x34] sm:$0xf]
    %v2096 = vld [vmem:[%s5 + $0x1c] sm:$0xf]
    %v2097 = vld [vmem:[%s5 + $0x3c] sm:$0xf]
    %v2098 = vld [vmem:[%s5 + $0x5c] sm:$0xf]
    %v2099 = vld [vmem:[%s5 + $0x7c] sm:$0xf]
    %v2100 = vld [vmem:[%s6] sm:$0x1]
    %v2101 = vld [vmem:[%s6 + $0x1] sm:$0x1]
    %v2102 = vld [vmem:[%s6 + $0x2] sm:$0x1]
    %v2103 = vld [vmem:[%s6 + $0x3] sm:$0x1]
    %v2104 = vld [vmem:[%s6 + $0x4] sm:$0x1]
    %v2105 = vld [vmem:[%s6 + $0x5] sm:$0x1]
    %v2106 = vld [vmem:[%s6 + $0x6] sm:$0x1]
    %v2107 = vld [vmem:[%s6 + $0x7] sm:$0x1]
    %v2108 = vld [vmem:[%s6 + $0x8] sm:$0x1]
    %v2109 = vld [vmem:[%s6 + $0x9] sm:$0x1]
    %v2110 = vld [vmem:[%s6 + $0xa] sm:$0x1]
    %v2111 = vld [vmem:[%s6 + $0xb] sm:$0x1]
    %v2112 = vld [vmem:[%s6 + $0xd] sm:$0x1]
    %v2113 = vld [vmem:[%s6 + $0xe] sm:$0x1]
    %v2114 = vld [vmem:[%s6 + $0xf] sm:$0x1]
    %v2115 = vpack.c.bf16 %v2007, %v2007
    %v2116 = vperm.slane %v2100, 0
    %v2121 = vunpack.c.l.b16 %v2074
    %v2122 = vunpack.c.l.b16 %v2075
    %v2123 = vunpack.c.l.b16 %v2076
    %v2124 = vunpack.c.l.b16 %v2077
    %v2125 = vpack.c.b16 %v2122, %v2121
    %v2126 = vpack.c.b16 %v2124, %v2123
    %v2130 = vsel %vm248, %v2115, 0
    %2132 = vmatpush.bf16.msra.mxu0 0
    %2133 = vmatpush.bf16.msra.mxu0 0
    %2134 = vmatpush.bf16.msra.mxu0 0
    %2135 = vmatpush.bf16.msra.mxu0 0
    %2136 = vmatpush.bf16.msra.mxu0 0
    %2137 = vmatpush.bf16.msra.mxu0 0
    %2138 = vmatpush.bf16.msra.mxu0 %v2126
    %2139 = vmatpush.bf16.msra.mxu0 %v2125
    %2140 = vmatmul.bf16.gmra.mxu0 %v2130
    %v2141 = vpop.f32.mrf.mxu0
    %v2142 = vadd.f32 %v2116, %v2141
    %v2143 = vpop.f32.mrf.mxu0
    %2144 = vdwg.mxu0
    %v2145 = vpack.c.bf16 %v2142, %v2142
    %v2147 = vunpack.c.l.b16 %v2145
    %v2148 = vpack.c.b16 %v2147, %v2147
    %2149 = vrot.lane.b32.xlu0 %v2148, 96
    %v2150 = vpop.permute.xlu0 %2149
    %v2152 = vsel %vm384, %v2145, 0
    %v2155 = vsel %vm384, %v2150, 0
    %2157 = vmatpush.bf16.xpose.msra.mxu0 0
    %2158 = vmatpush.bf16.xpose.msra.mxu0 0
    %2159 = vmatpush.bf16.xpose.msra.mxu0 0
    %2160 = vmatpush.bf16.xpose.msra.mxu0 0
    %2161 = vmatpush.bf16.xpose.msra.mxu0 0
    %2162 = vmatpush.bf16.xpose.msra.mxu0 0
    %2163 = vmatpush.bf16.xpose.msra.mxu0 0
    %2164 = vmatpush.bf16.xpose.msra.mxu0 %v2155
    %2165 = vmatmul.bf16.gmra.mxu0 %v2152
    %v2166 = vpop.f32.mrf.mxu0
    %v2167 = vadd.f32 0.0, %v2166
    %v2168 = vpop.f32.mrf.mxu0
    %2169 = vdwg.mxu0
    %v2170 = vmul.f32 %v2167, 0.35355338
    %v2171 = vadd.f32 %v2170, %v2073
    %v2172 = vsel %vm384, %v2171, -inf
    %2173 = vmax.xlane.f32.xlu0 %v2172
    %v2174 = vpop.xlane.xlu0 %2173
    %v2175 = vsub.f32 %v2171, %v2174
    %v2176 = vmul.f32 %v2175, 1.442695
    %v2177 = vpow.pop %v2176
    %v2178 = vsel %vm384, %v2177, 0.0
    %2179 = vadd.xlane.f32.xlu0 %v2178
    %v2180 = vpop.xlane.xlu0 %2179
    %v2181 = vrcp.pop %v2180
    %v2182 = vmul.f32 %v2177, %v2181
    %v2183 = vpack.c.bf16 %v2182, %v2182
    %2184 = vrot.lane.b32.xlu0 %v2148, 64
    %v2185 = vpop.permute.xlu0 %2184
    %v2187 = vsel %vm384, %v2183, 0
    %v2190 = vsel %vm468, %v2185, 0
    %2192 = vmatpush.bf16.msra.mxu0 0
    %2193 = vmatpush.bf16.msra.mxu0 0
    %2194 = vmatpush.bf16.msra.mxu0 0
    %2195 = vmatpush.bf16.msra.mxu0 0
    %2196 = vmatpush.bf16.msra.mxu0 0
    %2197 = vmatpush.bf16.msra.mxu0 0
    %2198 = vmatpush.bf16.msra.mxu0 0
    %2199 = vmatpush.bf16.msra.mxu0 %v2190
    %2200 = vmatmul.bf16.gmra.mxu0 %v2187
    %v2201 = vpop.f32.mrf.mxu0
    %v2202 = vadd.f32 0.0, %v2201
    %v2203 = vpop.f32.mrf.mxu0
    %2204 = vdwg.mxu0
    %2205 = vrot.lane.b32.xlu0 %v2148, 120
    %v2206 = vpop.permute.xlu0 %2205
    %2207 = vrot.lane.b32.xlu0 %v2148, 88
    %v2208 = vpop.permute.xlu0 %2207
    %v2210 = vsel %vm384, %v2206, 0
    %v2213 = vsel %vm384, %v2208, 0
    %2215 = vmatpush.bf16.xpose.msra.mxu0 0
    %2216 = vmatpush.bf16.xpose.msra.mxu0 0
    %2217 = vmatpush.bf16.xpose.msra.mxu0 0
    %2218 = vmatpush.bf16.xpose.msra.mxu0 0
    %2219 = vmatpush.bf16.xpose.msra.mxu0 0
    %2220 = vmatpush.bf16.xpose.msra.mxu0 0
    %2221 = vmatpush.bf16.xpose.msra.mxu0 0
    %2222 = vmatpush.bf16.xpose.msra.mxu0 %v2213
    %2223 = vmatmul.bf16.gmra.mxu0 %v2210
    %v2224 = vpop.f32.mrf.mxu0
    %v2225 = vadd.f32 0.0, %v2224
    %v2226 = vpop.f32.mrf.mxu0
    %2227 = vdwg.mxu0
    %v2228 = vmul.f32 %v2225, 0.35355338
    %v2229 = vadd.f32 %v2228, %v2073
    %v2230 = vsel %vm384, %v2229, -inf
    %2231 = vmax.xlane.f32.xlu0 %v2230
    %v2232 = vpop.xlane.xlu0 %2231
    %v2233 = vsub.f32 %v2229, %v2232
    %v2234 = vmul.f32 %v2233, 1.442695
    %v2235 = vpow.pop %v2234
    %v2236 = vsel %vm384, %v2235, 0.0
    %2237 = vadd.xlane.f32.xlu0 %v2236
    %v2238 = vpop.xlane.xlu0 %2237
    %v2239 = vrcp.pop %v2238
    %v2240 = vmul.f32 %v2235, %v2239
    %v2241 = vpack.c.bf16 %v2240, %v2240
    %2242 = vrot.lane.b32.xlu0 %v2148, 56
    %v2243 = vpop.permute.xlu0 %2242
    %v2245 = vsel %vm384, %v2241, 0
    %v2248 = vsel %vm468, %v2243, 0
    %2250 = vmatpush.bf16.msra.mxu0 0
    %2251 = vmatpush.bf16.msra.mxu0 0
    %2252 = vmatpush.bf16.msra.mxu0 0
    %2253 = vmatpush.bf16.msra.mxu0 0
    %2254 = vmatpush.bf16.msra.mxu0 0
    %2255 = vmatpush.bf16.msra.mxu0 0
    %2256 = vmatpush.bf16.msra.mxu0 0
    %2257 = vmatpush.bf16.msra.mxu0 %v2248
    %2258 = vmatmul.bf16.gmra.mxu0 %v2245
    %v2259 = vpop.f32.mrf.mxu0
    %v2260 = vadd.f32 0.0, %v2259
    %v2261 = vpop.f32.mrf.mxu0
    %2262 = vdwg.mxu0
    %2263 = vrot.lane.b32.xlu0 %v2148, 112
    %v2264 = vpop.permute.xlu0 %2263
    %2265 = vrot.lane.b32.xlu0 %v2148, 80
    %v2266 = vpop.permute.xlu0 %2265
    %v2268 = vsel %vm384, %v2264, 0
    %v2271 = vsel %vm384, %v2266, 0
    %2273 = vmatpush.bf16.xpose.msra.mxu0 0
    %2274 = vmatpush.bf16.xpose.msra.mxu0 0
    %2275 = vmatpush.bf16.xpose.msra.mxu0 0
    %2276 = vmatpush.bf16.xpose.msra.mxu0 0
    %2277 = vmatpush.bf16.xpose.msra.mxu0 0
    %2278 = vmatpush.bf16.xpose.msra.mxu0 0
    %2279 = vmatpush.bf16.xpose.msra.mxu0 0
    %2280 = vmatpush.bf16.xpose.msra.mxu0 %v2271
    %2281 = vmatmul.bf16.gmra.mxu0 %v2268
    %v2282 = vpop.f32.mrf.mxu0
    %v2283 = vadd.f32 0.0, %v2282
    %v2284 = vpop.f32.mrf.mxu0
    %2285 = vdwg.mxu0
    %v2286 = vmul.f32 %v2283, 0.35355338
    %v2287 = vadd.f32 %v2286, %v2073
    %v2288 = vsel %vm384, %v2287, -inf
    %2289 = vmax.xlane.f32.xlu0 %v2288
    %v2290 = vpop.xlane.xlu0 %2289
    %v2291 = vsub.f32 %v2287, %v2290
    %v2292 = vmul.f32 %v2291, 1.442695
    %v2293 = vpow.pop %v2292
    %v2294 = vsel %vm384, %v2293, 0.0
    %2295 = vadd.xlane.f32.xlu0 %v2294
    %v2296 = vpop.xlane.xlu0 %2295
    %v2297 = vrcp.pop %v2296
    %v2298 = vmul.f32 %v2293, %v2297
    %v2299 = vpack.c.bf16 %v2298, %v2298
    %2300 = vrot.lane.b32.xlu0 %v2148, 48
    %v2301 = vpop.permute.xlu0 %2300
    %v2303 = vsel %vm384, %v2299, 0
    %v2306 = vsel %vm468, %v2301, 0
    %2308 = vmatpush.bf16.msra.mxu0 0
    %2309 = vmatpush.bf16.msra.mxu0 0
    %2310 = vmatpush.bf16.msra.mxu0 0
    %2311 = vmatpush.bf16.msra.mxu0 0
    %2312 = vmatpush.bf16.msra.mxu0 0
    %2313 = vmatpush.bf16.msra.mxu0 0
    %2314 = vmatpush.bf16.msra.mxu0 0
    %2315 = vmatpush.bf16.msra.mxu0 %v2306
    %2316 = vmatmul.bf16.gmra.mxu0 %v2303
    %v2317 = vpop.f32.mrf.mxu0
    %v2318 = vadd.f32 0.0, %v2317
    %v2319 = vpop.f32.mrf.mxu0
    %2320 = vdwg.mxu0
    %2321 = vrot.lane.b32.xlu0 %v2148, 104
    %v2322 = vpop.permute.xlu0 %2321
    %2323 = vrot.lane.b32.xlu0 %v2148, 72
    %v2324 = vpop.permute.xlu0 %2323
    %v2326 = vsel %vm384, %v2322, 0
    %v2329 = vsel %vm384, %v2324, 0
    %2331 = vmatpush.bf16.xpose.msra.mxu0 0
    %2332 = vmatpush.bf16.xpose.msra.mxu0 0
    %2333 = vmatpush.bf16.xpose.msra.mxu0 0
    %2334 = vmatpush.bf16.xpose.msra.mxu0 0
    %2335 = vmatpush.bf16.xpose.msra.mxu0 0
    %2336 = vmatpush.bf16.xpose.msra.mxu0 0
    %2337 = vmatpush.bf16.xpose.msra.mxu0 0
    %2338 = vmatpush.bf16.xpose.msra.mxu0 %v2329
    %2339 = vmatmul.bf16.gmra.mxu0 %v2326
    %v2340 = vpop.f32.mrf.mxu0
    %v2341 = vadd.f32 0.0, %v2340
    %v2342 = vpop.f32.mrf.mxu0
    %2343 = vdwg.mxu0
    %v2344 = vmul.f32 %v2341, 0.35355338
    %v2345 = vadd.f32 %v2344, %v2073
    %v2346 = vsel %vm384, %v2345, -inf
    %2347 = vmax.xlane.f32.xlu0 %v2346
    %v2348 = vpop.xlane.xlu0 %2347
    %v2349 = vsub.f32 %v2345, %v2348
    %v2350 = vmul.f32 %v2349, 1.442695
    %v2351 = vpow.pop %v2350
    %v2352 = vsel %vm384, %v2351, 0.0
    %2353 = vadd.xlane.f32.xlu0 %v2352
    %v2354 = vpop.xlane.xlu0 %2353
    %v2355 = vrcp.pop %v2354
    %v2356 = vmul.f32 %v2351, %v2355
    %v2357 = vpack.c.bf16 %v2356, %v2356
    %2358 = vrot.lane.b32.xlu0 %v2148, 40
    %v2359 = vpop.permute.xlu0 %2358
    %v2361 = vsel %vm384, %v2357, 0
    %v2364 = vsel %vm468, %v2359, 0
    %2366 = vmatpush.bf16.msra.mxu0 0
    %2367 = vmatpush.bf16.msra.mxu0 0
    %2368 = vmatpush.bf16.msra.mxu0 0
    %2369 = vmatpush.bf16.msra.mxu0 0
    %2370 = vmatpush.bf16.msra.mxu0 0
    %2371 = vmatpush.bf16.msra.mxu0 0
    %2372 = vmatpush.bf16.msra.mxu0 0
    %2373 = vmatpush.bf16.msra.mxu0 %v2364
    %2374 = vmatmul.bf16.gmra.mxu0 %v2361
    %v2375 = vpop.f32.mrf.mxu0
    %v2376 = vadd.f32 0.0, %v2375
    %v2377 = vpop.f32.mrf.mxu0
    %2378 = vdwg.mxu0
    %2380 = vrot.lane.b32.xlu0 %v2260, 8
    %v2381 = vpop.permute.xlu0 %2380
    %2384 = vrot.lane.b32.xlu0 %v2318, 16
    %v2385 = vpop.permute.xlu0 %2384
    %2388 = vrot.lane.b32.xlu0 %v2376, 24
    %v2389 = vpop.permute.xlu0 %2388
    %v2391 = vsel %vm384, %v2202, %v2381
    %v2392 = vsel %vm862, %v2391, %v2385
    %v2393 = vsel %vm421, %v2392, %v2389
    %v2394 = vpack.c.bf16 %v2393, %v2393
    %v2395 = vperm.slane %v2101, 0
    %v2400 = vunpack.c.l.b16 %v2078
    %v2401 = vunpack.c.l.b16 %v2079
    %v2402 = vunpack.c.l.b16 %v2080
    %v2403 = vunpack.c.l.b16 %v2081
    %v2404 = vpack.c.b16 %v2401, %v2400
    %v2405 = vpack.c.b16 %v2403, %v2402
    %v2409 = vsel %vm248, %v2394, 0
    %2411 = vmatpush.bf16.msra.mxu0 0
    %2412 = vmatpush.bf16.msra.mxu0 0
    %2413 = vmatpush.bf16.msra.mxu0 0
    %2414 = vmatpush.bf16.msra.mxu0 0
    %2415 = vmatpush.bf16.msra.mxu0 0
    %2416 = vmatpush.bf16.msra.mxu0 0
    %2417 = vmatpush.bf16.msra.mxu0 %v2405
    %2418 = vmatpush.bf16.msra.mxu0 %v2404
    %2419 = vmatmul.bf16.gmra.mxu0 %v2409
    %v2420 = vpop.f32.mrf.mxu0
    %v2421 = vadd.f32 %v2395, %v2420
    %v2422 = vpop.f32.mrf.mxu0
    %2423 = vdwg.mxu0
    %v2424 = vadd.f32 %v2007, %v2421
    %v2425 = vsel %vm248, %v2424, 0.0
    %2426 = vadd.xlane.f32.xlu0 %v2425
    %v2427 = vpop.xlane.xlu0 %2426
    %v2428 = vmul.f32 %v2427, %v264
    %v2429 = vsub.f32 %v2424, %v2428
    %v2430 = vmul.f32 %v2429, %v2429
    %v2431 = vsel %vm248, %v2430, 0.0
    %2432 = vadd.xlane.f32.xlu0 %v2431
    %v2433 = vpop.xlane.xlu0 %2432
    %v2434 = vmul.f32 %v2433, %v264
    %v2435 = vadd.f32 %v2434, 1e-05
    %v2436 = vrsqrt.pop %v2435
    %v2437 = vmul.f32 %v2436, %v2435
    %v2438 = vmul.f32 %v2437, %v2436
    %v2439 = vmul.f32 0.5, %v2438
    %v2440 = vsub.f32 1.5, %v2439
    %v2441 = vmul.f32 %v2436, %v2440
    %vm2442 = vweird.f32 %v2435
    %vm2443 = vweird.f32 %v2436
    %vm2444 = vmor %vm2442, %vm2443
    %v2445 = vsel %vm2444, %v2436, %v2441
    %v2446 = vmul.f32 %v2429, %v2445
    %v2447 = vperm.slane %v2104, 0
    %v2448 = vmul.f32 %v2446, %v2447
    %v2449 = vperm.slane %v2105, 0
    %v2450 = vadd.f32 %v2448, %v2449
    %v2451 = vpack.c.bf16 %v2450, %v2450
    %v2452 = vperm.slane %v2102, 0
    %v2457 = vunpack.c.l.b16 %v2082
    %v2458 = vunpack.c.l.b16 %v2083
    %v2459 = vunpack.c.l.b16 %v2084
    %v2460 = vunpack.c.l.b16 %v2085
    %v2461 = vpack.c.b16 %v2458, %v2457
    %v2462 = vpack.c.b16 %v2460, %v2459
    %v2466 = vsel %vm248, %v2451, 0
    %2468 = vmatpush.bf16.msra.mxu0 0
    %2469 = vmatpush.bf16.msra.mxu0 0
    %2470 = vmatpush.bf16.msra.mxu0 0
    %2471 = vmatpush.bf16.msra.mxu0 0
    %2472 = vmatpush.bf16.msra.mxu0 0
    %2473 = vmatpush.bf16.msra.mxu0 0
    %2474 = vmatpush.bf16.msra.mxu0 %v2462
    %2475 = vmatpush.bf16.msra.mxu0 %v2461
    %2476 = vmatmul.bf16.gmra.mxu0 %v2466
    %v2477 = vpop.f32.mrf.mxu0
    %v2478 = vadd.f32 %v2452, %v2477
    %v2479 = vpop.f32.mrf.mxu0
    %2480 = vdwg.mxu0
    %v2481 = vpack.c.bf16 %v2013, %v2013
    %2482 = vrot.lane.b32.xlu0 %v2461, 96
    %v2483 = vpop.permute.xlu0 %2482
    %2484 = vrot.lane.b32.xlu0 %v2462, 96
    %v2485 = vpop.permute.xlu0 %2484
    %2489 = vrot.lane.b32.xlu0 %v2452, 96
    %v2490 = vpop.permute.xlu0 %2489
    %v2493 = vsel %vm248, %v2481, 0
    %2495 = vmatpush.bf16.msra.mxu0 0
    %2496 = vmatpush.bf16.msra.mxu0 0
    %2497 = vmatpush.bf16.msra.mxu0 0
    %2498 = vmatpush.bf16.msra.mxu0 0
    %2499 = vmatpush.bf16.msra.mxu0 0
    %2500 = vmatpush.bf16.msra.mxu0 0
    %2501 = vmatpush.bf16.msra.mxu0 %v2485
    %2502 = vmatpush.bf16.msra.mxu0 %v2483
    %2503 = vmatmul.bf16.gmra.mxu0 %v2493
    %v2504 = vpop.f32.mrf.mxu0
    %v2505 = vadd.f32 %v2490, %v2504
    %v2506 = vpop.f32.mrf.mxu0
    %2507 = vdwg.mxu0
    %v2508 = vpack.c.bf16 %v2478, %v2478
    %v2509 = vpack.c.bf16 %v2505, %v2505
    %v2511 = vsel %vm384, %v2508, 0
    %v2514 = vsel %vm384, %v2509, 0
    %2516 = vmatpush.bf16.xpose.msra.mxu0 0
    %2517 = vmatpush.bf16.xpose.msra.mxu0 0
    %2518 = vmatpush.bf16.xpose.msra.mxu0 0
    %2519 = vmatpush.bf16.xpose.msra.mxu0 0
    %2520 = vmatpush.bf16.xpose.msra.mxu0 0
    %2521 = vmatpush.bf16.xpose.msra.mxu0 0
    %2522 = vmatpush.bf16.xpose.msra.mxu0 0
    %2523 = vmatpush.bf16.xpose.msra.mxu0 %v2514
    %2524 = vmatmul.bf16.gmra.mxu0 %v2511
    %v2525 = vpop.f32.mrf.mxu0
    %v2526 = vadd.f32 0.0, %v2525
    %v2527 = vpop.f32.mrf.mxu0
    %2528 = vdwg.mxu0
    %v2529 = vmul.f32 %v2526, 0.35355338
    %v2530 = vadd.f32 %v2529, %v2073
    %v2531 = vsel %vm384, %v2530, -inf
    %2532 = vmax.xlane.f32.xlu0 %v2531
    %v2533 = vpop.xlane.xlu0 %2532
    %v2534 = vsub.f32 %v2530, %v2533
    %v2535 = vmul.f32 %v2534, 1.442695
    %v2536 = vpow.pop %v2535
    %v2537 = vsel %vm384, %v2536, 0.0
    %2538 = vadd.xlane.f32.xlu0 %v2537
    %v2539 = vpop.xlane.xlu0 %2538
    %v2540 = vrcp.pop %v2539
    %v2541 = vmul.f32 %v2536, %v2540
    %v2542 = vpack.c.bf16 %v2541, %v2541
    %v2544 = vunpack.c.l.b16 %v2509
    %v2545 = vpack.c.b16 %v2544, %v2544
    %2546 = vrot.lane.b32.xlu0 %v2545, 96
    %v2547 = vpop.permute.xlu0 %2546
    %v2549 = vsel %vm384, %v2542, 0
    %v2552 = vsel %vm468, %v2547, 0
    %2554 = vmatpush.bf16.msra.mxu0 0
    %2555 = vmatpush.bf16.msra.mxu0 0
    %2556 = vmatpush.bf16.msra.mxu0 0
    %2557 = vmatpush.bf16.msra.mxu0 0
    %2558 = vmatpush.bf16.msra.mxu0 0
    %2559 = vmatpush.bf16.msra.mxu0 0
    %2560 = vmatpush.bf16.msra.mxu0 0
    %2561 = vmatpush.bf16.msra.mxu0 %v2552
    %2562 = vmatmul.bf16.gmra.mxu0 %v2549
    %v2563 = vpop.f32.mrf.mxu0
    %v2564 = vadd.f32 0.0, %v2563
    %v2565 = vpop.f32.mrf.mxu0
    %2566 = vdwg.mxu0
    %v2568 = vunpack.c.l.b16 %v2508
    %v2569 = vpack.c.b16 %v2568, %v2568
    %2570 = vrot.lane.b32.xlu0 %v2569, 120
    %v2571 = vpop.permute.xlu0 %2570
    %2572 = vrot.lane.b32.xlu0 %v2545, 120
    %v2573 = vpop.permute.xlu0 %2572
    %v2575 = vsel %vm384, %v2571, 0
    %v2578 = vsel %vm384, %v2573, 0
    %2580 = vmatpush.bf16.xpose.msra.mxu0 0
    %2581 = vmatpush.bf16.xpose.msra.mxu0 0
    %2582 = vmatpush.bf16.xpose.msra.mxu0 0
    %2583 = vmatpush.bf16.xpose.msra.mxu0 0
    %2584 = vmatpush.bf16.xpose.msra.mxu0 0
    %2585 = vmatpush.bf16.xpose.msra.mxu0 0
    %2586 = vmatpush.bf16.xpose.msra.mxu0 0
    %2587 = vmatpush.bf16.xpose.msra.mxu0 %v2578
    %2588 = vmatmul.bf16.gmra.mxu0 %v2575
    %v2589 = vpop.f32.mrf.mxu0
    %v2590 = vadd.f32 0.0, %v2589
    %v2591 = vpop.f32.mrf.mxu0
    %2592 = vdwg.mxu0
    %v2593 = vmul.f32 %v2590, 0.35355338
    %v2594 = vadd.f32 %v2593, %v2073
    %v2595 = vsel %vm384, %v2594, -inf
    %2596 = vmax.xlane.f32.xlu0 %v2595
    %v2597 = vpop.xlane.xlu0 %2596
    %v2598 = vsub.f32 %v2594, %v2597
    %v2599 = vmul.f32 %v2598, 1.442695
    %v2600 = vpow.pop %v2599
    %v2601 = vsel %vm384, %v2600, 0.0
    %2602 = vadd.xlane.f32.xlu0 %v2601
    %v2603 = vpop.xlane.xlu0 %2602
    %v2604 = vrcp.pop %v2603
    %v2605 = vmul.f32 %v2600, %v2604
    %v2606 = vpack.c.bf16 %v2605, %v2605
    %2607 = vrot.lane.b32.xlu0 %v2545, 88
    %v2608 = vpop.permute.xlu0 %2607
    %v2610 = vsel %vm384, %v2606, 0
    %v2613 = vsel %vm468, %v2608, 0
    %2615 = vmatpush.bf16.msra.mxu0 0
    %2616 = vmatpush.bf16.msra.mxu0 0
    %2617 = vmatpush.bf16.msra.mxu0 0
    %2618 = vmatpush.bf16.msra.mxu0 0
    %2619 = vmatpush.bf16.msra.mxu0 0
    %2620 = vmatpush.bf16.msra.mxu0 0
    %2621 = vmatpush.bf16.msra.mxu0 0
    %2622 = vmatpush.bf16.msra.mxu0 %v2613
    %2623 = vmatmul.bf16.gmra.mxu0 %v2610
    %v2624 = vpop.f32.mrf.mxu0
    %v2625 = vadd.f32 0.0, %v2624
    %v2626 = vpop.f32.mrf.mxu0
    %2627 = vdwg.mxu0
    %2628 = vrot.lane.b32.xlu0 %v2569, 112
    %v2629 = vpop.permute.xlu0 %2628
    %2630 = vrot.lane.b32.xlu0 %v2545, 112
    %v2631 = vpop.permute.xlu0 %2630
    %v2633 = vsel %vm384, %v2629, 0
    %v2636 = vsel %vm384, %v2631, 0
    %2638 = vmatpush.bf16.xpose.msra.mxu0 0
    %2639 = vmatpush.bf16.xpose.msra.mxu0 0
    %2640 = vmatpush.bf16.xpose.msra.mxu0 0
    %2641 = vmatpush.bf16.xpose.msra.mxu0 0
    %2642 = vmatpush.bf16.xpose.msra.mxu0 0
    %2643 = vmatpush.bf16.xpose.msra.mxu0 0
    %2644 = vmatpush.bf16.xpose.msra.mxu0 0
    %2645 = vmatpush.bf16.xpose.msra.mxu0 %v2636
    %2646 = vmatmul.bf16.gmra.mxu0 %v2633
    %v2647 = vpop.f32.mrf.mxu0
    %v2648 = vadd.f32 0.0, %v2647
    %v2649 = vpop.f32.mrf.mxu0
    %2650 = vdwg.mxu0
    %v2651 = vmul.f32 %v2648, 0.35355338
    %v2652 = vadd.f32 %v2651, %v2073
    %v2653 = vsel %vm384, %v2652, -inf
    %2654 = vmax.xlane.f32.xlu0 %v2653
    %v2655 = vpop.xlane.xlu0 %2654
    %v2656 = vsub.f32 %v2652, %v2655
    %v2657 = vmul.f32 %v2656, 1.442695
    %v2658 = vpow.pop %v2657
    %v2659 = vsel %vm384, %v2658, 0.0
    %2660 = vadd.xlane.f32.xlu0 %v2659
    %v2661 = vpop.xlane.xlu0 %2660
    %v2662 = vrcp.pop %v2661
    %v2663 = vmul.f32 %v2658, %v2662
    %v2664 = vpack.c.bf16 %v2663, %v2663
    %2665 = vrot.lane.b32.xlu0 %v2545, 80
    %v2666 = vpop.permute.xlu0 %2665
    %v2668 = vsel %vm384, %v2664, 0
    %v2671 = vsel %vm468, %v2666, 0
    %2673 = vmatpush.bf16.msra.mxu0 0
    %2674 = vmatpush.bf16.msra.mxu0 0
    %2675 = vmatpush.bf16.msra.mxu0 0
    %2676 = vmatpush.bf16.msra.mxu0 0
    %2677 = vmatpush.bf16.msra.mxu0 0
    %2678 = vmatpush.bf16.msra.mxu0 0
    %2679 = vmatpush.bf16.msra.mxu0 0
    %2680 = vmatpush.bf16.msra.mxu0 %v2671
    %2681 = vmatmul.bf16.gmra.mxu0 %v2668
    %v2682 = vpop.f32.mrf.mxu0
    %v2683 = vadd.f32 0.0, %v2682
    %v2684 = vpop.f32.mrf.mxu0
    %2685 = vdwg.mxu0
    %2686 = vrot.lane.b32.xlu0 %v2569, 104
    %v2687 = vpop.permute.xlu0 %2686
    %2688 = vrot.lane.b32.xlu0 %v2545, 104
    %v2689 = vpop.permute.xlu0 %2688
    %v2691 = vsel %vm384, %v2687, 0
    %v2694 = vsel %vm384, %v2689, 0
    %2696 = vmatpush.bf16.xpose.msra.mxu0 0
    %2697 = vmatpush.bf16.xpose.msra.mxu0 0
    %2698 = vmatpush.bf16.xpose.msra.mxu0 0
    %2699 = vmatpush.bf16.xpose.msra.mxu0 0
    %2700 = vmatpush.bf16.xpose.msra.mxu0 0
    %2701 = vmatpush.bf16.xpose.msra.mxu0 0
    %2702 = vmatpush.bf16.xpose.msra.mxu0 0
    %2703 = vmatpush.bf16.xpose.msra.mxu0 %v2694
    %2704 = vmatmul.bf16.gmra.mxu0 %v2691
    %v2705 = vpop.f32.mrf.mxu0
    %v2706 = vadd.f32 0.0, %v2705
    %v2707 = vpop.f32.mrf.mxu0
    %2708 = vdwg.mxu0
    %v2709 = vmul.f32 %v2706, 0.35355338
    %v2710 = vadd.f32 %v2709, %v2073
    %v2711 = vsel %vm384, %v2710, -inf
    %2712 = vmax.xlane.f32.xlu0 %v2711
    %v2713 = vpop.xlane.xlu0 %2712
    %v2714 = vsub.f32 %v2710, %v2713
    %v2715 = vmul.f32 %v2714, 1.442695
    %v2716 = vpow.pop %v2715
    %v2717 = vsel %vm384, %v2716, 0.0
    %2718 = vadd.xlane.f32.xlu0 %v2717
    %v2719 = vpop.xlane.xlu0 %2718
    %v2720 = vrcp.pop %v2719
    %v2721 = vmul.f32 %v2716, %v2720
    %v2722 = vpack.c.bf16 %v2721, %v2721
    %2723 = vrot.lane.b32.xlu0 %v2545, 72
    %v2724 = vpop.permute.xlu0 %2723
    %v2726 = vsel %vm384, %v2722, 0
    %v2729 = vsel %vm468, %v2724, 0
    %2731 = vmatpush.bf16.msra.mxu0 0
    %2732 = vmatpush.bf16.msra.mxu0 0
    %2733 = vmatpush.bf16.msra.mxu0 0
    %2734 = vmatpush.bf16.msra.mxu0 0
    %2735 = vmatpush.bf16.msra.mxu0 0
    %2736 = vmatpush.bf16.msra.mxu0 0
    %2737 = vmatpush.bf16.msra.mxu0 0
    %2738 = vmatpush.bf16.msra.mxu0 %v2729
    %2739 = vmatmul.bf16.gmra.mxu0 %v2726
    %v2740 = vpop.f32.mrf.mxu0
    %v2741 = vadd.f32 0.0, %v2740
    %v2742 = vpop.f32.mrf.mxu0
    %2743 = vdwg.mxu0
    %2745 = vrot.lane.b32.xlu0 %v2625, 8
    %v2746 = vpop.permute.xlu0 %2745
    %2749 = vrot.lane.b32.xlu0 %v2683, 16
    %v2750 = vpop.permute.xlu0 %2749
    %2753 = vrot.lane.b32.xlu0 %v2741, 24
    %v2754 = vpop.permute.xlu0 %2753
    %v2756 = vsel %vm384, %v2564, %v2746
    %v2757 = vsel %vm862, %v2756, %v2750
    %v2758 = vsel %vm421, %v2757, %v2754
    %v2759 = vpack.c.bf16 %v2758, %v2758
    %v2760 = vperm.slane %v2103, 0
    %v2765 = vunpack.c.l.b16 %v2086
    %v2766 = vunpack.c.l.b16 %v2087
    %v2767 = vunpack.c.l.b16 %v2088
    %v2768 = vunpack.c.l.b16 %v2089
    %v2769 = vpack.c.b16 %v2766, %v2765
    %v2770 = vpack.c.b16 %v2768, %v2767
    %v2774 = vsel %vm248, %v2759, 0
    %2776 = vmatpush.bf16.msra.mxu0 0
    %2777 = vmatpush.bf16.msra.mxu0 0
    %2778 = vmatpush.bf16.msra.mxu0 0
    %2779 = vmatpush.bf16.msra.mxu0 0
    %2780 = vmatpush.bf16.msra.mxu0 0
    %2781 = vmatpush.bf16.msra.mxu0 0
    %2782 = vmatpush.bf16.msra.mxu0 %v2770
    %2783 = vmatpush.bf16.msra.mxu0 %v2769
    %2784 = vmatmul.bf16.gmra.mxu0 %v2774
    %v2785 = vpop.f32.mrf.mxu0
    %v2786 = vadd.f32 %v2760, %v2785
    %v2787 = vpop.f32.mrf.mxu0
    %2788 = vdwg.mxu0
    %v2789 = vadd.f32 %v2450, %v2786
    %v2790 = vsel %vm248, %v2789, 0.0
    %2791 = vadd.xlane.f32.xlu0 %v2790
    %v2792 = vpop.xlane.xlu0 %2791
    %v2793 = vmul.f32 %v2792, %v264
    %v2794 = vsub.f32 %v2789, %v2793
    %v2795 = vmul.f32 %v2794, %v2794
    %v2796 = vsel %vm248, %v2795, 0.0
    %2797 = vadd.xlane.f32.xlu0 %v2796
    %v2798 = vpop.xlane.xlu0 %2797
    %v2799 = vmul.f32 %v2798, %v264
    %v2800 = vadd.f32 %v2799, 1e-05
    %v2801 = vrsqrt.pop %v2800
    %v2802 = vmul.f32 %v2801, %v2800
    %v2803 = vmul.f32 %v2802, %v2801
    %v2804 = vmul.f32 0.5, %v2803
    %v2805 = vsub.f32 1.5, %v2804
    %v2806 = vmul.f32 %v2801, %v2805
    %vm2807 = vweird.f32 %v2800
    %vm2808 = vweird.f32 %v2801
    %vm2809 = vmor %vm2807, %vm2808
    %v2810 = vsel %vm2809, %v2801, %v2806
    %v2811 = vmul.f32 %v2794, %v2810
    %v2812 = vperm.slane %v2106, 0
    %v2813 = vmul.f32 %v2811, %v2812
    %v2814 = vperm.slane %v2107, 0
    %v2815 = vadd.f32 %v2813, %v2814
    %v2816 = vpack.c.bf16 %v2815, %v2815
    %v2817 = vperm.slane %v2110, 0
    %v2822 = vunpack.c.l.b16 %v2090
    %v2823 = vunpack.c.l.b16 %v2091
    %v2824 = vunpack.c.l.b16 %v2092
    %v2825 = vunpack.c.l.b16 %v2093
    %v2826 = vpack.c.b16 %v2823, %v2822
    %v2827 = vpack.c.b16 %v2825, %v2824
    %v2831 = vsel %vm248, %v2816, 0
    %2833 = vmatpush.bf16.msra.mxu0 0
    %2834 = vmatpush.bf16.msra.mxu0 0
    %2835 = vmatpush.bf16.msra.mxu0 0
    %2836 = vmatpush.bf16.msra.mxu0 0
    %2837 = vmatpush.bf16.msra.mxu0 0
    %2838 = vmatpush.bf16.msra.mxu0 0
    %2839 = vmatpush.bf16.msra.mxu0 %v2827
    %2840 = vmatpush.bf16.msra.mxu0 %v2826
    %2841 = vmatmul.bf16.gmra.mxu0 %v2831
    %v2842 = vpop.f32.mrf.mxu0
    %v2843 = vadd.f32 %v2817, %v2842
    %v2844 = vpop.f32.mrf.mxu0
    %2845 = vdwg.mxu0
    %v2846 = vmax.f32 %v2843, 0.0
    %v2847 = vpack.c.bf16 %v2846, %v2846
    %v2848 = vperm.slane %v2111, 0
    %v2851 = vunpack.c.l.b16 %v2094
    %v2852 = vunpack.c.l.b16 %v2095
    %v2853 = vpack.c.b16 %v2852, %v2851
    %v2856 = vsel %vm862, %v2847, 0
    %2858 = vmatpush.bf16.msra.mxu0 0
    %2859 = vmatpush.bf16.msra.mxu0 0
    %2860 = vmatpush.bf16.msra.mxu0 0
    %2861 = vmatpush.bf16.msra.mxu0 0
    %2862 = vmatpush.bf16.msra.mxu0 0
    %2863 = vmatpush.bf16.msra.mxu0 0
    %2864 = vmatpush.bf16.msra.mxu0 0
    %2865 = vmatpush.bf16.msra.mxu0 %v2853
    %2866 = vmatmul.bf16.gmra.mxu0 %v2856
    %v2867 = vpop.f32.mrf.mxu0
    %v2868 = vadd.f32 %v2848, %v2867
    %v2869 = vpop.f32.mrf.mxu0
    %2870 = vdwg.mxu0
    %v2871 = vadd.f32 %v2815, %v2868
    %v2872 = vsel %vm248, %v2871, 0.0
    %2873 = vadd.xlane.f32.xlu0 %v2872
    %v2874 = vpop.xlane.xlu0 %2873
    %v2875 = vmul.f32 %v2874, %v264
    %v2876 = vsub.f32 %v2871, %v2875
    %v2877 = vmul.f32 %v2876, %v2876
    %v2878 = vsel %vm248, %v2877, 0.0
    %2879 = vadd.xlane.f32.xlu0 %v2878
    %v2880 = vpop.xlane.xlu0 %2879
    %v2881 = vmul.f32 %v2880, %v264
    %v2882 = vadd.f32 %v2881, 1e-05
    %v2883 = vrsqrt.pop %v2882
    %v2884 = vmul.f32 %v2883, %v2882
    %v2885 = vmul.f32 %v2884, %v2883
    %v2886 = vmul.f32 0.5, %v2885
    %v2887 = vsub.f32 1.5, %v2886
    %v2888 = vmul.f32 %v2883, %v2887
    %vm2889 = vweird.f32 %v2882
    %vm2890 = vweird.f32 %v2883
    %vm2891 = vmor %vm2889, %vm2890
    %v2892 = vsel %vm2891, %v2883, %v2888
    %v2893 = vmul.f32 %v2876, %v2892
    %v2894 = vperm.slane %v2108, 0
    %v2895 = vmul.f32 %v2893, %v2894
    %v2896 = vperm.slane %v2109, 0
    %v2897 = vadd.f32 %v2895, %v2896
    %2898 = vst.msk [vmem:[#allocation3] sm:$0xff] %vm248, %v2897
    %v2899 = vld [vmem:[#allocation3] sm:$0xf]
    %vm2900 = vcmask 257024
    %v2901 = vsel %vm2900, %v2899, 0.0
    %v2902 = vrot.slane %v2901, 4
    %v2903 = vadd.f32 %v2901, %v2902
    %v2904 = vrot.slane %v2903, 2
    %v2905 = vadd.f32 %v2903, %v2904
    %v2906 = vrot.slane %v2905, 1
    %v2907 = vadd.f32 %v2905, %v2906
    %v2908 = vrcp.pop 4.0
    %v2909 = vmul.f32 4.0, %v2908
    %v2910 = vsub.f32 1.0, %v2909
    %v2911 = vmul.f32 %v2908, %v2910
    %v2912 = vadd.f32 %v2908, %v2911
    %vm2913 = vweird.f32 %v2908
    %v2914 = vsel %vm2913, %v2908, %v2912
    %v2915 = vmul.f32 %v2907, %v2914
    %v2916 = vld [vmem:[#allocation3 + $0x4] sm:$0xf]
    %v2917 = vsel %vm2900, %v2916, 0.0
    %v2918 = vrot.slane %v2917, 4
    %v2919 = vadd.f32 %v2917, %v2918
    %v2920 = vrot.slane %v2919, 2
    %v2921 = vadd.f32 %v2919, %v2920
    %v2922 = vrot.slane %v2921, 1
    %v2923 = vadd.f32 %v2921, %v2922
    %v2924 = vmul.f32 %v2923, %v2914
    %v2925 = vsel %vm1994, %v2915, %v2924
    %vm2926 = vcmask 254976
    %v2927 = vsel %vm2926, %v2925, 0.0
    %2928 = vadd.xlane.f32.xlu0 %v2927
    %v2929 = vpop.xlane.xlu0 %2928
    %v2930 = vmul.f32 %v2929, %v264
    %v2931 = vsub.f32 %v2925, %v2930
    %v2932 = vmul.f32 %v2931, %v2931
    %v2933 = vsel %vm2926, %v2932, 0.0
    %2934 = vadd.xlane.f32.xlu0 %v2933
    %v2935 = vpop.xlane.xlu0 %2934
    %v2936 = vmul.f32 %v2935, %v264
    %v2937 = vadd.f32 %v2936, 1e-05
    %v2938 = vrsqrt.pop %v2937
    %v2939 = vmul.f32 %v2938, %v2937
    %v2940 = vmul.f32 %v2939, %v2938
    %v2941 = vmul.f32 0.5, %v2940
    %v2942 = vsub.f32 1.5, %v2941
    %v2943 = vmul.f32 %v2938, %v2942
    %vm2944 = vweird.f32 %v2937
    %vm2945 = vweird.f32 %v2938
    %vm2946 = vmor %vm2944, %vm2945
    %v2947 = vsel %vm2946, %v2938, %v2943
    %v2948 = vmul.f32 %v2931, %v2947
    %v2949 = vperm.slane %v2112, 0
    %v2950 = vmul.f32 %v2948, %v2949
    %v2951 = vperm.slane %v2113, 0
    %v2952 = vadd.f32 %v2950, %v2951
    %v2953 = vpack.c.bf16 %v2952, %v2952
    %v2954 = vperm.slane %v2114, 0
    %v2959 = vunpack.c.l.b16 %v2096
    %v2960 = vunpack.c.l.b16 %v2097
    %v2961 = vunpack.c.l.b16 %v2098
    %v2962 = vunpack.c.l.b16 %v2099
    %v2963 = vpack.c.b16 %v2960, %v2959
    %v2964 = vpack.c.b16 %v2962, %v2961
    %v2968 = vsel %vm248, %v2953, 0
    %2970 = vmatpush.bf16.msra.mxu0 0
    %2971 = vmatpush.bf16.msra.mxu0 0
    %2972 = vmatpush.bf16.msra.mxu0 0
    %2973 = vmatpush.bf16.msra.mxu0 0
    %2974 = vmatpush.bf16.msra.mxu0 0
    %2975 = vmatpush.bf16.msra.mxu0 0
    %2976 = vmatpush.bf16.msra.mxu0 %v2964
    %2977 = vmatpush.bf16.msra.mxu0 %v2963
    %2978 = vmatmul.bf16.gmra.mxu0 %v2968
    %v2979 = vpop.f32.mrf.mxu0
    %v2980 = vadd.f32 %v2954, %v2979
    %v2981 = vpop.f32.mrf.mxu0
    %2982 = vdwg.mxu0
    %2983 = vst [vmem:[#allocation8] sm:$0x3] %v2980
    // Predicated region
    $region30: #{model_forward.1} parent=1 // pred_check
      _
    $region31: #{model_forward.1} parent=1 // pred_check_branch
      %2985 = sbr.rel (0) target = $region33
    $region32: #{model_forward.1} parent=1 // pred_region
      %2987 = vsyncadd [#allocation5], 0
      %s2989 = sshll.u32 [#allocation4], 4
      %s2990 = int_to_ptr.vmem [resolvable:$true] %s2989
      %s2991 = sshll.u32 %s7, 4
      %s2992 = int_to_ptr.hbm [resolvable:$true] %s2991
      %2994 = dma.vmem_to_hbm [thread:$0]  %s2990, 32, %s2992, [#allocation5]
    $region33: #{model_forward.1} parent=1 // pred_fallthru
      _
    // Predicated region
    $region34: #{model_forward.1} parent=1 // pred_check
      _
    $region35: #{model_forward.1} parent=1 // pred_check_branch
      %2996 = sbr.rel (0) target = $region37
    $region36: #{model_forward.1} parent=1 // pred_region
      %2998 = vsyncadd [#allocation7], 0
      %s3000 = sshll.u32 [#allocation6], 4
      %s3001 = int_to_ptr.vmem [resolvable:$true] %s3000
      %s3002 = sshll.u32 %s8, 4
      %s3003 = int_to_ptr.hbm [resolvable:$true] %s3002
      %3005 = dma.vmem_to_hbm [thread:$0]  %s3001, 32, %s3003, [#allocation7]
    $region37: #{model_forward.1} parent=1 // pred_fallthru
      _
    // Predicated region
    $region38: #{model_forward.1} parent=1 // pred_check
      _
    $region39: #{model_forward.1} parent=1 // pred_check_branch
      %3007 = sbr.rel (0) target = $region41
    $region40: #{model_forward.1} parent=1 // pred_region
      %3009 = vsyncadd [#allocation7], 0
      %s3011 = sshll.u32 [#allocation8], 4
      %s3012 = int_to_ptr.vmem [resolvable:$true] %s3011
      %s3013 = sshll.u32 %s9, 4
      %s3014 = int_to_ptr.hbm [resolvable:$true] %s3013
      %3016 = dma.vmem_to_hbm [thread:$0]  %s3012, 32, %s3014, [#allocation7]
    $region41: #{model_forward.1} parent=1 // pred_fallthru
      _
    // Predicated region
    $region42: #{model_forward.1} parent=1 // pred_check
      _
    $region43: #{model_forward.1} parent=1 // pred_check_branch
      %3018 = sbr.rel (0) target = $region45
    $region44: #{model_forward.1} parent=1 // pred_region
      %3020 = dma.done [#allocation5], 32
    $region45: #{model_forward.1} parent=1 // pred_fallthru
      _
    // Predicated region
    $region46: #{model_forward.1} parent=1 // pred_check
      _
    $region47: #{model_forward.1} parent=1 // pred_check_branch
      %3022 = sbr.rel (0) target = $region49
    $region48: #{model_forward.1} parent=1 // pred_region
      %3024 = dma.done [#allocation7], 32
    $region49: #{model_forward.1} parent=1 // pred_fallthru
      _
    // Predicated region
    $region50: #{model_forward.1} parent=1 // pred_check
      _
    $region51: #{model_forward.1} parent=1 // pred_check_branch
      %3026 = sbr.rel (0) target = $region53
    $region52: #{model_forward.1} parent=1 // pred_region
      %3028 = dma.done [#allocation7], 32
    $region53: #{model_forward.1} parent=1 // pred_fallthru
      _
    %3029 = vsyncpa [#allocation5], 1
    %3030 = vsyncpa [#allocation7], 1

</llo_original>
